<compile_context>
chip_gen: v6e
topology: v6e:2x2x1
jax: 0.10.0
libtpu: 0.0.40
codegen_flags: <defaults>
</compile_context>

<pallas_src>
import functools

import jax
import jax.numpy as jnp
from jax import lax
from jax.experimental import pallas as pl
from jax.experimental.pallas import tpu as pltpu

IN_DIM = 32
HIDDEN = 128   # permuted dimension; lane-aligned
OUT_DIM = 32
BATCH = 2
PERMUTATION_NUMBER = 3


def _permute_kernel(perm_ref, rhs_ref, w2_ref, out1_ref, out2_ref):
    """Single invocation, all N permutations at once.

    perm_ref: (N*H, 1) int32  -- stacked permutation indices, sublane-major
    rhs_ref:  (H, PAD) f32    -- [w1 | b1 | zero-pad to 128 lanes]
    w2_ref:   (Dout, H) f32   -- second-layer weight, lane-dense
    out1_ref: (N*H, PAD) f32  -- row-permuted slab: out1[n*H+i,:] = rhs[perm[n,i],:]
    out2_ref: (N, Dout, H)f32 -- column-permuted W2: out2[n,:,i] = w2[:, perm[n,i]]
    """
    NH = out1_ref.shape[0]
    H = rhs_ref.shape[0]
    N = NH // H

    perm_col = perm_ref[...]                                     # (N*H, 1) int32
    col_ids = lax.broadcasted_iota(jnp.int32, (NH, H), 1)        # (N*H, H) int32
    # Stacked one-hot permutation matrix, built in-register (VPU compares):
    # P[n*H + i, j] = 1.0 iff j == perm[n, i]
    P = (col_ids == perm_col).astype(jnp.float32)                # (N*H, H)

    # One tall MXU dot permutes [w1 | b1] for all N permutations at once.
    out1_ref[...] = jnp.dot(P, rhs_ref[...],
                            preferred_element_type=jnp.float32,
                            precision=lax.Precision.HIGHEST)

    # W2 column permutation, emitted lane-dense: out2[n] = W2 @ P_n^T.
    w2 = w2_ref[...]                                             # (Dout, H)
    for n in range(N):                                           # tiny static unroll
        Pn = P[n * H:(n + 1) * H, :]                             # (H, H), aligned slice
        out2_ref[n] = lax.dot_general(
            w2, Pn, (((1,), (1,)), ((), ())),
            preferred_element_type=jnp.float32,
            precision=lax.Precision.HIGHEST)


def apply_permutations_pallas(perms, w1, b1, w2):
    """Apply N hidden-dim permutations to (w1[H,Din], b1[H], w2[Dout,H]).

    perms: [N, H] int32.  Returns (w1_p[N,H,Din], b1_p[N,H], w2_p[N,Dout,H]).
    """
    N, H = perms.shape
    Din = w1.shape[1]
    Dout = w2.shape[0]

    # RHS slab: [w1 | b1], lane-padded to a multiple of 128 so the matmul
    # output stores are unmasked 128-lane vst.
    cols = Din + 1
    pad_cols = ((cols + 127) // 128) * 128
    rhs = (jnp.zeros((H, pad_cols), jnp.float32)
           .at[:, :Din].set(w1.astype(jnp.float32))
           .at[:, Din].set(b1.astype(jnp.float32)))

    perm_col = perms.astype(jnp.int32).reshape(N * H, 1)          # (N*H, 1)

    out1, out2 = pl.pallas_call(
        _permute_kernel,
        out_shape=(jax.ShapeDtypeStruct((N * H, pad_cols), jnp.float32),
                   jax.ShapeDtypeStruct((N, Dout, H), jnp.float32)),
        # No grid: one kernel invocation covers all N permutations; every
        # operand is a whole-array VMEM block (total footprint < 1 MiB).
        in_specs=[pl.BlockSpec(memory_space=pltpu.MemorySpace.VMEM)] * 3,
        out_specs=(pl.BlockSpec(memory_space=pltpu.MemorySpace.VMEM),
                   pl.BlockSpec(memory_space=pltpu.MemorySpace.VMEM)),
    )(perm_col, rhs, w2.astype(jnp.float32))

    out1 = out1.reshape(N, H, pad_cols)
    w1_p = out1[:, :, :Din]                                       # [N, H, Din]
    b1_p = out1[:, :, Din]                                        # [N, H]
    w2_p = out2                                                   # [N, Dout, H]
    return w1_p, b1_p, w2_p


@functools.partial(jax.jit, static_argnames=("permutation_number",))
def _permute_all(w1, b1, w2, key, permutation_number):
    """Single dispatch: draw all randperms (vmapped), pack, permute, unpack."""
    H = w1.shape[0]
    keys = jax.random.split(key, permutation_number)
    perms = jax.vmap(lambda k: jax.random.permutation(k, H))(keys).astype(jnp.int32)
    return apply_permutations_pallas(perms, w1, b1, w2)


def model_permutation_forward(state_dict, permutation_number, key):
    """Mirrors ModelPermutation.forward: returns [original_ckpt, permuted_ckpts...]."""
    # TODO(synk): rebasin's graph tracing (PermutationInitializer) has no Pallas
    # equivalent; the permutation structure for this 2-layer MLP is hard-coded
    # (hidden dim permuted, output dim identity), which is what rebasin derives.
    w1_p, b1_p, w2_p = _permute_all(
        state_dict["fc1.weight"], state_dict["fc1.bias"],
        state_dict["fc2.weight"], key, permutation_number)
    checks = [state_dict]
    for i in range(permutation_number):
        checks.append({
            "fc1.weight": w1_p[i],
            "fc1.bias": b1_p[i],
            "fc2.weight": w2_p[i],
            "fc2.bias": state_dict["fc2.bias"],   # output permutation is identity
        })
    return checks


def mlp_forward(state_dict, x):
    h = jnp.maximum(x @ state_dict["fc1.weight"].T + state_dict["fc1.bias"], 0.0)
    return h @ state_dict["fc2.weight"].T + state_dict["fc2.bias"]


if __name__ == "__main__":
    key = jax.random.PRNGKey(0)
    k_w1, k_b1, k_w2, k_b2, k_x, k_perm = jax.random.split(key, 6)

    state_dict = {
        "fc1.weight": jax.random.normal(k_w1, (HIDDEN, IN_DIM), jnp.float32) * 0.1,
        "fc1.bias":   jax.random.normal(k_b1, (HIDDEN,), jnp.float32) * 0.1,
        "fc2.weight": jax.random.normal(k_w2, (OUT_DIM, HIDDEN), jnp.float32) * 0.1,
        "fc2.bias":   jax.random.normal(k_b2, (OUT_DIM,), jnp.float32) * 0.1,
    }
    input_data = jax.random.normal(k_x, (BATCH, IN_DIM), jnp.float32)

    checks = model_permutation_forward(state_dict, PERMUTATION_NUMBER, k_perm)
    jax.block_until_ready(jax.tree_util.tree_leaves(checks))

    # shape checks (as in the torch forward's asserts)
    assert len(checks) == PERMUTATION_NUMBER + 1
    for ckpt in checks[1:]:
        assert ckpt.keys() == checks[0].keys()
        for key_name in checks[0]:
            assert ckpt[key_name].shape == checks[0][key_name].shape, key_name

    # functional-equivalence check: permuted checkpoints compute the same function
    y_ref = mlp_forward(checks[0], input_data)
    for ckpt in checks[1:]:
        y_p = mlp_forward(ckpt, input_data)
        assert jnp.max(jnp.abs(y_p - y_ref)) < 1e-4

    # sanity: permuted checkpoints are not identical to the original weights
    assert not bool(jnp.allclose(checks[1]["fc1.weight"], checks[0]["fc1.weight"]))

    print("KERNEL_OK")
</pallas_src>

<mosaic_0001>
module attributes {stable_mosaic.version = 11 : i64} {
  func.func @_permute_kernel(%arg0: memref<384x1xi32, #tpu.memory_space<vmem>>, %arg1: memref<128x128xf32, #tpu.memory_space<vmem>>, %arg2: memref<32x128xf32, #tpu.memory_space<vmem>>, %arg3: memref<384x128xf32, #tpu.memory_space<vmem>>, %arg4: memref<3x32x128xf32, #tpu.memory_space<vmem>>) attributes {dimension_semantics = [], scalar_prefetch = 0 : i64, scratch_operands = 0 : i64, tpu.core_type = #tpu.core_type<tc>} {
    %c0 = arith.constant 0 : index
    %c0_0 = arith.constant 0 : index
    %0 = vector.load %arg0[%c0, %c0_0] : memref<384x1xi32, #tpu.memory_space<vmem>>, vector<384x1xi32>
    %1 = tpu.iota {dimensions = array<i32: 1>} : vector<384x128xi32>
    %2 = vector.broadcast %0 : vector<384x1xi32> to vector<384x128xi32>
    %3 = arith.cmpi eq, %1, %2 : vector<384x128xi32>
    %4 = arith.extui %3 : vector<384x128xi1> to vector<384x128xi32>
    %5 = arith.sitofp %4 : vector<384x128xi32> to vector<384x128xf32>
    %c0_1 = arith.constant 0 : index
    %c0_2 = arith.constant 0 : index
    %6 = vector.load %arg1[%c0_1, %c0_2] : memref<128x128xf32, #tpu.memory_space<vmem>>, vector<128x128xf32>
    %cst = arith.constant dense<0.000000e+00> : vector<384x128xf32>
    %7 = tpu.matmul %5, %6, %cst {dimension_numbers = #tpu.dot_dimension_numbers<[1], [0], [0], [1], [0, 0, 1, 1], [], []>, precision = #tpu.contract_precision<fp32>} : vector<384x128xf32>, vector<128x128xf32>, vector<384x128xf32> -> vector<384x128xf32>
    %c0_3 = arith.constant 0 : index
    %c0_4 = arith.constant 0 : index
    %8 = vector.load %arg3[%c0_3, %c0_4] : memref<384x128xf32, #tpu.memory_space<vmem>>, vector<384x128xf32>
    tpu.vector_store %arg3[%c0_3, %c0_4], %7 {strides = array<i32>} : memref<384x128xf32, #tpu.memory_space<vmem>>, vector<384x128xf32>,
    %c0_5 = arith.constant 0 : index
    %c0_6 = arith.constant 0 : index
    %9 = vector.load %arg2[%c0_5, %c0_6] : memref<32x128xf32, #tpu.memory_space<vmem>>, vector<32x128xf32>
    %10 = vector.extract_strided_slice %5 {offsets = [0, 0], sizes = [128, 128], strides = [1, 1]} : vector<384x128xf32> to vector<128x128xf32>
    %cst_7 = arith.constant dense<0.000000e+00> : vector<32x128xf32>
    %11 = tpu.matmul %9, %10, %cst_7 {dimension_numbers = #tpu.dot_dimension_numbers<[1], [1], [0], [0], [0, 0, 1, 0], [], []>, precision = #tpu.contract_precision<fp32>} : vector<32x128xf32>, vector<128x128xf32>, vector<32x128xf32> -> vector<32x128xf32>
    %c0_8 = arith.constant 0 : index
    %c0_9 = arith.constant 0 : index
    %c0_10 = arith.constant 0 : index
    %12 = vector.load %arg4[%c0_8, %c0_9, %c0_10] : memref<3x32x128xf32, #tpu.memory_space<vmem>>, vector<1x32x128xf32>
    %13 = vector.shape_cast %12 : vector<1x32x128xf32> to vector<32x128xf32>
    %14 = vector.shape_cast %11 : vector<32x128xf32> to vector<1x32x128xf32>
    tpu.vector_store %arg4[%c0_8, %c0_9, %c0_10], %14 {strides = array<i32>} : memref<3x32x128xf32, #tpu.memory_space<vmem>>, vector<1x32x128xf32>,
    %15 = vector.extract_strided_slice %5 {offsets = [128, 0], sizes = [128, 128], strides = [1, 1]} : vector<384x128xf32> to vector<128x128xf32>
    %cst_11 = arith.constant dense<0.000000e+00> : vector<32x128xf32>
    %16 = tpu.matmul %9, %15, %cst_11 {dimension_numbers = #tpu.dot_dimension_numbers<[1], [1], [0], [0], [0, 0, 1, 0], [], []>, precision = #tpu.contract_precision<fp32>} : vector<32x128xf32>, vector<128x128xf32>, vector<32x128xf32> -> vector<32x128xf32>
    %c1 = arith.constant 1 : index
    %c0_12 = arith.constant 0 : index
    %c0_13 = arith.constant 0 : index
    %17 = vector.load %arg4[%c1, %c0_12, %c0_13] : memref<3x32x128xf32, #tpu.memory_space<vmem>>, vector<1x32x128xf32>
    %18 = vector.shape_cast %17 : vector<1x32x128xf32> to vector<32x128xf32>
    %19 = vector.shape_cast %16 : vector<32x128xf32> to vector<1x32x128xf32>
    tpu.vector_store %arg4[%c1, %c0_12, %c0_13], %19 {strides = array<i32>} : memref<3x32x128xf32, #tpu.memory_space<vmem>>, vector<1x32x128xf32>,
    %20 = vector.extract_strided_slice %5 {offsets = [256, 0], sizes = [128, 128], strides = [1, 1]} : vector<384x128xf32> to vector<128x128xf32>
    %cst_14 = arith.constant dense<0.000000e+00> : vector<32x128xf32>
    %21 = tpu.matmul %9, %20, %cst_14 {dimension_numbers = #tpu.dot_dimension_numbers<[1], [1], [0], [0], [0, 0, 1, 0], [], []>, precision = #tpu.contract_precision<fp32>} : vector<32x128xf32>, vector<128x128xf32>, vector<32x128xf32> -> vector<32x128xf32>
    %c2 = arith.constant 2 : index
    %c0_15 = arith.constant 0 : index
    %c0_16 = arith.constant 0 : index
    %22 = vector.load %arg4[%c2, %c0_15, %c0_16] : memref<3x32x128xf32, #tpu.memory_space<vmem>>, vector<1x32x128xf32>
    %23 = vector.shape_cast %22 : vector<1x32x128xf32> to vector<32x128xf32>
    %24 = vector.shape_cast %21 : vector<32x128xf32> to vector<1x32x128xf32>
    tpu.vector_store %arg4[%c2, %c0_15, %c0_16], %24 {strides = array<i32>} : memref<3x32x128xf32, #tpu.memory_space<vmem>>, vector<1x32x128xf32>,
    return
  }
}

</mosaic_0001>

<llo_original>
// kernel: _permute_all.3
$region0: #{_permute_all.3}
  #allocation0 [shape = 'u32[]', space=smem, size = 0x4, offset = 0x4, fixed_abs, tag = 'smem constant byte address 0x4 - core index']
  #allocation1 [shape = 'u32[144,128]{1,0:T(1,128)}', space=vmem, size = 0x12000, scoped, tag = 'internal scratch']
  %s0 = inlined_call_operand.vmem [shape: s32[384,1], index: 0, kind: input, shape index: {}]
  %s1 = inlined_call_operand.vmem [shape: f32[128,128], index: 1, kind: input, shape index: {}]
  %s2 = inlined_call_operand.vmem [shape: f32[32,128], index: 2, kind: input, shape index: {}]
  %s3 = inlined_call_operand.vmem [shape: f32[384,128], index: 3, kind: output, shape index: {0}]
  %s4 = inlined_call_operand.hbm [shape: f32[3,32,128], index: 4, kind: output, shape index: {1}]
  %5 = xla_tuple %s3, %s4
  %s6 = sld [smem:[#allocation0]]
  $region30: #{_permute_all.3} parent=0
    _
  %s8 = ssub.s32 1, %s6
  %s9 = scalar_select 0, %s8, %s6
  $region1: #{_permute_all.3} parent=0
    #allocation2 [shape = 'u8[49152]{0}', space=vmem, size = 0xc000, scoped, tag = 'output window, operand 1, single buffered']
    #allocation3 [shape = 's32[1]{0}', space=sflag, size = 0x4, scoped, tag = 'scoped memory for _permute_all.3']
    %10 = vsyncpa [#allocation3], 0
    // Predicated region
    $region2: #{_permute_all.3} parent=1 // pred_check
      _
    $region3: #{_permute_all.3} parent=1 // pred_check_branch
      %12 = sbr.rel (0) target = $region5
    $region4: #{_permute_all.3} parent=1 // pred_region
      _
    $region5: #{_permute_all.3} parent=1 // pred_fallthru
      _
    // Predicated region
    $region6: #{_permute_all.3} parent=1 // pred_check
      _
    $region7: #{_permute_all.3} parent=1 // pred_check_branch
      %14 = sbr.rel (0) target = $region9
    $region8: #{_permute_all.3} parent=1 // pred_region
      _
    $region9: #{_permute_all.3} parent=1 // pred_fallthru
      _
    // Predicated region
    $region10: #{_permute_all.3} parent=1 // pred_check
      _
    $region11: #{_permute_all.3} parent=1 // pred_check_branch
      %16 = sbr.rel (0) target = $region13
    $region12: #{_permute_all.3} parent=1 // pred_region
      _
    $region13: #{_permute_all.3} parent=1 // pred_fallthru
      _
    %v17 = vld [vmem:[%s0] sm:$0xff]
    %v18 = vld [vmem:[%s0 + $0x8] sm:$0xff]
    %v19 = vld [vmem:[%s0 + $0x10] sm:$0xff]
    %v20 = vld [vmem:[%s0 + $0x18] sm:$0xff]
    %v21 = vld [vmem:[%s0 + $0x20] sm:$0xff]
    %v22 = vld [vmem:[%s0 + $0x28] sm:$0xff]
    %v23 = vld [vmem:[%s0 + $0x30] sm:$0xff]
    %v24 = vld [vmem:[%s0 + $0x38] sm:$0xff]
    %v25 = vld [vmem:[%s0 + $0x40] sm:$0xff]
    %v26 = vld [vmem:[%s0 + $0x48] sm:$0xff]
    %v27 = vld [vmem:[%s0 + $0x50] sm:$0xff]
    %v28 = vld [vmem:[%s0 + $0x58] sm:$0xff]
    %v29 = vld [vmem:[%s0 + $0x60] sm:$0xff]
    %v30 = vld [vmem:[%s0 + $0x68] sm:$0xff]
    %v31 = vld [vmem:[%s0 + $0x70] sm:$0xff]
    %v32 = vld [vmem:[%s0 + $0x78] sm:$0xff]
    %v33 = vld [vmem:[%s0 + $0x80] sm:$0xff]
    %v34 = vld [vmem:[%s0 + $0x88] sm:$0xff]
    %v35 = vld [vmem:[%s0 + $0x90] sm:$0xff]
    %v36 = vld [vmem:[%s0 + $0x98] sm:$0xff]
    %v37 = vld [vmem:[%s0 + $0xa0] sm:$0xff]
    %v38 = vld [vmem:[%s0 + $0xa8] sm:$0xff]
    %v39 = vld [vmem:[%s0 + $0xb0] sm:$0xff]
    %v40 = vld [vmem:[%s0 + $0xb8] sm:$0xff]
    %v41 = vld [vmem:[%s0 + $0xc0] sm:$0xff]
    %v42 = vld [vmem:[%s0 + $0xc8] sm:$0xff]
    %v43 = vld [vmem:[%s0 + $0xd0] sm:$0xff]
    %v44 = vld [vmem:[%s0 + $0xd8] sm:$0xff]
    %v45 = vld [vmem:[%s0 + $0xe0] sm:$0xff]
    %v46 = vld [vmem:[%s0 + $0xe8] sm:$0xff]
    %v47 = vld [vmem:[%s0 + $0xf0] sm:$0xff]
    %v48 = vld [vmem:[%s0 + $0xf8] sm:$0xff]
    %v49 = vld [vmem:[%s0 + $0x100] sm:$0xff]
    %v50 = vld [vmem:[%s0 + $0x108] sm:$0xff]
    %v51 = vld [vmem:[%s0 + $0x110] sm:$0xff]
    %v52 = vld [vmem:[%s0 + $0x118] sm:$0xff]
    %v53 = vld [vmem:[%s0 + $0x120] sm:$0xff]
    %v54 = vld [vmem:[%s0 + $0x128] sm:$0xff]
    %v55 = vld [vmem:[%s0 + $0x130] sm:$0xff]
    %v56 = vld [vmem:[%s0 + $0x138] sm:$0xff]
    %v57 = vld [vmem:[%s0 + $0x140] sm:$0xff]
    %v58 = vld [vmem:[%s0 + $0x148] sm:$0xff]
    %v59 = vld [vmem:[%s0 + $0x150] sm:$0xff]
    %v60 = vld [vmem:[%s0 + $0x158] sm:$0xff]
    %v61 = vld [vmem:[%s0 + $0x160] sm:$0xff]
    %v62 = vld [vmem:[%s0 + $0x168] sm:$0xff]
    %v63 = vld [vmem:[%s0 + $0x170] sm:$0xff]
    %v64 = vld [vmem:[%s0 + $0x178] sm:$0xff]
    %v65 = vlaneseq
    %v66 = vand.u32 %v65, 127
    %67 = vset.pattern.permute.xlu0 0
    %68 = vperm.xlu0 %67, %v17
    %v69 = vpop.permute.xlu0 %68
    %70 = vset.pattern.permute.xlu0 0
    %71 = vperm.xlu0 %70, %v18
    %v72 = vpop.permute.xlu0 %71
    %73 = vset.pattern.permute.xlu0 0
    %74 = vperm.xlu0 %73, %v19
    %v75 = vpop.permute.xlu0 %74
    %76 = vset.pattern.permute.xlu0 0
    %77 = vperm.xlu0 %76, %v20
    %v78 = vpop.permute.xlu0 %77
    %79 = vset.pattern.permute.xlu0 0
    %80 = vperm.xlu0 %79, %v21
    %v81 = vpop.permute.xlu0 %80
    %82 = vset.pattern.permute.xlu0 0
    %83 = vperm.xlu0 %82, %v22
    %v84 = vpop.permute.xlu0 %83
    %85 = vset.pattern.permute.xlu0 0
    %86 = vperm.xlu0 %85, %v23
    %v87 = vpop.permute.xlu0 %86
    %88 = vset.pattern.permute.xlu0 0
    %89 = vperm.xlu0 %88, %v24
    %v90 = vpop.permute.xlu0 %89
    %91 = vset.pattern.permute.xlu0 0
    %92 = vperm.xlu0 %91, %v25
    %v93 = vpop.permute.xlu0 %92
    %94 = vset.pattern.permute.xlu0 0
    %95 = vperm.xlu0 %94, %v26
    %v96 = vpop.permute.xlu0 %95
    %97 = vset.pattern.permute.xlu0 0
    %98 = vperm.xlu0 %97, %v27
    %v99 = vpop.permute.xlu0 %98
    %100 = vset.pattern.permute.xlu0 0
    %101 = vperm.xlu0 %100, %v28
    %v102 = vpop.permute.xlu0 %101
    %103 = vset.pattern.permute.xlu0 0
    %104 = vperm.xlu0 %103, %v29
    %v105 = vpop.permute.xlu0 %104
    %106 = vset.pattern.permute.xlu0 0
    %107 = vperm.xlu0 %106, %v30
    %v108 = vpop.permute.xlu0 %107
    %109 = vset.pattern.permute.xlu0 0
    %110 = vperm.xlu0 %109, %v31
    %v111 = vpop.permute.xlu0 %110
    %112 = vset.pattern.permute.xlu0 0
    %113 = vperm.xlu0 %112, %v32
    %v114 = vpop.permute.xlu0 %113
    %115 = vset.pattern.permute.xlu0 0
    %116 = vperm.xlu0 %115, %v33
    %v117 = vpop.permute.xlu0 %116
    %118 = vset.pattern.permute.xlu0 0
    %119 = vperm.xlu0 %118, %v34
    %v120 = vpop.permute.xlu0 %119
    %121 = vset.pattern.permute.xlu0 0
    %122 = vperm.xlu0 %121, %v35
    %v123 = vpop.permute.xlu0 %122
    %124 = vset.pattern.permute.xlu0 0
    %125 = vperm.xlu0 %124, %v36
    %v126 = vpop.permute.xlu0 %125
    %127 = vset.pattern.permute.xlu0 0
    %128 = vperm.xlu0 %127, %v37
    %v129 = vpop.permute.xlu0 %128
    %130 = vset.pattern.permute.xlu0 0
    %131 = vperm.xlu0 %130, %v38
    %v132 = vpop.permute.xlu0 %131
    %133 = vset.pattern.permute.xlu0 0
    %134 = vperm.xlu0 %133, %v39
    %v135 = vpop.permute.xlu0 %134
    %136 = vset.pattern.permute.xlu0 0
    %137 = vperm.xlu0 %136, %v40
    %v138 = vpop.permute.xlu0 %137
    %139 = vset.pattern.permute.xlu0 0
    %140 = vperm.xlu0 %139, %v41
    %v141 = vpop.permute.xlu0 %140
    %142 = vset.pattern.permute.xlu0 0
    %143 = vperm.xlu0 %142, %v42
    %v144 = vpop.permute.xlu0 %143
    %145 = vset.pattern.permute.xlu0 0
    %146 = vperm.xlu0 %145, %v43
    %v147 = vpop.permute.xlu0 %146
    %148 = vset.pattern.permute.xlu0 0
    %149 = vperm.xlu0 %148, %v44
    %v150 = vpop.permute.xlu0 %149
    %151 = vset.pattern.permute.xlu0 0
    %152 = vperm.xlu0 %151, %v45
    %v153 = vpop.permute.xlu0 %152
    %154 = vset.pattern.permute.xlu0 0
    %155 = vperm.xlu0 %154, %v46
    %v156 = vpop.permute.xlu0 %155
    %157 = vset.pattern.permute.xlu0 0
    %158 = vperm.xlu0 %157, %v47
    %v159 = vpop.permute.xlu0 %158
    %160 = vset.pattern.permute.xlu0 0
    %161 = vperm.xlu0 %160, %v48
    %v162 = vpop.permute.xlu0 %161
    %163 = vset.pattern.permute.xlu0 0
    %164 = vperm.xlu0 %163, %v49
    %v165 = vpop.permute.xlu0 %164
    %166 = vset.pattern.permute.xlu0 0
    %167 = vperm.xlu0 %166, %v50
    %v168 = vpop.permute.xlu0 %167
    %169 = vset.pattern.permute.xlu0 0
    %170 = vperm.xlu0 %169, %v51
    %v171 = vpop.permute.xlu0 %170
    %172 = vset.pattern.permute.xlu0 0
    %173 = vperm.xlu0 %172, %v52
    %v174 = vpop.permute.xlu0 %173
    %175 = vset.pattern.permute.xlu0 0
    %176 = vperm.xlu0 %175, %v53
    %v177 = vpop.permute.xlu0 %176
    %178 = vset.pattern.permute.xlu0 0
    %179 = vperm.xlu0 %178, %v54
    %v180 = vpop.permute.xlu0 %179
    %181 = vset.pattern.permute.xlu0 0
    %182 = vperm.xlu0 %181, %v55
    %v183 = vpop.permute.xlu0 %182
    %184 = vset.pattern.permute.xlu0 0
    %185 = vperm.xlu0 %184, %v56
    %v186 = vpop.permute.xlu0 %185
    %187 = vset.pattern.permute.xlu0 0
    %188 = vperm.xlu0 %187, %v57
    %v189 = vpop.permute.xlu0 %188
    %190 = vset.pattern.permute.xlu0 0
    %191 = vperm.xlu0 %190, %v58
    %v192 = vpop.permute.xlu0 %191
    %193 = vset.pattern.permute.xlu0 0
    %194 = vperm.xlu0 %193, %v59
    %v195 = vpop.permute.xlu0 %194
    %196 = vset.pattern.permute.xlu0 0
    %197 = vperm.xlu0 %196, %v60
    %v198 = vpop.permute.xlu0 %197
    %199 = vset.pattern.permute.xlu0 0
    %200 = vperm.xlu0 %199, %v61
    %v201 = vpop.permute.xlu0 %200
    %202 = vset.pattern.permute.xlu0 0
    %203 = vperm.xlu0 %202, %v62
    %v204 = vpop.permute.xlu0 %203
    %205 = vset.pattern.permute.xlu0 0
    %206 = vperm.xlu0 %205, %v63
    %v207 = vpop.permute.xlu0 %206
    %208 = vset.pattern.permute.xlu0 0
    %209 = vperm.xlu0 %208, %v64
    %v210 = vpop.permute.xlu0 %209
    %vm211 = vcmp.eq.s32.totalorder %v66, %v69
    %vm212 = vcmp.eq.s32.totalorder %v66, %v72
    %vm213 = vcmp.eq.s32.totalorder %v66, %v75
    %vm214 = vcmp.eq.s32.totalorder %v66, %v78
    %vm215 = vcmp.eq.s32.totalorder %v66, %v81
    %vm216 = vcmp.eq.s32.totalorder %v66, %v84
    %vm217 = vcmp.eq.s32.totalorder %v66, %v87
    %vm218 = vcmp.eq.s32.totalorder %v66, %v90
    %vm219 = vcmp.eq.s32.totalorder %v66, %v93
    %vm220 = vcmp.eq.s32.totalorder %v66, %v96
    %vm221 = vcmp.eq.s32.totalorder %v66, %v99
    %vm222 = vcmp.eq.s32.totalorder %v66, %v102
    %vm223 = vcmp.eq.s32.totalorder %v66, %v105
    %vm224 = vcmp.eq.s32.totalorder %v66, %v108
    %vm225 = vcmp.eq.s32.totalorder %v66, %v111
    %vm226 = vcmp.eq.s32.totalorder %v66, %v114
    %vm227 = vcmp.eq.s32.totalorder %v66, %v117
    %vm228 = vcmp.eq.s32.totalorder %v66, %v120
    %vm229 = vcmp.eq.s32.totalorder %v66, %v123
    %vm230 = vcmp.eq.s32.totalorder %v66, %v126
    %vm231 = vcmp.eq.s32.totalorder %v66, %v129
    %vm232 = vcmp.eq.s32.totalorder %v66, %v132
    %vm233 = vcmp.eq.s32.totalorder %v66, %v135
    %vm234 = vcmp.eq.s32.totalorder %v66, %v138
    %vm235 = vcmp.eq.s32.totalorder %v66, %v141
    %vm236 = vcmp.eq.s32.totalorder %v66, %v144
    %vm237 = vcmp.eq.s32.totalorder %v66, %v147
    %vm238 = vcmp.eq.s32.totalorder %v66, %v150
    %vm239 = vcmp.eq.s32.totalorder %v66, %v153
    %vm240 = vcmp.eq.s32.totalorder %v66, %v156
    %vm241 = vcmp.eq.s32.totalorder %v66, %v159
    %vm242 = vcmp.eq.s32.totalorder %v66, %v162
    %vm243 = vcmp.eq.s32.totalorder %v66, %v165
    %vm244 = vcmp.eq.s32.totalorder %v66, %v168
    %vm245 = vcmp.eq.s32.totalorder %v66, %v171
    %vm246 = vcmp.eq.s32.totalorder %v66, %v174
    %vm247 = vcmp.eq.s32.totalorder %v66, %v177
    %vm248 = vcmp.eq.s32.totalorder %v66, %v180
    %vm249 = vcmp.eq.s32.totalorder %v66, %v183
    %vm250 = vcmp.eq.s32.totalorder %v66, %v186
    %vm251 = vcmp.eq.s32.totalorder %v66, %v189
    %vm252 = vcmp.eq.s32.totalorder %v66, %v192
    %vm253 = vcmp.eq.s32.totalorder %v66, %v195
    %vm254 = vcmp.eq.s32.totalorder %v66, %v198
    %vm255 = vcmp.eq.s32.totalorder %v66, %v201
    %vm256 = vcmp.eq.s32.totalorder %v66, %v204
    %vm257 = vcmp.eq.s32.totalorder %v66, %v207
    %vm258 = vcmp.eq.s32.totalorder %v66, %v210
    %v259 = vsel %vm211, 1, 0
    %v260 = vsel %vm212, 1, 0
    %v261 = vsel %vm213, 1, 0
    %v262 = vsel %vm214, 1, 0
    %v263 = vsel %vm215, 1, 0
    %v264 = vsel %vm216, 1, 0
    %v265 = vsel %vm217, 1, 0
    %v266 = vsel %vm218, 1, 0
    %v267 = vsel %vm219, 1, 0
    %v268 = vsel %vm220, 1, 0
    %v269 = vsel %vm221, 1, 0
    %v270 = vsel %vm222, 1, 0
    %v271 = vsel %vm223, 1, 0
    %v272 = vsel %vm224, 1, 0
    %v273 = vsel %vm225, 1, 0
    %v274 = vsel %vm226, 1, 0
    %v275 = vsel %vm227, 1, 0
    %v276 = vsel %vm228, 1, 0
    %v277 = vsel %vm229, 1, 0
    %v278 = vsel %vm230, 1, 0
    %v279 = vsel %vm231, 1, 0
    %v280 = vsel %vm232, 1, 0
    %v281 = vsel %vm233, 1, 0
    %v282 = vsel %vm234, 1, 0
    %v283 = vsel %vm235, 1, 0
    %v284 = vsel %vm236, 1, 0
    %v285 = vsel %vm237, 1, 0
    %v286 = vsel %vm238, 1, 0
    %v287 = vsel %vm239, 1, 0
    %v288 = vsel %vm240, 1, 0
    %v289 = vsel %vm241, 1, 0
    %v290 = vsel %vm242, 1, 0
    %v291 = vsel %vm243, 1, 0
    %v292 = vsel %vm244, 1, 0
    %v293 = vsel %vm245, 1, 0
    %v294 = vsel %vm246, 1, 0
    %v295 = vsel %vm247, 1, 0
    %v296 = vsel %vm248, 1, 0
    %v297 = vsel %vm249, 1, 0
    %v298 = vsel %vm250, 1, 0
    %v299 = vsel %vm251, 1, 0
    %v300 = vsel %vm252, 1, 0
    %v301 = vsel %vm253, 1, 0
    %v302 = vsel %vm254, 1, 0
    %v303 = vsel %vm255, 1, 0
    %v304 = vsel %vm256, 1, 0
    %v305 = vsel %vm257, 1, 0
    %v306 = vsel %vm258, 1, 0
    %v307 = vcvt.s32.f32 %v259
    %v308 = vcvt.s32.f32 %v260
    %v309 = vcvt.s32.f32 %v261
    %v310 = vcvt.s32.f32 %v262
    %v311 = vcvt.s32.f32 %v263
    %v312 = vcvt.s32.f32 %v264
    %v313 = vcvt.s32.f32 %v265
    %v314 = vcvt.s32.f32 %v266
    %v315 = vcvt.s32.f32 %v267
    %v316 = vcvt.s32.f32 %v268
    %v317 = vcvt.s32.f32 %v269
    %v318 = vcvt.s32.f32 %v270
    %v319 = vcvt.s32.f32 %v271
    %v320 = vcvt.s32.f32 %v272
    %v321 = vcvt.s32.f32 %v273
    %v322 = vcvt.s32.f32 %v274
    %v323 = vcvt.s32.f32 %v275
    %v324 = vcvt.s32.f32 %v276
    %v325 = vcvt.s32.f32 %v277
    %v326 = vcvt.s32.f32 %v278
    %v327 = vcvt.s32.f32 %v279
    %v328 = vcvt.s32.f32 %v280
    %v329 = vcvt.s32.f32 %v281
    %v330 = vcvt.s32.f32 %v282
    %v331 = vcvt.s32.f32 %v283
    %v332 = vcvt.s32.f32 %v284
    %v333 = vcvt.s32.f32 %v285
    %v334 = vcvt.s32.f32 %v286
    %v335 = vcvt.s32.f32 %v287
    %v336 = vcvt.s32.f32 %v288
    %v337 = vcvt.s32.f32 %v289
    %v338 = vcvt.s32.f32 %v290
    %v339 = vcvt.s32.f32 %v291
    %v340 = vcvt.s32.f32 %v292
    %v341 = vcvt.s32.f32 %v293
    %v342 = vcvt.s32.f32 %v294
    %v343 = vcvt.s32.f32 %v295
    %v344 = vcvt.s32.f32 %v296
    %v345 = vcvt.s32.f32 %v297
    %v346 = vcvt.s32.f32 %v298
    %v347 = vcvt.s32.f32 %v299
    %v348 = vcvt.s32.f32 %v300
    %v349 = vcvt.s32.f32 %v301
    %v350 = vcvt.s32.f32 %v302
    %v351 = vcvt.s32.f32 %v303
    %v352 = vcvt.s32.f32 %v304
    %v353 = vcvt.s32.f32 %v305
    %v354 = vcvt.s32.f32 %v306
    %v355 = vld [vmem:[%s1] sm:$0xff]
    %v356 = vld [vmem:[%s1 + $0x8] sm:$0xff]
    %v357 = vld [vmem:[%s1 + $0x10] sm:$0xff]
    %v358 = vld [vmem:[%s1 + $0x18] sm:$0xff]
    %v359 = vld [vmem:[%s1 + $0x20] sm:$0xff]
    %v360 = vld [vmem:[%s1 + $0x28] sm:$0xff]
    %v361 = vld [vmem:[%s1 + $0x30] sm:$0xff]
    %v362 = vld [vmem:[%s1 + $0x38] sm:$0xff]
    %v363 = vld [vmem:[%s1 + $0x40] sm:$0xff]
    %v364 = vld [vmem:[%s1 + $0x48] sm:$0xff]
    %v365 = vld [vmem:[%s1 + $0x50] sm:$0xff]
    %v366 = vld [vmem:[%s1 + $0x58] sm:$0xff]
    %v367 = vld [vmem:[%s1 + $0x60] sm:$0xff]
    %v368 = vld [vmem:[%s1 + $0x68] sm:$0xff]
    %v369 = vld [vmem:[%s1 + $0x70] sm:$0xff]
    %v370 = vld [vmem:[%s1 + $0x78] sm:$0xff]
    %371 = vmatprep.subr.mxu0 0.0
    %v372 = vand.u32 %v370, 4294901760
    %373 = vmatpush1.msra.mxu0 %v372
    %374 = vmatprep.subr.mxu0 0.0
    %v375 = vand.u32 %v369, 4294901760
    %376 = vmatpush1.msra.mxu0 %v375
    %377 = vmatprep.subr.mxu0 0.0
    %v378 = vand.u32 %v368, 4294901760
    %379 = vmatpush1.msra.mxu0 %v378
    %380 = vmatprep.subr.mxu0 0.0
    %v381 = vand.u32 %v367, 4294901760
    %382 = vmatpush1.msra.mxu0 %v381
    %383 = vmatprep.subr.mxu0 0.0
    %v384 = vand.u32 %v366, 4294901760
    %385 = vmatpush1.msra.mxu0 %v384
    %386 = vmatprep.subr.mxu0 0.0
    %v387 = vand.u32 %v365, 4294901760
    %388 = vmatpush1.msra.mxu0 %v387
    %389 = vmatprep.subr.mxu0 0.0
    %v390 = vand.u32 %v364, 4294901760
    %391 = vmatpush1.msra.mxu0 %v390
    %392 = vmatprep.subr.mxu0 0.0
    %v393 = vand.u32 %v363, 4294901760
    %394 = vmatpush1.msra.mxu0 %v393
    %395 = vmatprep.subr.mxu0 0.0
    %v396 = vand.u32 %v362, 4294901760
    %397 = vmatpush1.msra.mxu0 %v396
    %398 = vmatprep.subr.mxu0 0.0
    %v399 = vand.u32 %v361, 4294901760
    %400 = vmatpush1.msra.mxu0 %v399
    %401 = vmatprep.subr.mxu0 0.0
    %v402 = vand.u32 %v360, 4294901760
    %403 = vmatpush1.msra.mxu0 %v402
    %404 = vmatprep.subr.mxu0 0.0
    %v405 = vand.u32 %v359, 4294901760
    %406 = vmatpush1.msra.mxu0 %v405
    %407 = vmatprep.subr.mxu0 0.0
    %v408 = vand.u32 %v358, 4294901760
    %409 = vmatpush1.msra.mxu0 %v408
    %410 = vmatprep.subr.mxu0 0.0
    %v411 = vand.u32 %v357, 4294901760
    %412 = vmatpush1.msra.mxu0 %v411
    %413 = vmatprep.subr.mxu0 0.0
    %v414 = vand.u32 %v356, 4294901760
    %415 = vmatpush1.msra.mxu0 %v414
    %416 = vmatprep.subr.mxu0 0.0
    %v417 = vand.u32 %v355, 4294901760
    %418 = vmatpush1.msra.mxu0 %v417
    %419 = vmatprep.subr.mxu0 0.0
    %420 = vmatpush2.msra.mxu0 0.0
    %421 = vmatprep.subr.mxu0 0.0
    %422 = vmatpush2.msra.mxu0 0.0
    %423 = vmatprep.subr.mxu0 0.0
    %424 = vmatpush2.msra.mxu0 0.0
    %425 = vmatprep.subr.mxu0 0.0
    %426 = vmatpush2.msra.mxu0 0.0
    %427 = vmatprep.subr.mxu0 0.0
    %428 = vmatpush2.msra.mxu0 0.0
    %429 = vmatprep.subr.mxu0 0.0
    %430 = vmatpush2.msra.mxu0 0.0
    %431 = vmatprep.subr.mxu0 0.0
    %432 = vmatpush2.msra.mxu0 0.0
    %433 = vmatprep.subr.mxu0 0.0
    %434 = vmatpush2.msra.mxu0 0.0
    %435 = vmatprep.subr.mxu0 0.0
    %436 = vmatpush2.msra.mxu0 0.0
    %437 = vmatprep.subr.mxu0 0.0
    %438 = vmatpush2.msra.mxu0 0.0
    %439 = vmatprep.subr.mxu0 0.0
    %440 = vmatpush2.msra.mxu0 0.0
    %441 = vmatprep.subr.mxu0 0.0
    %442 = vmatpush2.msra.mxu0 0.0
    %443 = vmatprep.subr.mxu0 0.0
    %444 = vmatpush2.msra.mxu0 0.0
    %445 = vmatprep.subr.mxu0 0.0
    %446 = vmatpush2.msra.mxu0 0.0
    %447 = vmatprep.subr.mxu0 0.0
    %448 = vmatpush2.msra.mxu0 0.0
    %449 = vmatprep.subr.mxu0 0.0
    %450 = vmatpush2.msra.mxu0 0.0
    %451 = vmatprep.mubr.f32.mxu0 0.0
    %v452 = vand.u32 %v307, 4294901760
    %v453 = vsub.f32 %v307, %v452
    %v454 = vand.u32 %v453, 4294901760
    %v455 = vsub.f32 %v453, %v454
    %v456 = vand.u32 %v455, 4294901760
    %457 = vmatmul.mubr.f32.gmra.mxu0 %v456
    %v458 = vpop.f32.mrf.mxu0
    %v459 = vadd.f32 0.0, %v458
    %v460 = vpop.f32.mrf.mxu0
    %461 = vmatprep.mubr.f32.mxu0 0.0
    %v462 = vand.u32 %v308, 4294901760
    %v463 = vsub.f32 %v308, %v462
    %v464 = vand.u32 %v463, 4294901760
    %v465 = vsub.f32 %v463, %v464
    %v466 = vand.u32 %v465, 4294901760
    %467 = vmatmul.mubr.f32.gmra.mxu0 %v466
    %v468 = vpop.f32.mrf.mxu0
    %v469 = vadd.f32 0.0, %v468
    %v470 = vpop.f32.mrf.mxu0
    %471 = vmatprep.mubr.f32.mxu0 0.0
    %v472 = vand.u32 %v309, 4294901760
    %v473 = vsub.f32 %v309, %v472
    %v474 = vand.u32 %v473, 4294901760
    %v475 = vsub.f32 %v473, %v474
    %v476 = vand.u32 %v475, 4294901760
    %477 = vmatmul.mubr.f32.gmra.mxu0 %v476
    %v478 = vpop.f32.mrf.mxu0
    %v479 = vadd.f32 0.0, %v478
    %v480 = vpop.f32.mrf.mxu0
    %481 = vmatprep.mubr.f32.mxu0 0.0
    %v482 = vand.u32 %v310, 4294901760
    %v483 = vsub.f32 %v310, %v482
    %v484 = vand.u32 %v483, 4294901760
    %v485 = vsub.f32 %v483, %v484
    %v486 = vand.u32 %v485, 4294901760
    %487 = vmatmul.mubr.f32.gmra.mxu0 %v486
    %v488 = vpop.f32.mrf.mxu0
    %v489 = vadd.f32 0.0, %v488
    %v490 = vpop.f32.mrf.mxu0
    %491 = vmatprep.mubr.f32.mxu0 0.0
    %v492 = vand.u32 %v311, 4294901760
    %v493 = vsub.f32 %v311, %v492
    %v494 = vand.u32 %v493, 4294901760
    %v495 = vsub.f32 %v493, %v494
    %v496 = vand.u32 %v495, 4294901760
    %497 = vmatmul.mubr.f32.gmra.mxu0 %v496
    %v498 = vpop.f32.mrf.mxu0
    %v499 = vadd.f32 0.0, %v498
    %v500 = vpop.f32.mrf.mxu0
    %501 = vmatprep.mubr.f32.mxu0 0.0
    %v502 = vand.u32 %v312, 4294901760
    %v503 = vsub.f32 %v312, %v502
    %v504 = vand.u32 %v503, 4294901760
    %v505 = vsub.f32 %v503, %v504
    %v506 = vand.u32 %v505, 4294901760
    %507 = vmatmul.mubr.f32.gmra.mxu0 %v506
    %v508 = vpop.f32.mrf.mxu0
    %v509 = vadd.f32 0.0, %v508
    %v510 = vpop.f32.mrf.mxu0
    %511 = vmatprep.mubr.f32.mxu0 0.0
    %v512 = vand.u32 %v313, 4294901760
    %v513 = vsub.f32 %v313, %v512
    %v514 = vand.u32 %v513, 4294901760
    %v515 = vsub.f32 %v513, %v514
    %v516 = vand.u32 %v515, 4294901760
    %517 = vmatmul.mubr.f32.gmra.mxu0 %v516
    %v518 = vpop.f32.mrf.mxu0
    %v519 = vadd.f32 0.0, %v518
    %v520 = vpop.f32.mrf.mxu0
    %521 = vmatprep.mubr.f32.mxu0 0.0
    %v522 = vand.u32 %v314, 4294901760
    %v523 = vsub.f32 %v314, %v522
    %v524 = vand.u32 %v523, 4294901760
    %v525 = vsub.f32 %v523, %v524
    %v526 = vand.u32 %v525, 4294901760
    %527 = vmatmul.mubr.f32.gmra.mxu0 %v526
    %v528 = vpop.f32.mrf.mxu0
    %v529 = vadd.f32 0.0, %v528
    %v530 = vpop.f32.mrf.mxu0
    %531 = vmatprep.mubr.f32.mxu0 0.0
    %v532 = vand.u32 %v315, 4294901760
    %v533 = vsub.f32 %v315, %v532
    %v534 = vand.u32 %v533, 4294901760
    %v535 = vsub.f32 %v533, %v534
    %v536 = vand.u32 %v535, 4294901760
    %537 = vmatmul.mubr.f32.gmra.mxu0 %v536
    %v538 = vpop.f32.mrf.mxu0
    %v539 = vadd.f32 0.0, %v538
    %v540 = vpop.f32.mrf.mxu0
    %541 = vmatprep.mubr.f32.mxu0 0.0
    %v542 = vand.u32 %v316, 4294901760
    %v543 = vsub.f32 %v316, %v542
    %v544 = vand.u32 %v543, 4294901760
    %v545 = vsub.f32 %v543, %v544
    %v546 = vand.u32 %v545, 4294901760
    %547 = vmatmul.mubr.f32.gmra.mxu0 %v546
    %v548 = vpop.f32.mrf.mxu0
    %v549 = vadd.f32 0.0, %v548
    %v550 = vpop.f32.mrf.mxu0
    %551 = vmatprep.mubr.f32.mxu0 0.0
    %v552 = vand.u32 %v317, 4294901760
    %v553 = vsub.f32 %v317, %v552
    %v554 = vand.u32 %v553, 4294901760
    %v555 = vsub.f32 %v553, %v554
    %v556 = vand.u32 %v555, 4294901760
    %557 = vmatmul.mubr.f32.gmra.mxu0 %v556
    %v558 = vpop.f32.mrf.mxu0
    %v559 = vadd.f32 0.0, %v558
    %v560 = vpop.f32.mrf.mxu0
    %561 = vmatprep.mubr.f32.mxu0 0.0
    %v562 = vand.u32 %v318, 4294901760
    %v563 = vsub.f32 %v318, %v562
    %v564 = vand.u32 %v563, 4294901760
    %v565 = vsub.f32 %v563, %v564
    %v566 = vand.u32 %v565, 4294901760
    %567 = vmatmul.mubr.f32.gmra.mxu0 %v566
    %v568 = vpop.f32.mrf.mxu0
    %v569 = vadd.f32 0.0, %v568
    %v570 = vpop.f32.mrf.mxu0
    %571 = vmatprep.mubr.f32.mxu0 0.0
    %v572 = vand.u32 %v319, 4294901760
    %v573 = vsub.f32 %v319, %v572
    %v574 = vand.u32 %v573, 4294901760
    %v575 = vsub.f32 %v573, %v574
    %v576 = vand.u32 %v575, 4294901760
    %577 = vmatmul.mubr.f32.gmra.mxu0 %v576
    %v578 = vpop.f32.mrf.mxu0
    %v579 = vadd.f32 0.0, %v578
    %v580 = vpop.f32.mrf.mxu0
    %581 = vmatprep.mubr.f32.mxu0 0.0
    %v582 = vand.u32 %v320, 4294901760
    %v583 = vsub.f32 %v320, %v582
    %v584 = vand.u32 %v583, 4294901760
    %v585 = vsub.f32 %v583, %v584
    %v586 = vand.u32 %v585, 4294901760
    %587 = vmatmul.mubr.f32.gmra.mxu0 %v586
    %v588 = vpop.f32.mrf.mxu0
    %v589 = vadd.f32 0.0, %v588
    %v590 = vpop.f32.mrf.mxu0
    %591 = vmatprep.mubr.f32.mxu0 0.0
    %v592 = vand.u32 %v321, 4294901760
    %v593 = vsub.f32 %v321, %v592
    %v594 = vand.u32 %v593, 4294901760
    %v595 = vsub.f32 %v593, %v594
    %v596 = vand.u32 %v595, 4294901760
    %597 = vmatmul.mubr.f32.gmra.mxu0 %v596
    %v598 = vpop.f32.mrf.mxu0
    %v599 = vadd.f32 0.0, %v598
    %v600 = vpop.f32.mrf.mxu0
    %601 = vmatprep.mubr.f32.mxu0 0.0
    %v602 = vand.u32 %v322, 4294901760
    %v603 = vsub.f32 %v322, %v602
    %v604 = vand.u32 %v603, 4294901760
    %v605 = vsub.f32 %v603, %v604
    %v606 = vand.u32 %v605, 4294901760
    %607 = vmatmul.mubr.f32.gmra.mxu0 %v606
    %v608 = vpop.f32.mrf.mxu0
    %v609 = vadd.f32 0.0, %v608
    %v610 = vpop.f32.mrf.mxu0
    %611 = vmatprep.mubr.f32.mxu0 0.0
    %v612 = vand.u32 %v323, 4294901760
    %v613 = vsub.f32 %v323, %v612
    %v614 = vand.u32 %v613, 4294901760
    %v615 = vsub.f32 %v613, %v614
    %v616 = vand.u32 %v615, 4294901760
    %617 = vmatmul.mubr.f32.gmra.mxu0 %v616
    %v618 = vpop.f32.mrf.mxu0
    %v619 = vadd.f32 0.0, %v618
    %v620 = vpop.f32.mrf.mxu0
    %621 = vmatprep.mubr.f32.mxu0 0.0
    %v622 = vand.u32 %v324, 4294901760
    %v623 = vsub.f32 %v324, %v622
    %v624 = vand.u32 %v623, 4294901760
    %v625 = vsub.f32 %v623, %v624
    %v626 = vand.u32 %v625, 4294901760
    %627 = vmatmul.mubr.f32.gmra.mxu0 %v626
    %v628 = vpop.f32.mrf.mxu0
    %v629 = vadd.f32 0.0, %v628
    %v630 = vpop.f32.mrf.mxu0
    %631 = vmatprep.mubr.f32.mxu0 0.0
    %v632 = vand.u32 %v325, 4294901760
    %v633 = vsub.f32 %v325, %v632
    %v634 = vand.u32 %v633, 4294901760
    %v635 = vsub.f32 %v633, %v634
    %v636 = vand.u32 %v635, 4294901760
    %637 = vmatmul.mubr.f32.gmra.mxu0 %v636
    %v638 = vpop.f32.mrf.mxu0
    %v639 = vadd.f32 0.0, %v638
    %v640 = vpop.f32.mrf.mxu0
    %641 = vmatprep.mubr.f32.mxu0 0.0
    %v642 = vand.u32 %v326, 4294901760
    %v643 = vsub.f32 %v326, %v642
    %v644 = vand.u32 %v643, 4294901760
    %v645 = vsub.f32 %v643, %v644
    %v646 = vand.u32 %v645, 4294901760
    %647 = vmatmul.mubr.f32.gmra.mxu0 %v646
    %v648 = vpop.f32.mrf.mxu0
    %v649 = vadd.f32 0.0, %v648
    %v650 = vpop.f32.mrf.mxu0
    %651 = vmatprep.mubr.f32.mxu0 0.0
    %v652 = vand.u32 %v327, 4294901760
    %v653 = vsub.f32 %v327, %v652
    %v654 = vand.u32 %v653, 4294901760
    %v655 = vsub.f32 %v653, %v654
    %v656 = vand.u32 %v655, 4294901760
    %657 = vmatmul.mubr.f32.gmra.mxu0 %v656
    %v658 = vpop.f32.mrf.mxu0
    %v659 = vadd.f32 0.0, %v658
    %v660 = vpop.f32.mrf.mxu0
    %661 = vmatprep.mubr.f32.mxu0 0.0
    %v662 = vand.u32 %v328, 4294901760
    %v663 = vsub.f32 %v328, %v662
    %v664 = vand.u32 %v663, 4294901760
    %v665 = vsub.f32 %v663, %v664
    %v666 = vand.u32 %v665, 4294901760
    %667 = vmatmul.mubr.f32.gmra.mxu0 %v666
    %v668 = vpop.f32.mrf.mxu0
    %v669 = vadd.f32 0.0, %v668
    %v670 = vpop.f32.mrf.mxu0
    %671 = vmatprep.mubr.f32.mxu0 0.0
    %v672 = vand.u32 %v329, 4294901760
    %v673 = vsub.f32 %v329, %v672
    %v674 = vand.u32 %v673, 4294901760
    %v675 = vsub.f32 %v673, %v674
    %v676 = vand.u32 %v675, 4294901760
    %677 = vmatmul.mubr.f32.gmra.mxu0 %v676
    %v678 = vpop.f32.mrf.mxu0
    %v679 = vadd.f32 0.0, %v678
    %v680 = vpop.f32.mrf.mxu0
    %681 = vmatprep.mubr.f32.mxu0 0.0
    %v682 = vand.u32 %v330, 4294901760
    %v683 = vsub.f32 %v330, %v682
    %v684 = vand.u32 %v683, 4294901760
    %v685 = vsub.f32 %v683, %v684
    %v686 = vand.u32 %v685, 4294901760
    %687 = vmatmul.mubr.f32.gmra.mxu0 %v686
    %v688 = vpop.f32.mrf.mxu0
    %v689 = vadd.f32 0.0, %v688
    %v690 = vpop.f32.mrf.mxu0
    %691 = vmatprep.mubr.f32.mxu0 0.0
    %v692 = vand.u32 %v331, 4294901760
    %v693 = vsub.f32 %v331, %v692
    %v694 = vand.u32 %v693, 4294901760
    %v695 = vsub.f32 %v693, %v694
    %v696 = vand.u32 %v695, 4294901760
    %697 = vmatmul.mubr.f32.gmra.mxu0 %v696
    %v698 = vpop.f32.mrf.mxu0
    %v699 = vadd.f32 0.0, %v698
    %v700 = vpop.f32.mrf.mxu0
    %701 = vmatprep.mubr.f32.mxu0 0.0
    %v702 = vand.u32 %v332, 4294901760
    %v703 = vsub.f32 %v332, %v702
    %v704 = vand.u32 %v703, 4294901760
    %v705 = vsub.f32 %v703, %v704
    %v706 = vand.u32 %v705, 4294901760
    %707 = vmatmul.mubr.f32.gmra.mxu0 %v706
    %v708 = vpop.f32.mrf.mxu0
    %v709 = vadd.f32 0.0, %v708
    %v710 = vpop.f32.mrf.mxu0
    %711 = vmatprep.mubr.f32.mxu0 0.0
    %v712 = vand.u32 %v333, 4294901760
    %v713 = vsub.f32 %v333, %v712
    %v714 = vand.u32 %v713, 4294901760
    %v715 = vsub.f32 %v713, %v714
    %v716 = vand.u32 %v715, 4294901760
    %717 = vmatmul.mubr.f32.gmra.mxu0 %v716
    %v718 = vpop.f32.mrf.mxu0
    %v719 = vadd.f32 0.0, %v718
    %v720 = vpop.f32.mrf.mxu0
    %721 = vmatprep.mubr.f32.mxu0 0.0
    %v722 = vand.u32 %v334, 4294901760
    %v723 = vsub.f32 %v334, %v722
    %v724 = vand.u32 %v723, 4294901760
    %v725 = vsub.f32 %v723, %v724
    %v726 = vand.u32 %v725, 4294901760
    %727 = vmatmul.mubr.f32.gmra.mxu0 %v726
    %v728 = vpop.f32.mrf.mxu0
    %v729 = vadd.f32 0.0, %v728
    %v730 = vpop.f32.mrf.mxu0
    %731 = vmatprep.mubr.f32.mxu0 0.0
    %v732 = vand.u32 %v335, 4294901760
    %v733 = vsub.f32 %v335, %v732
    %v734 = vand.u32 %v733, 4294901760
    %v735 = vsub.f32 %v733, %v734
    %v736 = vand.u32 %v735, 4294901760
    %737 = vmatmul.mubr.f32.gmra.mxu0 %v736
    %v738 = vpop.f32.mrf.mxu0
    %v739 = vadd.f32 0.0, %v738
    %v740 = vpop.f32.mrf.mxu0
    %741 = vmatprep.mubr.f32.mxu0 0.0
    %v742 = vand.u32 %v336, 4294901760
    %v743 = vsub.f32 %v336, %v742
    %v744 = vand.u32 %v743, 4294901760
    %v745 = vsub.f32 %v743, %v744
    %v746 = vand.u32 %v745, 4294901760
    %747 = vmatmul.mubr.f32.gmra.mxu0 %v746
    %v748 = vpop.f32.mrf.mxu0
    %v749 = vadd.f32 0.0, %v748
    %v750 = vpop.f32.mrf.mxu0
    %751 = vmatprep.mubr.f32.mxu0 0.0
    %v752 = vand.u32 %v337, 4294901760
    %v753 = vsub.f32 %v337, %v752
    %v754 = vand.u32 %v753, 4294901760
    %v755 = vsub.f32 %v753, %v754
    %v756 = vand.u32 %v755, 4294901760
    %757 = vmatmul.mubr.f32.gmra.mxu0 %v756
    %v758 = vpop.f32.mrf.mxu0
    %v759 = vadd.f32 0.0, %v758
    %v760 = vpop.f32.mrf.mxu0
    %761 = vmatprep.mubr.f32.mxu0 0.0
    %v762 = vand.u32 %v338, 4294901760
    %v763 = vsub.f32 %v338, %v762
    %v764 = vand.u32 %v763, 4294901760
    %v765 = vsub.f32 %v763, %v764
    %v766 = vand.u32 %v765, 4294901760
    %767 = vmatmul.mubr.f32.gmra.mxu0 %v766
    %v768 = vpop.f32.mrf.mxu0
    %v769 = vadd.f32 0.0, %v768
    %v770 = vpop.f32.mrf.mxu0
    %771 = vmatprep.mubr.f32.mxu0 0.0
    %v772 = vand.u32 %v339, 4294901760
    %v773 = vsub.f32 %v339, %v772
    %v774 = vand.u32 %v773, 4294901760
    %v775 = vsub.f32 %v773, %v774
    %v776 = vand.u32 %v775, 4294901760
    %777 = vmatmul.mubr.f32.gmra.mxu0 %v776
    %v778 = vpop.f32.mrf.mxu0
    %v779 = vadd.f32 0.0, %v778
    %v780 = vpop.f32.mrf.mxu0
    %781 = vmatprep.mubr.f32.mxu0 0.0
    %v782 = vand.u32 %v340, 4294901760
    %v783 = vsub.f32 %v340, %v782
    %v784 = vand.u32 %v783, 4294901760
    %v785 = vsub.f32 %v783, %v784
    %v786 = vand.u32 %v785, 4294901760
    %787 = vmatmul.mubr.f32.gmra.mxu0 %v786
    %v788 = vpop.f32.mrf.mxu0
    %v789 = vadd.f32 0.0, %v788
    %v790 = vpop.f32.mrf.mxu0
    %791 = vmatprep.mubr.f32.mxu0 0.0
    %v792 = vand.u32 %v341, 4294901760
    %v793 = vsub.f32 %v341, %v792
    %v794 = vand.u32 %v793, 4294901760
    %v795 = vsub.f32 %v793, %v794
    %v796 = vand.u32 %v795, 4294901760
    %797 = vmatmul.mubr.f32.gmra.mxu0 %v796
    %v798 = vpop.f32.mrf.mxu0
    %v799 = vadd.f32 0.0, %v798
    %v800 = vpop.f32.mrf.mxu0
    %801 = vmatprep.mubr.f32.mxu0 0.0
    %v802 = vand.u32 %v342, 4294901760
    %v803 = vsub.f32 %v342, %v802
    %v804 = vand.u32 %v803, 4294901760
    %v805 = vsub.f32 %v803, %v804
    %v806 = vand.u32 %v805, 4294901760
    %807 = vmatmul.mubr.f32.gmra.mxu0 %v806
    %v808 = vpop.f32.mrf.mxu0
    %v809 = vadd.f32 0.0, %v808
    %v810 = vpop.f32.mrf.mxu0
    %811 = vmatprep.mubr.f32.mxu0 0.0
    %v812 = vand.u32 %v343, 4294901760
    %v813 = vsub.f32 %v343, %v812
    %v814 = vand.u32 %v813, 4294901760
    %v815 = vsub.f32 %v813, %v814
    %v816 = vand.u32 %v815, 4294901760
    %817 = vmatmul.mubr.f32.gmra.mxu0 %v816
    %v818 = vpop.f32.mrf.mxu0
    %v819 = vadd.f32 0.0, %v818
    %v820 = vpop.f32.mrf.mxu0
    %821 = vmatprep.mubr.f32.mxu0 0.0
    %v822 = vand.u32 %v344, 4294901760
    %v823 = vsub.f32 %v344, %v822
    %v824 = vand.u32 %v823, 4294901760
    %v825 = vsub.f32 %v823, %v824
    %v826 = vand.u32 %v825, 4294901760
    %827 = vmatmul.mubr.f32.gmra.mxu0 %v826
    %v828 = vpop.f32.mrf.mxu0
    %v829 = vadd.f32 0.0, %v828
    %v830 = vpop.f32.mrf.mxu0
    %831 = vmatprep.mubr.f32.mxu0 0.0
    %v832 = vand.u32 %v345, 4294901760
    %v833 = vsub.f32 %v345, %v832
    %v834 = vand.u32 %v833, 4294901760
    %v835 = vsub.f32 %v833, %v834
    %v836 = vand.u32 %v835, 4294901760
    %837 = vmatmul.mubr.f32.gmra.mxu0 %v836
    %v838 = vpop.f32.mrf.mxu0
    %v839 = vadd.f32 0.0, %v838
    %v840 = vpop.f32.mrf.mxu0
    %841 = vmatprep.mubr.f32.mxu0 0.0
    %v842 = vand.u32 %v346, 4294901760
    %v843 = vsub.f32 %v346, %v842
    %v844 = vand.u32 %v843, 4294901760
    %v845 = vsub.f32 %v843, %v844
    %v846 = vand.u32 %v845, 4294901760
    %847 = vmatmul.mubr.f32.gmra.mxu0 %v846
    %v848 = vpop.f32.mrf.mxu0
    %v849 = vadd.f32 0.0, %v848
    %v850 = vpop.f32.mrf.mxu0
    %851 = vmatprep.mubr.f32.mxu0 0.0
    %v852 = vand.u32 %v347, 4294901760
    %v853 = vsub.f32 %v347, %v852
    %v854 = vand.u32 %v853, 4294901760
    %v855 = vsub.f32 %v853, %v854
    %v856 = vand.u32 %v855, 4294901760
    %857 = vmatmul.mubr.f32.gmra.mxu0 %v856
    %v858 = vpop.f32.mrf.mxu0
    %v859 = vadd.f32 0.0, %v858
    %v860 = vpop.f32.mrf.mxu0
    %861 = vmatprep.mubr.f32.mxu0 0.0
    %v862 = vand.u32 %v348, 4294901760
    %v863 = vsub.f32 %v348, %v862
    %v864 = vand.u32 %v863, 4294901760
    %v865 = vsub.f32 %v863, %v864
    %v866 = vand.u32 %v865, 4294901760
    %867 = vmatmul.mubr.f32.gmra.mxu0 %v866
    %v868 = vpop.f32.mrf.mxu0
    %v869 = vadd.f32 0.0, %v868
    %v870 = vpop.f32.mrf.mxu0
    %871 = vmatprep.mubr.f32.mxu0 0.0
    %v872 = vand.u32 %v349, 4294901760
    %v873 = vsub.f32 %v349, %v872
    %v874 = vand.u32 %v873, 4294901760
    %v875 = vsub.f32 %v873, %v874
    %v876 = vand.u32 %v875, 4294901760
    %877 = vmatmul.mubr.f32.gmra.mxu0 %v876
    %v878 = vpop.f32.mrf.mxu0
    %v879 = vadd.f32 0.0, %v878
    %v880 = vpop.f32.mrf.mxu0
    %881 = vmatprep.mubr.f32.mxu0 0.0
    %v882 = vand.u32 %v350, 4294901760
    %v883 = vsub.f32 %v350, %v882
    %v884 = vand.u32 %v883, 4294901760
    %v885 = vsub.f32 %v883, %v884
    %v886 = vand.u32 %v885, 4294901760
    %887 = vmatmul.mubr.f32.gmra.mxu0 %v886
    %v888 = vpop.f32.mrf.mxu0
    %v889 = vadd.f32 0.0, %v888
    %v890 = vpop.f32.mrf.mxu0
    %891 = vmatprep.mubr.f32.mxu0 0.0
    %v892 = vand.u32 %v351, 4294901760
    %v893 = vsub.f32 %v351, %v892
    %v894 = vand.u32 %v893, 4294901760
    %v895 = vsub.f32 %v893, %v894
    %v896 = vand.u32 %v895, 4294901760
    %897 = vmatmul.mubr.f32.gmra.mxu0 %v896
    %v898 = vpop.f32.mrf.mxu0
    %v899 = vadd.f32 0.0, %v898
    %v900 = vpop.f32.mrf.mxu0
    %901 = vmatprep.mubr.f32.mxu0 0.0
    %v902 = vand.u32 %v352, 4294901760
    %v903 = vsub.f32 %v352, %v902
    %v904 = vand.u32 %v903, 4294901760
    %v905 = vsub.f32 %v903, %v904
    %v906 = vand.u32 %v905, 4294901760
    %907 = vmatmul.mubr.f32.gmra.mxu0 %v906
    %v908 = vpop.f32.mrf.mxu0
    %v909 = vadd.f32 0.0, %v908
    %v910 = vpop.f32.mrf.mxu0
    %911 = vmatprep.mubr.f32.mxu0 0.0
    %v912 = vand.u32 %v353, 4294901760
    %v913 = vsub.f32 %v353, %v912
    %v914 = vand.u32 %v913, 4294901760
    %v915 = vsub.f32 %v913, %v914
    %v916 = vand.u32 %v915, 4294901760
    %917 = vmatmul.mubr.f32.gmra.mxu0 %v916
    %v918 = vpop.f32.mrf.mxu0
    %v919 = vadd.f32 0.0, %v918
    %v920 = vpop.f32.mrf.mxu0
    %921 = vmatprep.mubr.f32.mxu0 0.0
    %v922 = vand.u32 %v354, 4294901760
    %v923 = vsub.f32 %v354, %v922
    %v924 = vand.u32 %v923, 4294901760
    %v925 = vsub.f32 %v923, %v924
    %v926 = vand.u32 %v925, 4294901760
    %927 = vmatmul.mubr.f32.gmra.mxu0 %v926
    %v928 = vpop.f32.mrf.mxu0
    %v929 = vadd.f32 0.0, %v928
    %v930 = vpop.f32.mrf.mxu0
    %931 = vdwg.mxu0
    %932 = vmatprep.subr.mxu0 0.0
    %v933 = vand.u32 %v370, 4294901760
    %v934 = vsub.f32 %v370, %v933
    %v935 = vand.u32 %v934, 4294901760
    %v936 = vsub.f32 %v934, %v935
    %v937 = vand.u32 %v936, 4294901760
    %938 = vmatpush1.msra.mxu0 %v937
    %939 = vmatprep.subr.mxu0 0.0
    %v940 = vand.u32 %v369, 4294901760
    %v941 = vsub.f32 %v369, %v940
    %v942 = vand.u32 %v941, 4294901760
    %v943 = vsub.f32 %v941, %v942
    %v944 = vand.u32 %v943, 4294901760
    %945 = vmatpush1.msra.mxu0 %v944
    %946 = vmatprep.subr.mxu0 0.0
    %v947 = vand.u32 %v368, 4294901760
    %v948 = vsub.f32 %v368, %v947
    %v949 = vand.u32 %v948, 4294901760
    %v950 = vsub.f32 %v948, %v949
    %v951 = vand.u32 %v950, 4294901760
    %952 = vmatpush1.msra.mxu0 %v951
    %953 = vmatprep.subr.mxu0 0.0
    %v954 = vand.u32 %v367, 4294901760
    %v955 = vsub.f32 %v367, %v954
    %v956 = vand.u32 %v955, 4294901760
    %v957 = vsub.f32 %v955, %v956
    %v958 = vand.u32 %v957, 4294901760
    %959 = vmatpush1.msra.mxu0 %v958
    %960 = vmatprep.subr.mxu0 0.0
    %v961 = vand.u32 %v366, 4294901760
    %v962 = vsub.f32 %v366, %v961
    %v963 = vand.u32 %v962, 4294901760
    %v964 = vsub.f32 %v962, %v963
    %v965 = vand.u32 %v964, 4294901760
    %966 = vmatpush1.msra.mxu0 %v965
    %967 = vmatprep.subr.mxu0 0.0
    %v968 = vand.u32 %v365, 4294901760
    %v969 = vsub.f32 %v365, %v968
    %v970 = vand.u32 %v969, 4294901760
    %v971 = vsub.f32 %v969, %v970
    %v972 = vand.u32 %v971, 4294901760
    %973 = vmatpush1.msra.mxu0 %v972
    %974 = vmatprep.subr.mxu0 0.0
    %v975 = vand.u32 %v364, 4294901760
    %v976 = vsub.f32 %v364, %v975
    %v977 = vand.u32 %v976, 4294901760
    %v978 = vsub.f32 %v976, %v977
    %v979 = vand.u32 %v978, 4294901760
    %980 = vmatpush1.msra.mxu0 %v979
    %981 = vmatprep.subr.mxu0 0.0
    %v982 = vand.u32 %v363, 4294901760
    %v983 = vsub.f32 %v363, %v982
    %v984 = vand.u32 %v983, 4294901760
    %v985 = vsub.f32 %v983, %v984
    %v986 = vand.u32 %v985, 4294901760
    %987 = vmatpush1.msra.mxu0 %v986
    %988 = vmatprep.subr.mxu0 0.0
    %v989 = vand.u32 %v362, 4294901760
    %v990 = vsub.f32 %v362, %v989
    %v991 = vand.u32 %v990, 4294901760
    %v992 = vsub.f32 %v990, %v991
    %v993 = vand.u32 %v992, 4294901760
    %994 = vmatpush1.msra.mxu0 %v993
    %995 = vmatprep.subr.mxu0 0.0
    %v996 = vand.u32 %v361, 4294901760
    %v997 = vsub.f32 %v361, %v996
    %v998 = vand.u32 %v997, 4294901760
    %v999 = vsub.f32 %v997, %v998
    %v1000 = vand.u32 %v999, 4294901760
    %1001 = vmatpush1.msra.mxu0 %v1000
    %1002 = vmatprep.subr.mxu0 0.0
    %v1003 = vand.u32 %v360, 4294901760
    %v1004 = vsub.f32 %v360, %v1003
    %v1005 = vand.u32 %v1004, 4294901760
    %v1006 = vsub.f32 %v1004, %v1005
    %v1007 = vand.u32 %v1006, 4294901760
    %1008 = vmatpush1.msra.mxu0 %v1007
    %1009 = vmatprep.subr.mxu0 0.0
    %v1010 = vand.u32 %v359, 4294901760
    %v1011 = vsub.f32 %v359, %v1010
    %v1012 = vand.u32 %v1011, 4294901760
    %v1013 = vsub.f32 %v1011, %v1012
    %v1014 = vand.u32 %v1013, 4294901760
    %1015 = vmatpush1.msra.mxu0 %v1014
    %1016 = vmatprep.subr.mxu0 0.0
    %v1017 = vand.u32 %v358, 4294901760
    %v1018 = vsub.f32 %v358, %v1017
    %v1019 = vand.u32 %v1018, 4294901760
    %v1020 = vsub.f32 %v1018, %v1019
    %v1021 = vand.u32 %v1020, 4294901760
    %1022 = vmatpush1.msra.mxu0 %v1021
    %1023 = vmatprep.subr.mxu0 0.0
    %v1024 = vand.u32 %v357, 4294901760
    %v1025 = vsub.f32 %v357, %v1024
    %v1026 = vand.u32 %v1025, 4294901760
    %v1027 = vsub.f32 %v1025, %v1026
    %v1028 = vand.u32 %v1027, 4294901760
    %1029 = vmatpush1.msra.mxu0 %v1028
    %1030 = vmatprep.subr.mxu0 0.0
    %v1031 = vand.u32 %v356, 4294901760
    %v1032 = vsub.f32 %v356, %v1031
    %v1033 = vand.u32 %v1032, 4294901760
    %v1034 = vsub.f32 %v1032, %v1033
    %v1035 = vand.u32 %v1034, 4294901760
    %1036 = vmatpush1.msra.mxu0 %v1035
    %1037 = vmatprep.subr.mxu0 0.0
    %v1038 = vand.u32 %v355, 4294901760
    %v1039 = vsub.f32 %v355, %v1038
    %v1040 = vand.u32 %v1039, 4294901760
    %v1041 = vsub.f32 %v1039, %v1040
    %v1042 = vand.u32 %v1041, 4294901760
    %1043 = vmatpush1.msra.mxu0 %v1042
    %1044 = vmatprep.subr.mxu0 0.0
    %1045 = vmatpush2.msra.mxu0 0.0
    %1046 = vmatprep.subr.mxu0 0.0
    %1047 = vmatpush2.msra.mxu0 0.0
    %1048 = vmatprep.subr.mxu0 0.0
    %1049 = vmatpush2.msra.mxu0 0.0
    %1050 = vmatprep.subr.mxu0 0.0
    %1051 = vmatpush2.msra.mxu0 0.0
    %1052 = vmatprep.subr.mxu0 0.0
    %1053 = vmatpush2.msra.mxu0 0.0
    %1054 = vmatprep.subr.mxu0 0.0
    %1055 = vmatpush2.msra.mxu0 0.0
    %1056 = vmatprep.subr.mxu0 0.0
    %1057 = vmatpush2.msra.mxu0 0.0
    %1058 = vmatprep.subr.mxu0 0.0
    %1059 = vmatpush2.msra.mxu0 0.0
    %1060 = vmatprep.subr.mxu0 0.0
    %1061 = vmatpush2.msra.mxu0 0.0
    %1062 = vmatprep.subr.mxu0 0.0
    %1063 = vmatpush2.msra.mxu0 0.0
    %1064 = vmatprep.subr.mxu0 0.0
    %1065 = vmatpush2.msra.mxu0 0.0
    %1066 = vmatprep.subr.mxu0 0.0
    %1067 = vmatpush2.msra.mxu0 0.0
    %1068 = vmatprep.subr.mxu0 0.0
    %1069 = vmatpush2.msra.mxu0 0.0
    %1070 = vmatprep.subr.mxu0 0.0
    %1071 = vmatpush2.msra.mxu0 0.0
    %1072 = vmatprep.subr.mxu0 0.0
    %1073 = vmatpush2.msra.mxu0 0.0
    %1074 = vmatprep.subr.mxu0 0.0
    %1075 = vmatpush2.msra.mxu0 0.0
    %1076 = vmatprep.mubr.f32.mxu0 0.0
    %v1077 = vand.u32 %v307, 4294901760
    %1078 = vmatmul.mubr.f32.gmra.mxu0 %v1077
    %v1079 = vpop.f32.mrf.mxu0
    %v1080 = vadd.f32 %v459, %v1079
    %v1081 = vpop.f32.mrf.mxu0
    %1082 = vmatprep.mubr.f32.mxu0 0.0
    %v1083 = vand.u32 %v308, 4294901760
    %1084 = vmatmul.mubr.f32.gmra.mxu0 %v1083
    %v1085 = vpop.f32.mrf.mxu0
    %v1086 = vadd.f32 %v469, %v1085
    %v1087 = vpop.f32.mrf.mxu0
    %1088 = vmatprep.mubr.f32.mxu0 0.0
    %v1089 = vand.u32 %v309, 4294901760
    %1090 = vmatmul.mubr.f32.gmra.mxu0 %v1089
    %v1091 = vpop.f32.mrf.mxu0
    %v1092 = vadd.f32 %v479, %v1091
    %v1093 = vpop.f32.mrf.mxu0
    %1094 = vmatprep.mubr.f32.mxu0 0.0
    %v1095 = vand.u32 %v310, 4294901760
    %1096 = vmatmul.mubr.f32.gmra.mxu0 %v1095
    %v1097 = vpop.f32.mrf.mxu0
    %v1098 = vadd.f32 %v489, %v1097
    %v1099 = vpop.f32.mrf.mxu0
    %1100 = vmatprep.mubr.f32.mxu0 0.0
    %v1101 = vand.u32 %v311, 4294901760
    %1102 = vmatmul.mubr.f32.gmra.mxu0 %v1101
    %v1103 = vpop.f32.mrf.mxu0
    %v1104 = vadd.f32 %v499, %v1103
    %v1105 = vpop.f32.mrf.mxu0
    %1106 = vmatprep.mubr.f32.mxu0 0.0
    %v1107 = vand.u32 %v312, 4294901760
    %1108 = vmatmul.mubr.f32.gmra.mxu0 %v1107
    %v1109 = vpop.f32.mrf.mxu0
    %v1110 = vadd.f32 %v509, %v1109
    %v1111 = vpop.f32.mrf.mxu0
    %1112 = vmatprep.mubr.f32.mxu0 0.0
    %v1113 = vand.u32 %v313, 4294901760
    %1114 = vmatmul.mubr.f32.gmra.mxu0 %v1113
    %v1115 = vpop.f32.mrf.mxu0
    %v1116 = vadd.f32 %v519, %v1115
    %v1117 = vpop.f32.mrf.mxu0
    %1118 = vmatprep.mubr.f32.mxu0 0.0
    %v1119 = vand.u32 %v314, 4294901760
    %1120 = vmatmul.mubr.f32.gmra.mxu0 %v1119
    %v1121 = vpop.f32.mrf.mxu0
    %v1122 = vadd.f32 %v529, %v1121
    %v1123 = vpop.f32.mrf.mxu0
    %1124 = vmatprep.mubr.f32.mxu0 0.0
    %v1125 = vand.u32 %v315, 4294901760
    %1126 = vmatmul.mubr.f32.gmra.mxu0 %v1125
    %v1127 = vpop.f32.mrf.mxu0
    %v1128 = vadd.f32 %v539, %v1127
    %v1129 = vpop.f32.mrf.mxu0
    %1130 = vmatprep.mubr.f32.mxu0 0.0
    %v1131 = vand.u32 %v316, 4294901760
    %1132 = vmatmul.mubr.f32.gmra.mxu0 %v1131
    %v1133 = vpop.f32.mrf.mxu0
    %v1134 = vadd.f32 %v549, %v1133
    %v1135 = vpop.f32.mrf.mxu0
    %1136 = vmatprep.mubr.f32.mxu0 0.0
    %v1137 = vand.u32 %v317, 4294901760
    %1138 = vmatmul.mubr.f32.gmra.mxu0 %v1137
    %v1139 = vpop.f32.mrf.mxu0
    %v1140 = vadd.f32 %v559, %v1139
    %v1141 = vpop.f32.mrf.mxu0
    %1142 = vmatprep.mubr.f32.mxu0 0.0
    %v1143 = vand.u32 %v318, 4294901760
    %1144 = vmatmul.mubr.f32.gmra.mxu0 %v1143
    %v1145 = vpop.f32.mrf.mxu0
    %v1146 = vadd.f32 %v569, %v1145
    %v1147 = vpop.f32.mrf.mxu0
    %1148 = vmatprep.mubr.f32.mxu0 0.0
    %v1149 = vand.u32 %v319, 4294901760
    %1150 = vmatmul.mubr.f32.gmra.mxu0 %v1149
    %v1151 = vpop.f32.mrf.mxu0
    %v1152 = vadd.f32 %v579, %v1151
    %v1153 = vpop.f32.mrf.mxu0
    %1154 = vmatprep.mubr.f32.mxu0 0.0
    %v1155 = vand.u32 %v320, 4294901760
    %1156 = vmatmul.mubr.f32.gmra.mxu0 %v1155
    %v1157 = vpop.f32.mrf.mxu0
    %v1158 = vadd.f32 %v589, %v1157
    %v1159 = vpop.f32.mrf.mxu0
    %1160 = vmatprep.mubr.f32.mxu0 0.0
    %v1161 = vand.u32 %v321, 4294901760
    %1162 = vmatmul.mubr.f32.gmra.mxu0 %v1161
    %v1163 = vpop.f32.mrf.mxu0
    %v1164 = vadd.f32 %v599, %v1163
    %v1165 = vpop.f32.mrf.mxu0
    %1166 = vmatprep.mubr.f32.mxu0 0.0
    %v1167 = vand.u32 %v322, 4294901760
    %1168 = vmatmul.mubr.f32.gmra.mxu0 %v1167
    %v1169 = vpop.f32.mrf.mxu0
    %v1170 = vadd.f32 %v609, %v1169
    %v1171 = vpop.f32.mrf.mxu0
    %1172 = vmatprep.mubr.f32.mxu0 0.0
    %v1173 = vand.u32 %v323, 4294901760
    %1174 = vmatmul.mubr.f32.gmra.mxu0 %v1173
    %v1175 = vpop.f32.mrf.mxu0
    %v1176 = vadd.f32 %v619, %v1175
    %v1177 = vpop.f32.mrf.mxu0
    %1178 = vmatprep.mubr.f32.mxu0 0.0
    %v1179 = vand.u32 %v324, 4294901760
    %1180 = vmatmul.mubr.f32.gmra.mxu0 %v1179
    %v1181 = vpop.f32.mrf.mxu0
    %v1182 = vadd.f32 %v629, %v1181
    %v1183 = vpop.f32.mrf.mxu0
    %1184 = vmatprep.mubr.f32.mxu0 0.0
    %v1185 = vand.u32 %v325, 4294901760
    %1186 = vmatmul.mubr.f32.gmra.mxu0 %v1185
    %v1187 = vpop.f32.mrf.mxu0
    %v1188 = vadd.f32 %v639, %v1187
    %v1189 = vpop.f32.mrf.mxu0
    %1190 = vmatprep.mubr.f32.mxu0 0.0
    %v1191 = vand.u32 %v326, 4294901760
    %1192 = vmatmul.mubr.f32.gmra.mxu0 %v1191
    %v1193 = vpop.f32.mrf.mxu0
    %v1194 = vadd.f32 %v649, %v1193
    %v1195 = vpop.f32.mrf.mxu0
    %1196 = vmatprep.mubr.f32.mxu0 0.0
    %v1197 = vand.u32 %v327, 4294901760
    %1198 = vmatmul.mubr.f32.gmra.mxu0 %v1197
    %v1199 = vpop.f32.mrf.mxu0
    %v1200 = vadd.f32 %v659, %v1199
    %v1201 = vpop.f32.mrf.mxu0
    %1202 = vmatprep.mubr.f32.mxu0 0.0
    %v1203 = vand.u32 %v328, 4294901760
    %1204 = vmatmul.mubr.f32.gmra.mxu0 %v1203
    %v1205 = vpop.f32.mrf.mxu0
    %v1206 = vadd.f32 %v669, %v1205
    %v1207 = vpop.f32.mrf.mxu0
    %1208 = vmatprep.mubr.f32.mxu0 0.0
    %v1209 = vand.u32 %v329, 4294901760
    %1210 = vmatmul.mubr.f32.gmra.mxu0 %v1209
    %v1211 = vpop.f32.mrf.mxu0
    %v1212 = vadd.f32 %v679, %v1211
    %v1213 = vpop.f32.mrf.mxu0
    %1214 = vmatprep.mubr.f32.mxu0 0.0
    %v1215 = vand.u32 %v330, 4294901760
    %1216 = vmatmul.mubr.f32.gmra.mxu0 %v1215
    %v1217 = vpop.f32.mrf.mxu0
    %v1218 = vadd.f32 %v689, %v1217
    %v1219 = vpop.f32.mrf.mxu0
    %1220 = vmatprep.mubr.f32.mxu0 0.0
    %v1221 = vand.u32 %v331, 4294901760
    %1222 = vmatmul.mubr.f32.gmra.mxu0 %v1221
    %v1223 = vpop.f32.mrf.mxu0
    %v1224 = vadd.f32 %v699, %v1223
    %v1225 = vpop.f32.mrf.mxu0
    %1226 = vmatprep.mubr.f32.mxu0 0.0
    %v1227 = vand.u32 %v332, 4294901760
    %1228 = vmatmul.mubr.f32.gmra.mxu0 %v1227
    %v1229 = vpop.f32.mrf.mxu0
    %v1230 = vadd.f32 %v709, %v1229
    %v1231 = vpop.f32.mrf.mxu0
    %1232 = vmatprep.mubr.f32.mxu0 0.0
    %v1233 = vand.u32 %v333, 4294901760
    %1234 = vmatmul.mubr.f32.gmra.mxu0 %v1233
    %v1235 = vpop.f32.mrf.mxu0
    %v1236 = vadd.f32 %v719, %v1235
    %v1237 = vpop.f32.mrf.mxu0
    %1238 = vmatprep.mubr.f32.mxu0 0.0
    %v1239 = vand.u32 %v334, 4294901760
    %1240 = vmatmul.mubr.f32.gmra.mxu0 %v1239
    %v1241 = vpop.f32.mrf.mxu0
    %v1242 = vadd.f32 %v729, %v1241
    %v1243 = vpop.f32.mrf.mxu0
    %1244 = vmatprep.mubr.f32.mxu0 0.0
    %v1245 = vand.u32 %v335, 4294901760
    %1246 = vmatmul.mubr.f32.gmra.mxu0 %v1245
    %v1247 = vpop.f32.mrf.mxu0
    %v1248 = vadd.f32 %v739, %v1247
    %v1249 = vpop.f32.mrf.mxu0
    %1250 = vmatprep.mubr.f32.mxu0 0.0
    %v1251 = vand.u32 %v336, 4294901760
    %1252 = vmatmul.mubr.f32.gmra.mxu0 %v1251
    %v1253 = vpop.f32.mrf.mxu0
    %v1254 = vadd.f32 %v749, %v1253
    %v1255 = vpop.f32.mrf.mxu0
    %1256 = vmatprep.mubr.f32.mxu0 0.0
    %v1257 = vand.u32 %v337, 4294901760
    %1258 = vmatmul.mubr.f32.gmra.mxu0 %v1257
    %v1259 = vpop.f32.mrf.mxu0
    %v1260 = vadd.f32 %v759, %v1259
    %v1261 = vpop.f32.mrf.mxu0
    %1262 = vmatprep.mubr.f32.mxu0 0.0
    %v1263 = vand.u32 %v338, 4294901760
    %1264 = vmatmul.mubr.f32.gmra.mxu0 %v1263
    %v1265 = vpop.f32.mrf.mxu0
    %v1266 = vadd.f32 %v769, %v1265
    %v1267 = vpop.f32.mrf.mxu0
    %1268 = vmatprep.mubr.f32.mxu0 0.0
    %v1269 = vand.u32 %v339, 4294901760
    %1270 = vmatmul.mubr.f32.gmra.mxu0 %v1269
    %v1271 = vpop.f32.mrf.mxu0
    %v1272 = vadd.f32 %v779, %v1271
    %v1273 = vpop.f32.mrf.mxu0
    %1274 = vmatprep.mubr.f32.mxu0 0.0
    %v1275 = vand.u32 %v340, 4294901760
    %1276 = vmatmul.mubr.f32.gmra.mxu0 %v1275
    %v1277 = vpop.f32.mrf.mxu0
    %v1278 = vadd.f32 %v789, %v1277
    %v1279 = vpop.f32.mrf.mxu0
    %1280 = vmatprep.mubr.f32.mxu0 0.0
    %v1281 = vand.u32 %v341, 4294901760
    %1282 = vmatmul.mubr.f32.gmra.mxu0 %v1281
    %v1283 = vpop.f32.mrf.mxu0
    %v1284 = vadd.f32 %v799, %v1283
    %v1285 = vpop.f32.mrf.mxu0
    %1286 = vmatprep.mubr.f32.mxu0 0.0
    %v1287 = vand.u32 %v342, 4294901760
    %1288 = vmatmul.mubr.f32.gmra.mxu0 %v1287
    %v1289 = vpop.f32.mrf.mxu0
    %v1290 = vadd.f32 %v809, %v1289
    %v1291 = vpop.f32.mrf.mxu0
    %1292 = vmatprep.mubr.f32.mxu0 0.0
    %v1293 = vand.u32 %v343, 4294901760
    %1294 = vmatmul.mubr.f32.gmra.mxu0 %v1293
    %v1295 = vpop.f32.mrf.mxu0
    %v1296 = vadd.f32 %v819, %v1295
    %v1297 = vpop.f32.mrf.mxu0
    %1298 = vmatprep.mubr.f32.mxu0 0.0
    %v1299 = vand.u32 %v344, 4294901760
    %1300 = vmatmul.mubr.f32.gmra.mxu0 %v1299
    %v1301 = vpop.f32.mrf.mxu0
    %v1302 = vadd.f32 %v829, %v1301
    %v1303 = vpop.f32.mrf.mxu0
    %1304 = vmatprep.mubr.f32.mxu0 0.0
    %v1305 = vand.u32 %v345, 4294901760
    %1306 = vmatmul.mubr.f32.gmra.mxu0 %v1305
    %v1307 = vpop.f32.mrf.mxu0
    %v1308 = vadd.f32 %v839, %v1307
    %v1309 = vpop.f32.mrf.mxu0
    %1310 = vmatprep.mubr.f32.mxu0 0.0
    %v1311 = vand.u32 %v346, 4294901760
    %1312 = vmatmul.mubr.f32.gmra.mxu0 %v1311
    %v1313 = vpop.f32.mrf.mxu0
    %v1314 = vadd.f32 %v849, %v1313
    %v1315 = vpop.f32.mrf.mxu0
    %1316 = vmatprep.mubr.f32.mxu0 0.0
    %v1317 = vand.u32 %v347, 4294901760
    %1318 = vmatmul.mubr.f32.gmra.mxu0 %v1317
    %v1319 = vpop.f32.mrf.mxu0
    %v1320 = vadd.f32 %v859, %v1319
    %v1321 = vpop.f32.mrf.mxu0
    %1322 = vmatprep.mubr.f32.mxu0 0.0
    %v1323 = vand.u32 %v348, 4294901760
    %1324 = vmatmul.mubr.f32.gmra.mxu0 %v1323
    %v1325 = vpop.f32.mrf.mxu0
    %v1326 = vadd.f32 %v869, %v1325
    %v1327 = vpop.f32.mrf.mxu0
    %1328 = vmatprep.mubr.f32.mxu0 0.0
    %v1329 = vand.u32 %v349, 4294901760
    %1330 = vmatmul.mubr.f32.gmra.mxu0 %v1329
    %v1331 = vpop.f32.mrf.mxu0
    %v1332 = vadd.f32 %v879, %v1331
    %v1333 = vpop.f32.mrf.mxu0
    %1334 = vmatprep.mubr.f32.mxu0 0.0
    %v1335 = vand.u32 %v350, 4294901760
    %1336 = vmatmul.mubr.f32.gmra.mxu0 %v1335
    %v1337 = vpop.f32.mrf.mxu0
    %v1338 = vadd.f32 %v889, %v1337
    %v1339 = vpop.f32.mrf.mxu0
    %1340 = vmatprep.mubr.f32.mxu0 0.0
    %v1341 = vand.u32 %v351, 4294901760
    %1342 = vmatmul.mubr.f32.gmra.mxu0 %v1341
    %v1343 = vpop.f32.mrf.mxu0
    %v1344 = vadd.f32 %v899, %v1343
    %v1345 = vpop.f32.mrf.mxu0
    %1346 = vmatprep.mubr.f32.mxu0 0.0
    %v1347 = vand.u32 %v352, 4294901760
    %1348 = vmatmul.mubr.f32.gmra.mxu0 %v1347
    %v1349 = vpop.f32.mrf.mxu0
    %v1350 = vadd.f32 %v909, %v1349
    %v1351 = vpop.f32.mrf.mxu0
    %1352 = vmatprep.mubr.f32.mxu0 0.0
    %v1353 = vand.u32 %v353, 4294901760
    %1354 = vmatmul.mubr.f32.gmra.mxu0 %v1353
    %v1355 = vpop.f32.mrf.mxu0
    %v1356 = vadd.f32 %v919, %v1355
    %v1357 = vpop.f32.mrf.mxu0
    %1358 = vmatprep.mubr.f32.mxu0 0.0
    %v1359 = vand.u32 %v354, 4294901760
    %1360 = vmatmul.mubr.f32.gmra.mxu0 %v1359
    %v1361 = vpop.f32.mrf.mxu0
    %v1362 = vadd.f32 %v929, %v1361
    %v1363 = vpop.f32.mrf.mxu0
    %1364 = vdwg.mxu0
    %1365 = vmatprep.subr.mxu0 0.0
    %v1366 = vand.u32 %v370, 4294901760
    %v1367 = vsub.f32 %v370, %v1366
    %1368 = vmatpush1.msra.mxu0 %v1367
    %1369 = vmatprep.subr.mxu0 0.0
    %v1370 = vand.u32 %v369, 4294901760
    %v1371 = vsub.f32 %v369, %v1370
    %1372 = vmatpush1.msra.mxu0 %v1371
    %1373 = vmatprep.subr.mxu0 0.0
    %v1374 = vand.u32 %v368, 4294901760
    %v1375 = vsub.f32 %v368, %v1374
    %1376 = vmatpush1.msra.mxu0 %v1375
    %1377 = vmatprep.subr.mxu0 0.0
    %v1378 = vand.u32 %v367, 4294901760
    %v1379 = vsub.f32 %v367, %v1378
    %1380 = vmatpush1.msra.mxu0 %v1379
    %1381 = vmatprep.subr.mxu0 0.0
    %v1382 = vand.u32 %v366, 4294901760
    %v1383 = vsub.f32 %v366, %v1382
    %1384 = vmatpush1.msra.mxu0 %v1383
    %1385 = vmatprep.subr.mxu0 0.0
    %v1386 = vand.u32 %v365, 4294901760
    %v1387 = vsub.f32 %v365, %v1386
    %1388 = vmatpush1.msra.mxu0 %v1387
    %1389 = vmatprep.subr.mxu0 0.0
    %v1390 = vand.u32 %v364, 4294901760
    %v1391 = vsub.f32 %v364, %v1390
    %1392 = vmatpush1.msra.mxu0 %v1391
    %1393 = vmatprep.subr.mxu0 0.0
    %v1394 = vand.u32 %v363, 4294901760
    %v1395 = vsub.f32 %v363, %v1394
    %1396 = vmatpush1.msra.mxu0 %v1395
    %1397 = vmatprep.subr.mxu0 0.0
    %v1398 = vand.u32 %v362, 4294901760
    %v1399 = vsub.f32 %v362, %v1398
    %1400 = vmatpush1.msra.mxu0 %v1399
    %1401 = vmatprep.subr.mxu0 0.0
    %v1402 = vand.u32 %v361, 4294901760
    %v1403 = vsub.f32 %v361, %v1402
    %1404 = vmatpush1.msra.mxu0 %v1403
    %1405 = vmatprep.subr.mxu0 0.0
    %v1406 = vand.u32 %v360, 4294901760
    %v1407 = vsub.f32 %v360, %v1406
    %1408 = vmatpush1.msra.mxu0 %v1407
    %1409 = vmatprep.subr.mxu0 0.0
    %v1410 = vand.u32 %v359, 4294901760
    %v1411 = vsub.f32 %v359, %v1410
    %1412 = vmatpush1.msra.mxu0 %v1411
    %1413 = vmatprep.subr.mxu0 0.0
    %v1414 = vand.u32 %v358, 4294901760
    %v1415 = vsub.f32 %v358, %v1414
    %1416 = vmatpush1.msra.mxu0 %v1415
    %1417 = vmatprep.subr.mxu0 0.0
    %v1418 = vand.u32 %v357, 4294901760
    %v1419 = vsub.f32 %v357, %v1418
    %1420 = vmatpush1.msra.mxu0 %v1419
    %1421 = vmatprep.subr.mxu0 0.0
    %v1422 = vand.u32 %v356, 4294901760
    %v1423 = vsub.f32 %v356, %v1422
    %1424 = vmatpush1.msra.mxu0 %v1423
    %1425 = vmatprep.subr.mxu0 0.0
    %v1426 = vand.u32 %v355, 4294901760
    %v1427 = vsub.f32 %v355, %v1426
    %1428 = vmatpush1.msra.mxu0 %v1427
    %1429 = vmatprep.subr.mxu0 0.0
    %1430 = vmatpush2.msra.mxu0 0.0
    %1431 = vmatprep.subr.mxu0 0.0
    %1432 = vmatpush2.msra.mxu0 0.0
    %1433 = vmatprep.subr.mxu0 0.0
    %1434 = vmatpush2.msra.mxu0 0.0
    %1435 = vmatprep.subr.mxu0 0.0
    %1436 = vmatpush2.msra.mxu0 0.0
    %1437 = vmatprep.subr.mxu0 0.0
    %1438 = vmatpush2.msra.mxu0 0.0
    %1439 = vmatprep.subr.mxu0 0.0
    %1440 = vmatpush2.msra.mxu0 0.0
    %1441 = vmatprep.subr.mxu0 0.0
    %1442 = vmatpush2.msra.mxu0 0.0
    %1443 = vmatprep.subr.mxu0 0.0
    %1444 = vmatpush2.msra.mxu0 0.0
    %1445 = vmatprep.subr.mxu0 0.0
    %1446 = vmatpush2.msra.mxu0 0.0
    %1447 = vmatprep.subr.mxu0 0.0
    %1448 = vmatpush2.msra.mxu0 0.0
    %1449 = vmatprep.subr.mxu0 0.0
    %1450 = vmatpush2.msra.mxu0 0.0
    %1451 = vmatprep.subr.mxu0 0.0
    %1452 = vmatpush2.msra.mxu0 0.0
    %1453 = vmatprep.subr.mxu0 0.0
    %1454 = vmatpush2.msra.mxu0 0.0
    %1455 = vmatprep.subr.mxu0 0.0
    %1456 = vmatpush2.msra.mxu0 0.0
    %1457 = vmatprep.subr.mxu0 0.0
    %1458 = vmatpush2.msra.mxu0 0.0
    %1459 = vmatprep.subr.mxu0 0.0
    %1460 = vmatpush2.msra.mxu0 0.0
    %1461 = vmatprep.mubr.f32.mxu0 0.0
    %v1462 = vand.u32 %v307, 4294901760
    %v1463 = vsub.f32 %v307, %v1462
    %1464 = vmatmul.mubr.f32.gmra.mxu0 %v1463
    %v1465 = vpop.f32.mrf.mxu0
    %v1466 = vadd.f32 %v1080, %v1465
    %v1467 = vpop.f32.mrf.mxu0
    %1468 = vmatprep.mubr.f32.mxu0 0.0
    %v1469 = vand.u32 %v308, 4294901760
    %v1470 = vsub.f32 %v308, %v1469
    %1471 = vmatmul.mubr.f32.gmra.mxu0 %v1470
    %v1472 = vpop.f32.mrf.mxu0
    %v1473 = vadd.f32 %v1086, %v1472
    %v1474 = vpop.f32.mrf.mxu0
    %1475 = vmatprep.mubr.f32.mxu0 0.0
    %v1476 = vand.u32 %v309, 4294901760
    %v1477 = vsub.f32 %v309, %v1476
    %1478 = vmatmul.mubr.f32.gmra.mxu0 %v1477
    %v1479 = vpop.f32.mrf.mxu0
    %v1480 = vadd.f32 %v1092, %v1479
    %v1481 = vpop.f32.mrf.mxu0
    %1482 = vmatprep.mubr.f32.mxu0 0.0
    %v1483 = vand.u32 %v310, 4294901760
    %v1484 = vsub.f32 %v310, %v1483
    %1485 = vmatmul.mubr.f32.gmra.mxu0 %v1484
    %v1486 = vpop.f32.mrf.mxu0
    %v1487 = vadd.f32 %v1098, %v1486
    %v1488 = vpop.f32.mrf.mxu0
    %1489 = vmatprep.mubr.f32.mxu0 0.0
    %v1490 = vand.u32 %v311, 4294901760
    %v1491 = vsub.f32 %v311, %v1490
    %1492 = vmatmul.mubr.f32.gmra.mxu0 %v1491
    %v1493 = vpop.f32.mrf.mxu0
    %v1494 = vadd.f32 %v1104, %v1493
    %v1495 = vpop.f32.mrf.mxu0
    %1496 = vmatprep.mubr.f32.mxu0 0.0
    %v1497 = vand.u32 %v312, 4294901760
    %v1498 = vsub.f32 %v312, %v1497
    %1499 = vmatmul.mubr.f32.gmra.mxu0 %v1498
    %v1500 = vpop.f32.mrf.mxu0
    %v1501 = vadd.f32 %v1110, %v1500
    %v1502 = vpop.f32.mrf.mxu0
    %1503 = vmatprep.mubr.f32.mxu0 0.0
    %v1504 = vand.u32 %v313, 4294901760
    %v1505 = vsub.f32 %v313, %v1504
    %1506 = vmatmul.mubr.f32.gmra.mxu0 %v1505
    %v1507 = vpop.f32.mrf.mxu0
    %v1508 = vadd.f32 %v1116, %v1507
    %v1509 = vpop.f32.mrf.mxu0
    %1510 = vmatprep.mubr.f32.mxu0 0.0
    %v1511 = vand.u32 %v314, 4294901760
    %v1512 = vsub.f32 %v314, %v1511
    %1513 = vmatmul.mubr.f32.gmra.mxu0 %v1512
    %v1514 = vpop.f32.mrf.mxu0
    %v1515 = vadd.f32 %v1122, %v1514
    %v1516 = vpop.f32.mrf.mxu0
    %1517 = vmatprep.mubr.f32.mxu0 0.0
    %v1518 = vand.u32 %v315, 4294901760
    %v1519 = vsub.f32 %v315, %v1518
    %1520 = vmatmul.mubr.f32.gmra.mxu0 %v1519
    %v1521 = vpop.f32.mrf.mxu0
    %v1522 = vadd.f32 %v1128, %v1521
    %v1523 = vpop.f32.mrf.mxu0
    %1524 = vmatprep.mubr.f32.mxu0 0.0
    %v1525 = vand.u32 %v316, 4294901760
    %v1526 = vsub.f32 %v316, %v1525
    %1527 = vmatmul.mubr.f32.gmra.mxu0 %v1526
    %v1528 = vpop.f32.mrf.mxu0
    %v1529 = vadd.f32 %v1134, %v1528
    %v1530 = vpop.f32.mrf.mxu0
    %1531 = vmatprep.mubr.f32.mxu0 0.0
    %v1532 = vand.u32 %v317, 4294901760
    %v1533 = vsub.f32 %v317, %v1532
    %1534 = vmatmul.mubr.f32.gmra.mxu0 %v1533
    %v1535 = vpop.f32.mrf.mxu0
    %v1536 = vadd.f32 %v1140, %v1535
    %v1537 = vpop.f32.mrf.mxu0
    %1538 = vmatprep.mubr.f32.mxu0 0.0
    %v1539 = vand.u32 %v318, 4294901760
    %v1540 = vsub.f32 %v318, %v1539
    %1541 = vmatmul.mubr.f32.gmra.mxu0 %v1540
    %v1542 = vpop.f32.mrf.mxu0
    %v1543 = vadd.f32 %v1146, %v1542
    %v1544 = vpop.f32.mrf.mxu0
    %1545 = vmatprep.mubr.f32.mxu0 0.0
    %v1546 = vand.u32 %v319, 4294901760
    %v1547 = vsub.f32 %v319, %v1546
    %1548 = vmatmul.mubr.f32.gmra.mxu0 %v1547
    %v1549 = vpop.f32.mrf.mxu0
    %v1550 = vadd.f32 %v1152, %v1549
    %v1551 = vpop.f32.mrf.mxu0
    %1552 = vmatprep.mubr.f32.mxu0 0.0
    %v1553 = vand.u32 %v320, 4294901760
    %v1554 = vsub.f32 %v320, %v1553
    %1555 = vmatmul.mubr.f32.gmra.mxu0 %v1554
    %v1556 = vpop.f32.mrf.mxu0
    %v1557 = vadd.f32 %v1158, %v1556
    %v1558 = vpop.f32.mrf.mxu0
    %1559 = vmatprep.mubr.f32.mxu0 0.0
    %v1560 = vand.u32 %v321, 4294901760
    %v1561 = vsub.f32 %v321, %v1560
    %1562 = vmatmul.mubr.f32.gmra.mxu0 %v1561
    %v1563 = vpop.f32.mrf.mxu0
    %v1564 = vadd.f32 %v1164, %v1563
    %v1565 = vpop.f32.mrf.mxu0
    %1566 = vmatprep.mubr.f32.mxu0 0.0
    %v1567 = vand.u32 %v322, 4294901760
    %v1568 = vsub.f32 %v322, %v1567
    %1569 = vmatmul.mubr.f32.gmra.mxu0 %v1568
    %v1570 = vpop.f32.mrf.mxu0
    %v1571 = vadd.f32 %v1170, %v1570
    %v1572 = vpop.f32.mrf.mxu0
    %1573 = vmatprep.mubr.f32.mxu0 0.0
    %v1574 = vand.u32 %v323, 4294901760
    %v1575 = vsub.f32 %v323, %v1574
    %1576 = vmatmul.mubr.f32.gmra.mxu0 %v1575
    %v1577 = vpop.f32.mrf.mxu0
    %v1578 = vadd.f32 %v1176, %v1577
    %v1579 = vpop.f32.mrf.mxu0
    %1580 = vmatprep.mubr.f32.mxu0 0.0
    %v1581 = vand.u32 %v324, 4294901760
    %v1582 = vsub.f32 %v324, %v1581
    %1583 = vmatmul.mubr.f32.gmra.mxu0 %v1582
    %v1584 = vpop.f32.mrf.mxu0
    %v1585 = vadd.f32 %v1182, %v1584
    %v1586 = vpop.f32.mrf.mxu0
    %1587 = vmatprep.mubr.f32.mxu0 0.0
    %v1588 = vand.u32 %v325, 4294901760
    %v1589 = vsub.f32 %v325, %v1588
    %1590 = vmatmul.mubr.f32.gmra.mxu0 %v1589
    %v1591 = vpop.f32.mrf.mxu0
    %v1592 = vadd.f32 %v1188, %v1591
    %v1593 = vpop.f32.mrf.mxu0
    %1594 = vmatprep.mubr.f32.mxu0 0.0
    %v1595 = vand.u32 %v326, 4294901760
    %v1596 = vsub.f32 %v326, %v1595
    %1597 = vmatmul.mubr.f32.gmra.mxu0 %v1596
    %v1598 = vpop.f32.mrf.mxu0
    %v1599 = vadd.f32 %v1194, %v1598
    %v1600 = vpop.f32.mrf.mxu0
    %1601 = vmatprep.mubr.f32.mxu0 0.0
    %v1602 = vand.u32 %v327, 4294901760
    %v1603 = vsub.f32 %v327, %v1602
    %1604 = vmatmul.mubr.f32.gmra.mxu0 %v1603
    %v1605 = vpop.f32.mrf.mxu0
    %v1606 = vadd.f32 %v1200, %v1605
    %v1607 = vpop.f32.mrf.mxu0
    %1608 = vmatprep.mubr.f32.mxu0 0.0
    %v1609 = vand.u32 %v328, 4294901760
    %v1610 = vsub.f32 %v328, %v1609
    %1611 = vmatmul.mubr.f32.gmra.mxu0 %v1610
    %v1612 = vpop.f32.mrf.mxu0
    %v1613 = vadd.f32 %v1206, %v1612
    %v1614 = vpop.f32.mrf.mxu0
    %1615 = vmatprep.mubr.f32.mxu0 0.0
    %v1616 = vand.u32 %v329, 4294901760
    %v1617 = vsub.f32 %v329, %v1616
    %1618 = vmatmul.mubr.f32.gmra.mxu0 %v1617
    %v1619 = vpop.f32.mrf.mxu0
    %v1620 = vadd.f32 %v1212, %v1619
    %v1621 = vpop.f32.mrf.mxu0
    %1622 = vmatprep.mubr.f32.mxu0 0.0
    %v1623 = vand.u32 %v330, 4294901760
    %v1624 = vsub.f32 %v330, %v1623
    %1625 = vmatmul.mubr.f32.gmra.mxu0 %v1624
    %v1626 = vpop.f32.mrf.mxu0
    %v1627 = vadd.f32 %v1218, %v1626
    %v1628 = vpop.f32.mrf.mxu0
    %1629 = vmatprep.mubr.f32.mxu0 0.0
    %v1630 = vand.u32 %v331, 4294901760
    %v1631 = vsub.f32 %v331, %v1630
    %1632 = vmatmul.mubr.f32.gmra.mxu0 %v1631
    %v1633 = vpop.f32.mrf.mxu0
    %v1634 = vadd.f32 %v1224, %v1633
    %v1635 = vpop.f32.mrf.mxu0
    %1636 = vmatprep.mubr.f32.mxu0 0.0
    %v1637 = vand.u32 %v332, 4294901760
    %v1638 = vsub.f32 %v332, %v1637
    %1639 = vmatmul.mubr.f32.gmra.mxu0 %v1638
    %v1640 = vpop.f32.mrf.mxu0
    %v1641 = vadd.f32 %v1230, %v1640
    %v1642 = vpop.f32.mrf.mxu0
    %1643 = vmatprep.mubr.f32.mxu0 0.0
    %v1644 = vand.u32 %v333, 4294901760
    %v1645 = vsub.f32 %v333, %v1644
    %1646 = vmatmul.mubr.f32.gmra.mxu0 %v1645
    %v1647 = vpop.f32.mrf.mxu0
    %v1648 = vadd.f32 %v1236, %v1647
    %v1649 = vpop.f32.mrf.mxu0
    %1650 = vmatprep.mubr.f32.mxu0 0.0
    %v1651 = vand.u32 %v334, 4294901760
    %v1652 = vsub.f32 %v334, %v1651
    %1653 = vmatmul.mubr.f32.gmra.mxu0 %v1652
    %v1654 = vpop.f32.mrf.mxu0
    %v1655 = vadd.f32 %v1242, %v1654
    %v1656 = vpop.f32.mrf.mxu0
    %1657 = vmatprep.mubr.f32.mxu0 0.0
    %v1658 = vand.u32 %v335, 4294901760
    %v1659 = vsub.f32 %v335, %v1658
    %1660 = vmatmul.mubr.f32.gmra.mxu0 %v1659
    %v1661 = vpop.f32.mrf.mxu0
    %v1662 = vadd.f32 %v1248, %v1661
    %v1663 = vpop.f32.mrf.mxu0
    %1664 = vmatprep.mubr.f32.mxu0 0.0
    %v1665 = vand.u32 %v336, 4294901760
    %v1666 = vsub.f32 %v336, %v1665
    %1667 = vmatmul.mubr.f32.gmra.mxu0 %v1666
    %v1668 = vpop.f32.mrf.mxu0
    %v1669 = vadd.f32 %v1254, %v1668
    %v1670 = vpop.f32.mrf.mxu0
    %1671 = vmatprep.mubr.f32.mxu0 0.0
    %v1672 = vand.u32 %v337, 4294901760
    %v1673 = vsub.f32 %v337, %v1672
    %1674 = vmatmul.mubr.f32.gmra.mxu0 %v1673
    %v1675 = vpop.f32.mrf.mxu0
    %v1676 = vadd.f32 %v1260, %v1675
    %v1677 = vpop.f32.mrf.mxu0
    %1678 = vmatprep.mubr.f32.mxu0 0.0
    %v1679 = vand.u32 %v338, 4294901760
    %v1680 = vsub.f32 %v338, %v1679
    %1681 = vmatmul.mubr.f32.gmra.mxu0 %v1680
    %v1682 = vpop.f32.mrf.mxu0
    %v1683 = vadd.f32 %v1266, %v1682
    %v1684 = vpop.f32.mrf.mxu0
    %1685 = vmatprep.mubr.f32.mxu0 0.0
    %v1686 = vand.u32 %v339, 4294901760
    %v1687 = vsub.f32 %v339, %v1686
    %1688 = vmatmul.mubr.f32.gmra.mxu0 %v1687
    %v1689 = vpop.f32.mrf.mxu0
    %v1690 = vadd.f32 %v1272, %v1689
    %v1691 = vpop.f32.mrf.mxu0
    %1692 = vmatprep.mubr.f32.mxu0 0.0
    %v1693 = vand.u32 %v340, 4294901760
    %v1694 = vsub.f32 %v340, %v1693
    %1695 = vmatmul.mubr.f32.gmra.mxu0 %v1694
    %v1696 = vpop.f32.mrf.mxu0
    %v1697 = vadd.f32 %v1278, %v1696
    %v1698 = vpop.f32.mrf.mxu0
    %1699 = vmatprep.mubr.f32.mxu0 0.0
    %v1700 = vand.u32 %v341, 4294901760
    %v1701 = vsub.f32 %v341, %v1700
    %1702 = vmatmul.mubr.f32.gmra.mxu0 %v1701
    %v1703 = vpop.f32.mrf.mxu0
    %v1704 = vadd.f32 %v1284, %v1703
    %v1705 = vpop.f32.mrf.mxu0
    %1706 = vmatprep.mubr.f32.mxu0 0.0
    %v1707 = vand.u32 %v342, 4294901760
    %v1708 = vsub.f32 %v342, %v1707
    %1709 = vmatmul.mubr.f32.gmra.mxu0 %v1708
    %v1710 = vpop.f32.mrf.mxu0
    %v1711 = vadd.f32 %v1290, %v1710
    %v1712 = vpop.f32.mrf.mxu0
    %1713 = vmatprep.mubr.f32.mxu0 0.0
    %v1714 = vand.u32 %v343, 4294901760
    %v1715 = vsub.f32 %v343, %v1714
    %1716 = vmatmul.mubr.f32.gmra.mxu0 %v1715
    %v1717 = vpop.f32.mrf.mxu0
    %v1718 = vadd.f32 %v1296, %v1717
    %v1719 = vpop.f32.mrf.mxu0
    %1720 = vmatprep.mubr.f32.mxu0 0.0
    %v1721 = vand.u32 %v344, 4294901760
    %v1722 = vsub.f32 %v344, %v1721
    %1723 = vmatmul.mubr.f32.gmra.mxu0 %v1722
    %v1724 = vpop.f32.mrf.mxu0
    %v1725 = vadd.f32 %v1302, %v1724
    %v1726 = vpop.f32.mrf.mxu0
    %1727 = vmatprep.mubr.f32.mxu0 0.0
    %v1728 = vand.u32 %v345, 4294901760
    %v1729 = vsub.f32 %v345, %v1728
    %1730 = vmatmul.mubr.f32.gmra.mxu0 %v1729
    %v1731 = vpop.f32.mrf.mxu0
    %v1732 = vadd.f32 %v1308, %v1731
    %v1733 = vpop.f32.mrf.mxu0
    %1734 = vmatprep.mubr.f32.mxu0 0.0
    %v1735 = vand.u32 %v346, 4294901760
    %v1736 = vsub.f32 %v346, %v1735
    %1737 = vmatmul.mubr.f32.gmra.mxu0 %v1736
    %v1738 = vpop.f32.mrf.mxu0
    %v1739 = vadd.f32 %v1314, %v1738
    %v1740 = vpop.f32.mrf.mxu0
    %1741 = vmatprep.mubr.f32.mxu0 0.0
    %v1742 = vand.u32 %v347, 4294901760
    %v1743 = vsub.f32 %v347, %v1742
    %1744 = vmatmul.mubr.f32.gmra.mxu0 %v1743
    %v1745 = vpop.f32.mrf.mxu0
    %v1746 = vadd.f32 %v1320, %v1745
    %v1747 = vpop.f32.mrf.mxu0
    %1748 = vmatprep.mubr.f32.mxu0 0.0
    %v1749 = vand.u32 %v348, 4294901760
    %v1750 = vsub.f32 %v348, %v1749
    %1751 = vmatmul.mubr.f32.gmra.mxu0 %v1750
    %v1752 = vpop.f32.mrf.mxu0
    %v1753 = vadd.f32 %v1326, %v1752
    %v1754 = vpop.f32.mrf.mxu0
    %1755 = vmatprep.mubr.f32.mxu0 0.0
    %v1756 = vand.u32 %v349, 4294901760
    %v1757 = vsub.f32 %v349, %v1756
    %1758 = vmatmul.mubr.f32.gmra.mxu0 %v1757
    %v1759 = vpop.f32.mrf.mxu0
    %v1760 = vadd.f32 %v1332, %v1759
    %v1761 = vpop.f32.mrf.mxu0
    %1762 = vmatprep.mubr.f32.mxu0 0.0
    %v1763 = vand.u32 %v350, 4294901760
    %v1764 = vsub.f32 %v350, %v1763
    %1765 = vmatmul.mubr.f32.gmra.mxu0 %v1764
    %v1766 = vpop.f32.mrf.mxu0
    %v1767 = vadd.f32 %v1338, %v1766
    %v1768 = vpop.f32.mrf.mxu0
    %1769 = vmatprep.mubr.f32.mxu0 0.0
    %v1770 = vand.u32 %v351, 4294901760
    %v1771 = vsub.f32 %v351, %v1770
    %1772 = vmatmul.mubr.f32.gmra.mxu0 %v1771
    %v1773 = vpop.f32.mrf.mxu0
    %v1774 = vadd.f32 %v1344, %v1773
    %v1775 = vpop.f32.mrf.mxu0
    %1776 = vmatprep.mubr.f32.mxu0 0.0
    %v1777 = vand.u32 %v352, 4294901760
    %v1778 = vsub.f32 %v352, %v1777
    %1779 = vmatmul.mubr.f32.gmra.mxu0 %v1778
    %v1780 = vpop.f32.mrf.mxu0
    %v1781 = vadd.f32 %v1350, %v1780
    %v1782 = vpop.f32.mrf.mxu0
    %1783 = vmatprep.mubr.f32.mxu0 0.0
    %v1784 = vand.u32 %v353, 4294901760
    %v1785 = vsub.f32 %v353, %v1784
    %1786 = vmatmul.mubr.f32.gmra.mxu0 %v1785
    %v1787 = vpop.f32.mrf.mxu0
    %v1788 = vadd.f32 %v1356, %v1787
    %v1789 = vpop.f32.mrf.mxu0
    %1790 = vmatprep.mubr.f32.mxu0 0.0
    %v1791 = vand.u32 %v354, 4294901760
    %v1792 = vsub.f32 %v354, %v1791
    %1793 = vmatmul.mubr.f32.gmra.mxu0 %v1792
    %v1794 = vpop.f32.mrf.mxu0
    %v1795 = vadd.f32 %v1362, %v1794
    %v1796 = vpop.f32.mrf.mxu0
    %1797 = vdwg.mxu0
    %1798 = vmatprep.subr.mxu0 0.0
    %v1799 = vand.u32 %v370, 4294901760
    %1800 = vmatpush1.msra.mxu0 %v1799
    %1801 = vmatprep.subr.mxu0 0.0
    %v1802 = vand.u32 %v369, 4294901760
    %1803 = vmatpush1.msra.mxu0 %v1802
    %1804 = vmatprep.subr.mxu0 0.0
    %v1805 = vand.u32 %v368, 4294901760
    %1806 = vmatpush1.msra.mxu0 %v1805
    %1807 = vmatprep.subr.mxu0 0.0
    %v1808 = vand.u32 %v367, 4294901760
    %1809 = vmatpush1.msra.mxu0 %v1808
    %1810 = vmatprep.subr.mxu0 0.0
    %v1811 = vand.u32 %v366, 4294901760
    %1812 = vmatpush1.msra.mxu0 %v1811
    %1813 = vmatprep.subr.mxu0 0.0
    %v1814 = vand.u32 %v365, 4294901760
    %1815 = vmatpush1.msra.mxu0 %v1814
    %1816 = vmatprep.subr.mxu0 0.0
    %v1817 = vand.u32 %v364, 4294901760
    %1818 = vmatpush1.msra.mxu0 %v1817
    %1819 = vmatprep.subr.mxu0 0.0
    %v1820 = vand.u32 %v363, 4294901760
    %1821 = vmatpush1.msra.mxu0 %v1820
    %1822 = vmatprep.subr.mxu0 0.0
    %v1823 = vand.u32 %v362, 4294901760
    %1824 = vmatpush1.msra.mxu0 %v1823
    %1825 = vmatprep.subr.mxu0 0.0
    %v1826 = vand.u32 %v361, 4294901760
    %1827 = vmatpush1.msra.mxu0 %v1826
    %1828 = vmatprep.subr.mxu0 0.0
    %v1829 = vand.u32 %v360, 4294901760
    %1830 = vmatpush1.msra.mxu0 %v1829
    %1831 = vmatprep.subr.mxu0 0.0
    %v1832 = vand.u32 %v359, 4294901760
    %1833 = vmatpush1.msra.mxu0 %v1832
    %1834 = vmatprep.subr.mxu0 0.0
    %v1835 = vand.u32 %v358, 4294901760
    %1836 = vmatpush1.msra.mxu0 %v1835
    %1837 = vmatprep.subr.mxu0 0.0
    %v1838 = vand.u32 %v357, 4294901760
    %1839 = vmatpush1.msra.mxu0 %v1838
    %1840 = vmatprep.subr.mxu0 0.0
    %v1841 = vand.u32 %v356, 4294901760
    %1842 = vmatpush1.msra.mxu0 %v1841
    %1843 = vmatprep.subr.mxu0 0.0
    %v1844 = vand.u32 %v355, 4294901760
    %1845 = vmatpush1.msra.mxu0 %v1844
    %1846 = vmatprep.subr.mxu0 0.0
    %1847 = vmatpush2.msra.mxu0 0.0
    %1848 = vmatprep.subr.mxu0 0.0
    %1849 = vmatpush2.msra.mxu0 0.0
    %1850 = vmatprep.subr.mxu0 0.0
    %1851 = vmatpush2.msra.mxu0 0.0
    %1852 = vmatprep.subr.mxu0 0.0
    %1853 = vmatpush2.msra.mxu0 0.0
    %1854 = vmatprep.subr.mxu0 0.0
    %1855 = vmatpush2.msra.mxu0 0.0
    %1856 = vmatprep.subr.mxu0 0.0
    %1857 = vmatpush2.msra.mxu0 0.0
    %1858 = vmatprep.subr.mxu0 0.0
    %1859 = vmatpush2.msra.mxu0 0.0
    %1860 = vmatprep.subr.mxu0 0.0
    %1861 = vmatpush2.msra.mxu0 0.0
    %1862 = vmatprep.subr.mxu0 0.0
    %1863 = vmatpush2.msra.mxu0 0.0
    %1864 = vmatprep.subr.mxu0 0.0
    %1865 = vmatpush2.msra.mxu0 0.0
    %1866 = vmatprep.subr.mxu0 0.0
    %1867 = vmatpush2.msra.mxu0 0.0
    %1868 = vmatprep.subr.mxu0 0.0
    %1869 = vmatpush2.msra.mxu0 0.0
    %1870 = vmatprep.subr.mxu0 0.0
    %1871 = vmatpush2.msra.mxu0 0.0
    %1872 = vmatprep.subr.mxu0 0.0
    %1873 = vmatpush2.msra.mxu0 0.0
    %1874 = vmatprep.subr.mxu0 0.0
    %1875 = vmatpush2.msra.mxu0 0.0
    %1876 = vmatprep.subr.mxu0 0.0
    %1877 = vmatpush2.msra.mxu0 0.0
    %1878 = vmatprep.mubr.f32.mxu0 0.0
    %v1879 = vand.u32 %v307, 4294901760
    %v1880 = vsub.f32 %v307, %v1879
    %v1881 = vand.u32 %v1880, 4294901760
    %1882 = vmatmul.mubr.f32.gmra.mxu0 %v1881
    %v1883 = vpop.f32.mrf.mxu0
    %v1884 = vadd.f32 %v1466, %v1883
    %v1885 = vpop.f32.mrf.mxu0
    %1886 = vmatprep.mubr.f32.mxu0 0.0
    %v1887 = vand.u32 %v308, 4294901760
    %v1888 = vsub.f32 %v308, %v1887
    %v1889 = vand.u32 %v1888, 4294901760
    %1890 = vmatmul.mubr.f32.gmra.mxu0 %v1889
    %v1891 = vpop.f32.mrf.mxu0
    %v1892 = vadd.f32 %v1473, %v1891
    %v1893 = vpop.f32.mrf.mxu0
    %1894 = vmatprep.mubr.f32.mxu0 0.0
    %v1895 = vand.u32 %v309, 4294901760
    %v1896 = vsub.f32 %v309, %v1895
    %v1897 = vand.u32 %v1896, 4294901760
    %1898 = vmatmul.mubr.f32.gmra.mxu0 %v1897
    %v1899 = vpop.f32.mrf.mxu0
    %v1900 = vadd.f32 %v1480, %v1899
    %v1901 = vpop.f32.mrf.mxu0
    %1902 = vmatprep.mubr.f32.mxu0 0.0
    %v1903 = vand.u32 %v310, 4294901760
    %v1904 = vsub.f32 %v310, %v1903
    %v1905 = vand.u32 %v1904, 4294901760
    %1906 = vmatmul.mubr.f32.gmra.mxu0 %v1905
    %v1907 = vpop.f32.mrf.mxu0
    %v1908 = vadd.f32 %v1487, %v1907
    %v1909 = vpop.f32.mrf.mxu0
    %1910 = vmatprep.mubr.f32.mxu0 0.0
    %v1911 = vand.u32 %v311, 4294901760
    %v1912 = vsub.f32 %v311, %v1911
    %v1913 = vand.u32 %v1912, 4294901760
    %1914 = vmatmul.mubr.f32.gmra.mxu0 %v1913
    %v1915 = vpop.f32.mrf.mxu0
    %v1916 = vadd.f32 %v1494, %v1915
    %v1917 = vpop.f32.mrf.mxu0
    %1918 = vmatprep.mubr.f32.mxu0 0.0
    %v1919 = vand.u32 %v312, 4294901760
    %v1920 = vsub.f32 %v312, %v1919
    %v1921 = vand.u32 %v1920, 4294901760
    %1922 = vmatmul.mubr.f32.gmra.mxu0 %v1921
    %v1923 = vpop.f32.mrf.mxu0
    %v1924 = vadd.f32 %v1501, %v1923
    %v1925 = vpop.f32.mrf.mxu0
    %1926 = vmatprep.mubr.f32.mxu0 0.0
    %v1927 = vand.u32 %v313, 4294901760
    %v1928 = vsub.f32 %v313, %v1927
    %v1929 = vand.u32 %v1928, 4294901760
    %1930 = vmatmul.mubr.f32.gmra.mxu0 %v1929
    %v1931 = vpop.f32.mrf.mxu0
    %v1932 = vadd.f32 %v1508, %v1931
    %v1933 = vpop.f32.mrf.mxu0
    %1934 = vmatprep.mubr.f32.mxu0 0.0
    %v1935 = vand.u32 %v314, 4294901760
    %v1936 = vsub.f32 %v314, %v1935
    %v1937 = vand.u32 %v1936, 4294901760
    %1938 = vmatmul.mubr.f32.gmra.mxu0 %v1937
    %v1939 = vpop.f32.mrf.mxu0
    %v1940 = vadd.f32 %v1515, %v1939
    %v1941 = vpop.f32.mrf.mxu0
    %1942 = vmatprep.mubr.f32.mxu0 0.0
    %v1943 = vand.u32 %v315, 4294901760
    %v1944 = vsub.f32 %v315, %v1943
    %v1945 = vand.u32 %v1944, 4294901760
    %1946 = vmatmul.mubr.f32.gmra.mxu0 %v1945
    %v1947 = vpop.f32.mrf.mxu0
    %v1948 = vadd.f32 %v1522, %v1947
    %v1949 = vpop.f32.mrf.mxu0
    %1950 = vmatprep.mubr.f32.mxu0 0.0
    %v1951 = vand.u32 %v316, 4294901760
    %v1952 = vsub.f32 %v316, %v1951
    %v1953 = vand.u32 %v1952, 4294901760
    %1954 = vmatmul.mubr.f32.gmra.mxu0 %v1953
    %v1955 = vpop.f32.mrf.mxu0
    %v1956 = vadd.f32 %v1529, %v1955
    %v1957 = vpop.f32.mrf.mxu0
    %1958 = vmatprep.mubr.f32.mxu0 0.0
    %v1959 = vand.u32 %v317, 4294901760
    %v1960 = vsub.f32 %v317, %v1959
    %v1961 = vand.u32 %v1960, 4294901760
    %1962 = vmatmul.mubr.f32.gmra.mxu0 %v1961
    %v1963 = vpop.f32.mrf.mxu0
    %v1964 = vadd.f32 %v1536, %v1963
    %v1965 = vpop.f32.mrf.mxu0
    %1966 = vmatprep.mubr.f32.mxu0 0.0
    %v1967 = vand.u32 %v318, 4294901760
    %v1968 = vsub.f32 %v318, %v1967
    %v1969 = vand.u32 %v1968, 4294901760
    %1970 = vmatmul.mubr.f32.gmra.mxu0 %v1969
    %v1971 = vpop.f32.mrf.mxu0
    %v1972 = vadd.f32 %v1543, %v1971
    %v1973 = vpop.f32.mrf.mxu0
    %1974 = vmatprep.mubr.f32.mxu0 0.0
    %v1975 = vand.u32 %v319, 4294901760
    %v1976 = vsub.f32 %v319, %v1975
    %v1977 = vand.u32 %v1976, 4294901760
    %1978 = vmatmul.mubr.f32.gmra.mxu0 %v1977
    %v1979 = vpop.f32.mrf.mxu0
    %v1980 = vadd.f32 %v1550, %v1979
    %v1981 = vpop.f32.mrf.mxu0
    %1982 = vmatprep.mubr.f32.mxu0 0.0
    %v1983 = vand.u32 %v320, 4294901760
    %v1984 = vsub.f32 %v320, %v1983
    %v1985 = vand.u32 %v1984, 4294901760
    %1986 = vmatmul.mubr.f32.gmra.mxu0 %v1985
    %v1987 = vpop.f32.mrf.mxu0
    %v1988 = vadd.f32 %v1557, %v1987
    %v1989 = vpop.f32.mrf.mxu0
    %1990 = vmatprep.mubr.f32.mxu0 0.0
    %v1991 = vand.u32 %v321, 4294901760
    %v1992 = vsub.f32 %v321, %v1991
    %v1993 = vand.u32 %v1992, 4294901760
    %1994 = vmatmul.mubr.f32.gmra.mxu0 %v1993
    %v1995 = vpop.f32.mrf.mxu0
    %v1996 = vadd.f32 %v1564, %v1995
    %v1997 = vpop.f32.mrf.mxu0
    %1998 = vmatprep.mubr.f32.mxu0 0.0
    %v1999 = vand.u32 %v322, 4294901760
    %v2000 = vsub.f32 %v322, %v1999
    %v2001 = vand.u32 %v2000, 4294901760
    %2002 = vmatmul.mubr.f32.gmra.mxu0 %v2001
    %v2003 = vpop.f32.mrf.mxu0
    %v2004 = vadd.f32 %v1571, %v2003
    %v2005 = vpop.f32.mrf.mxu0
    %2006 = vmatprep.mubr.f32.mxu0 0.0
    %v2007 = vand.u32 %v323, 4294901760
    %v2008 = vsub.f32 %v323, %v2007
    %v2009 = vand.u32 %v2008, 4294901760
    %2010 = vmatmul.mubr.f32.gmra.mxu0 %v2009
    %v2011 = vpop.f32.mrf.mxu0
    %v2012 = vadd.f32 %v1578, %v2011
    %v2013 = vpop.f32.mrf.mxu0
    %2014 = vmatprep.mubr.f32.mxu0 0.0
    %v2015 = vand.u32 %v324, 4294901760
    %v2016 = vsub.f32 %v324, %v2015
    %v2017 = vand.u32 %v2016, 4294901760
    %2018 = vmatmul.mubr.f32.gmra.mxu0 %v2017
    %v2019 = vpop.f32.mrf.mxu0
    %v2020 = vadd.f32 %v1585, %v2019
    %v2021 = vpop.f32.mrf.mxu0
    %2022 = vmatprep.mubr.f32.mxu0 0.0
    %v2023 = vand.u32 %v325, 4294901760
    %v2024 = vsub.f32 %v325, %v2023
    %v2025 = vand.u32 %v2024, 4294901760
    %2026 = vmatmul.mubr.f32.gmra.mxu0 %v2025
    %v2027 = vpop.f32.mrf.mxu0
    %v2028 = vadd.f32 %v1592, %v2027
    %v2029 = vpop.f32.mrf.mxu0
    %2030 = vmatprep.mubr.f32.mxu0 0.0
    %v2031 = vand.u32 %v326, 4294901760
    %v2032 = vsub.f32 %v326, %v2031
    %v2033 = vand.u32 %v2032, 4294901760
    %2034 = vmatmul.mubr.f32.gmra.mxu0 %v2033
    %v2035 = vpop.f32.mrf.mxu0
    %v2036 = vadd.f32 %v1599, %v2035
    %v2037 = vpop.f32.mrf.mxu0
    %2038 = vmatprep.mubr.f32.mxu0 0.0
    %v2039 = vand.u32 %v327, 4294901760
    %v2040 = vsub.f32 %v327, %v2039
    %v2041 = vand.u32 %v2040, 4294901760
    %2042 = vmatmul.mubr.f32.gmra.mxu0 %v2041
    %v2043 = vpop.f32.mrf.mxu0
    %v2044 = vadd.f32 %v1606, %v2043
    %v2045 = vpop.f32.mrf.mxu0
    %2046 = vmatprep.mubr.f32.mxu0 0.0
    %v2047 = vand.u32 %v328, 4294901760
    %v2048 = vsub.f32 %v328, %v2047
    %v2049 = vand.u32 %v2048, 4294901760
    %2050 = vmatmul.mubr.f32.gmra.mxu0 %v2049
    %v2051 = vpop.f32.mrf.mxu0
    %v2052 = vadd.f32 %v1613, %v2051
    %v2053 = vpop.f32.mrf.mxu0
    %2054 = vmatprep.mubr.f32.mxu0 0.0
    %v2055 = vand.u32 %v329, 4294901760
    %v2056 = vsub.f32 %v329, %v2055
    %v2057 = vand.u32 %v2056, 4294901760
    %2058 = vmatmul.mubr.f32.gmra.mxu0 %v2057
    %v2059 = vpop.f32.mrf.mxu0
    %v2060 = vadd.f32 %v1620, %v2059
    %v2061 = vpop.f32.mrf.mxu0
    %2062 = vmatprep.mubr.f32.mxu0 0.0
    %v2063 = vand.u32 %v330, 4294901760
    %v2064 = vsub.f32 %v330, %v2063
    %v2065 = vand.u32 %v2064, 4294901760
    %2066 = vmatmul.mubr.f32.gmra.mxu0 %v2065
    %v2067 = vpop.f32.mrf.mxu0
    %v2068 = vadd.f32 %v1627, %v2067
    %v2069 = vpop.f32.mrf.mxu0
    %2070 = vmatprep.mubr.f32.mxu0 0.0
    %v2071 = vand.u32 %v331, 4294901760
    %v2072 = vsub.f32 %v331, %v2071
    %v2073 = vand.u32 %v2072, 4294901760
    %2074 = vmatmul.mubr.f32.gmra.mxu0 %v2073
    %v2075 = vpop.f32.mrf.mxu0
    %v2076 = vadd.f32 %v1634, %v2075
    %v2077 = vpop.f32.mrf.mxu0
    %2078 = vmatprep.mubr.f32.mxu0 0.0
    %v2079 = vand.u32 %v332, 4294901760
    %v2080 = vsub.f32 %v332, %v2079
    %v2081 = vand.u32 %v2080, 4294901760
    %2082 = vmatmul.mubr.f32.gmra.mxu0 %v2081
    %v2083 = vpop.f32.mrf.mxu0
    %v2084 = vadd.f32 %v1641, %v2083
    %v2085 = vpop.f32.mrf.mxu0
    %2086 = vmatprep.mubr.f32.mxu0 0.0
    %v2087 = vand.u32 %v333, 4294901760
    %v2088 = vsub.f32 %v333, %v2087
    %v2089 = vand.u32 %v2088, 4294901760
    %2090 = vmatmul.mubr.f32.gmra.mxu0 %v2089
    %v2091 = vpop.f32.mrf.mxu0
    %v2092 = vadd.f32 %v1648, %v2091
    %v2093 = vpop.f32.mrf.mxu0
    %2094 = vmatprep.mubr.f32.mxu0 0.0
    %v2095 = vand.u32 %v334, 4294901760
    %v2096 = vsub.f32 %v334, %v2095
    %v2097 = vand.u32 %v2096, 4294901760
    %2098 = vmatmul.mubr.f32.gmra.mxu0 %v2097
    %v2099 = vpop.f32.mrf.mxu0
    %v2100 = vadd.f32 %v1655, %v2099
    %v2101 = vpop.f32.mrf.mxu0
    %2102 = vmatprep.mubr.f32.mxu0 0.0
    %v2103 = vand.u32 %v335, 4294901760
    %v2104 = vsub.f32 %v335, %v2103
    %v2105 = vand.u32 %v2104, 4294901760
    %2106 = vmatmul.mubr.f32.gmra.mxu0 %v2105
    %v2107 = vpop.f32.mrf.mxu0
    %v2108 = vadd.f32 %v1662, %v2107
    %v2109 = vpop.f32.mrf.mxu0
    %2110 = vmatprep.mubr.f32.mxu0 0.0
    %v2111 = vand.u32 %v336, 4294901760
    %v2112 = vsub.f32 %v336, %v2111
    %v2113 = vand.u32 %v2112, 4294901760
    %2114 = vmatmul.mubr.f32.gmra.mxu0 %v2113
    %v2115 = vpop.f32.mrf.mxu0
    %v2116 = vadd.f32 %v1669, %v2115
    %v2117 = vpop.f32.mrf.mxu0
    %2118 = vmatprep.mubr.f32.mxu0 0.0
    %v2119 = vand.u32 %v337, 4294901760
    %v2120 = vsub.f32 %v337, %v2119
    %v2121 = vand.u32 %v2120, 4294901760
    %2122 = vmatmul.mubr.f32.gmra.mxu0 %v2121
    %v2123 = vpop.f32.mrf.mxu0
    %v2124 = vadd.f32 %v1676, %v2123
    %v2125 = vpop.f32.mrf.mxu0
    %2126 = vmatprep.mubr.f32.mxu0 0.0
    %v2127 = vand.u32 %v338, 4294901760
    %v2128 = vsub.f32 %v338, %v2127
    %v2129 = vand.u32 %v2128, 4294901760
    %2130 = vmatmul.mubr.f32.gmra.mxu0 %v2129
    %v2131 = vpop.f32.mrf.mxu0
    %v2132 = vadd.f32 %v1683, %v2131
    %v2133 = vpop.f32.mrf.mxu0
    %2134 = vmatprep.mubr.f32.mxu0 0.0
    %v2135 = vand.u32 %v339, 4294901760
    %v2136 = vsub.f32 %v339, %v2135
    %v2137 = vand.u32 %v2136, 4294901760
    %2138 = vmatmul.mubr.f32.gmra.mxu0 %v2137
    %v2139 = vpop.f32.mrf.mxu0
    %v2140 = vadd.f32 %v1690, %v2139
    %v2141 = vpop.f32.mrf.mxu0
    %2142 = vmatprep.mubr.f32.mxu0 0.0
    %v2143 = vand.u32 %v340, 4294901760
    %v2144 = vsub.f32 %v340, %v2143
    %v2145 = vand.u32 %v2144, 4294901760
    %2146 = vmatmul.mubr.f32.gmra.mxu0 %v2145
    %v2147 = vpop.f32.mrf.mxu0
    %v2148 = vadd.f32 %v1697, %v2147
    %v2149 = vpop.f32.mrf.mxu0
    %2150 = vmatprep.mubr.f32.mxu0 0.0
    %v2151 = vand.u32 %v341, 4294901760
    %v2152 = vsub.f32 %v341, %v2151
    %v2153 = vand.u32 %v2152, 4294901760
    %2154 = vmatmul.mubr.f32.gmra.mxu0 %v2153
    %v2155 = vpop.f32.mrf.mxu0
    %v2156 = vadd.f32 %v1704, %v2155
    %v2157 = vpop.f32.mrf.mxu0
    %2158 = vmatprep.mubr.f32.mxu0 0.0
    %v2159 = vand.u32 %v342, 4294901760
    %v2160 = vsub.f32 %v342, %v2159
    %v2161 = vand.u32 %v2160, 4294901760
    %2162 = vmatmul.mubr.f32.gmra.mxu0 %v2161
    %v2163 = vpop.f32.mrf.mxu0
    %v2164 = vadd.f32 %v1711, %v2163
    %v2165 = vpop.f32.mrf.mxu0
    %2166 = vmatprep.mubr.f32.mxu0 0.0
    %v2167 = vand.u32 %v343, 4294901760
    %v2168 = vsub.f32 %v343, %v2167
    %v2169 = vand.u32 %v2168, 4294901760
    %2170 = vmatmul.mubr.f32.gmra.mxu0 %v2169
    %v2171 = vpop.f32.mrf.mxu0
    %v2172 = vadd.f32 %v1718, %v2171
    %v2173 = vpop.f32.mrf.mxu0
    %2174 = vmatprep.mubr.f32.mxu0 0.0
    %v2175 = vand.u32 %v344, 4294901760
    %v2176 = vsub.f32 %v344, %v2175
    %v2177 = vand.u32 %v2176, 4294901760
    %2178 = vmatmul.mubr.f32.gmra.mxu0 %v2177
    %v2179 = vpop.f32.mrf.mxu0
    %v2180 = vadd.f32 %v1725, %v2179
    %v2181 = vpop.f32.mrf.mxu0
    %2182 = vmatprep.mubr.f32.mxu0 0.0
    %v2183 = vand.u32 %v345, 4294901760
    %v2184 = vsub.f32 %v345, %v2183
    %v2185 = vand.u32 %v2184, 4294901760
    %2186 = vmatmul.mubr.f32.gmra.mxu0 %v2185
    %v2187 = vpop.f32.mrf.mxu0
    %v2188 = vadd.f32 %v1732, %v2187
    %v2189 = vpop.f32.mrf.mxu0
    %2190 = vmatprep.mubr.f32.mxu0 0.0
    %v2191 = vand.u32 %v346, 4294901760
    %v2192 = vsub.f32 %v346, %v2191
    %v2193 = vand.u32 %v2192, 4294901760
    %2194 = vmatmul.mubr.f32.gmra.mxu0 %v2193
    %v2195 = vpop.f32.mrf.mxu0
    %v2196 = vadd.f32 %v1739, %v2195
    %v2197 = vpop.f32.mrf.mxu0
    %2198 = vmatprep.mubr.f32.mxu0 0.0
    %v2199 = vand.u32 %v347, 4294901760
    %v2200 = vsub.f32 %v347, %v2199
    %v2201 = vand.u32 %v2200, 4294901760
    %2202 = vmatmul.mubr.f32.gmra.mxu0 %v2201
    %v2203 = vpop.f32.mrf.mxu0
    %v2204 = vadd.f32 %v1746, %v2203
    %v2205 = vpop.f32.mrf.mxu0
    %2206 = vmatprep.mubr.f32.mxu0 0.0
    %v2207 = vand.u32 %v348, 4294901760
    %v2208 = vsub.f32 %v348, %v2207
    %v2209 = vand.u32 %v2208, 4294901760
    %2210 = vmatmul.mubr.f32.gmra.mxu0 %v2209
    %v2211 = vpop.f32.mrf.mxu0
    %v2212 = vadd.f32 %v1753, %v2211
    %v2213 = vpop.f32.mrf.mxu0
    %2214 = vmatprep.mubr.f32.mxu0 0.0
    %v2215 = vand.u32 %v349, 4294901760
    %v2216 = vsub.f32 %v349, %v2215
    %v2217 = vand.u32 %v2216, 4294901760
    %2218 = vmatmul.mubr.f32.gmra.mxu0 %v2217
    %v2219 = vpop.f32.mrf.mxu0
    %v2220 = vadd.f32 %v1760, %v2219
    %v2221 = vpop.f32.mrf.mxu0
    %2222 = vmatprep.mubr.f32.mxu0 0.0
    %v2223 = vand.u32 %v350, 4294901760
    %v2224 = vsub.f32 %v350, %v2223
    %v2225 = vand.u32 %v2224, 4294901760
    %2226 = vmatmul.mubr.f32.gmra.mxu0 %v2225
    %v2227 = vpop.f32.mrf.mxu0
    %v2228 = vadd.f32 %v1767, %v2227
    %v2229 = vpop.f32.mrf.mxu0
    %2230 = vmatprep.mubr.f32.mxu0 0.0
    %v2231 = vand.u32 %v351, 4294901760
    %v2232 = vsub.f32 %v351, %v2231
    %v2233 = vand.u32 %v2232, 4294901760
    %2234 = vmatmul.mubr.f32.gmra.mxu0 %v2233
    %v2235 = vpop.f32.mrf.mxu0
    %v2236 = vadd.f32 %v1774, %v2235
    %v2237 = vpop.f32.mrf.mxu0
    %2238 = vmatprep.mubr.f32.mxu0 0.0
    %v2239 = vand.u32 %v352, 4294901760
    %v2240 = vsub.f32 %v352, %v2239
    %v2241 = vand.u32 %v2240, 4294901760
    %2242 = vmatmul.mubr.f32.gmra.mxu0 %v2241
    %v2243 = vpop.f32.mrf.mxu0
    %v2244 = vadd.f32 %v1781, %v2243
    %v2245 = vpop.f32.mrf.mxu0
    %2246 = vmatprep.mubr.f32.mxu0 0.0
    %v2247 = vand.u32 %v353, 4294901760
    %v2248 = vsub.f32 %v353, %v2247
    %v2249 = vand.u32 %v2248, 4294901760
    %2250 = vmatmul.mubr.f32.gmra.mxu0 %v2249
    %v2251 = vpop.f32.mrf.mxu0
    %v2252 = vadd.f32 %v1788, %v2251
    %v2253 = vpop.f32.mrf.mxu0
    %2254 = vmatprep.mubr.f32.mxu0 0.0
    %v2255 = vand.u32 %v354, 4294901760
    %v2256 = vsub.f32 %v354, %v2255
    %v2257 = vand.u32 %v2256, 4294901760
    %2258 = vmatmul.mubr.f32.gmra.mxu0 %v2257
    %v2259 = vpop.f32.mrf.mxu0
    %v2260 = vadd.f32 %v1795, %v2259
    %v2261 = vpop.f32.mrf.mxu0
    %2262 = vdwg.mxu0
    %2263 = vmatprep.subr.mxu0 0.0
    %v2264 = vand.u32 %v370, 4294901760
    %v2265 = vsub.f32 %v370, %v2264
    %v2266 = vand.u32 %v2265, 4294901760
    %2267 = vmatpush1.msra.mxu0 %v2266
    %2268 = vmatprep.subr.mxu0 0.0
    %v2269 = vand.u32 %v369, 4294901760
    %v2270 = vsub.f32 %v369, %v2269
    %v2271 = vand.u32 %v2270, 4294901760
    %2272 = vmatpush1.msra.mxu0 %v2271
    %2273 = vmatprep.subr.mxu0 0.0
    %v2274 = vand.u32 %v368, 4294901760
    %v2275 = vsub.f32 %v368, %v2274
    %v2276 = vand.u32 %v2275, 4294901760
    %2277 = vmatpush1.msra.mxu0 %v2276
    %2278 = vmatprep.subr.mxu0 0.0
    %v2279 = vand.u32 %v367, 4294901760
    %v2280 = vsub.f32 %v367, %v2279
    %v2281 = vand.u32 %v2280, 4294901760
    %2282 = vmatpush1.msra.mxu0 %v2281
    %2283 = vmatprep.subr.mxu0 0.0
    %v2284 = vand.u32 %v366, 4294901760
    %v2285 = vsub.f32 %v366, %v2284
    %v2286 = vand.u32 %v2285, 4294901760
    %2287 = vmatpush1.msra.mxu0 %v2286
    %2288 = vmatprep.subr.mxu0 0.0
    %v2289 = vand.u32 %v365, 4294901760
    %v2290 = vsub.f32 %v365, %v2289
    %v2291 = vand.u32 %v2290, 4294901760
    %2292 = vmatpush1.msra.mxu0 %v2291
    %2293 = vmatprep.subr.mxu0 0.0
    %v2294 = vand.u32 %v364, 4294901760
    %v2295 = vsub.f32 %v364, %v2294
    %v2296 = vand.u32 %v2295, 4294901760
    %2297 = vmatpush1.msra.mxu0 %v2296
    %2298 = vmatprep.subr.mxu0 0.0
    %v2299 = vand.u32 %v363, 4294901760
    %v2300 = vsub.f32 %v363, %v2299
    %v2301 = vand.u32 %v2300, 4294901760
    %2302 = vmatpush1.msra.mxu0 %v2301
    %2303 = vmatprep.subr.mxu0 0.0
    %v2304 = vand.u32 %v362, 4294901760
    %v2305 = vsub.f32 %v362, %v2304
    %v2306 = vand.u32 %v2305, 4294901760
    %2307 = vmatpush1.msra.mxu0 %v2306
    %2308 = vmatprep.subr.mxu0 0.0
    %v2309 = vand.u32 %v361, 4294901760
    %v2310 = vsub.f32 %v361, %v2309
    %v2311 = vand.u32 %v2310, 4294901760
    %2312 = vmatpush1.msra.mxu0 %v2311
    %2313 = vmatprep.subr.mxu0 0.0
    %v2314 = vand.u32 %v360, 4294901760
    %v2315 = vsub.f32 %v360, %v2314
    %v2316 = vand.u32 %v2315, 4294901760
    %2317 = vmatpush1.msra.mxu0 %v2316
    %2318 = vmatprep.subr.mxu0 0.0
    %v2319 = vand.u32 %v359, 4294901760
    %v2320 = vsub.f32 %v359, %v2319
    %v2321 = vand.u32 %v2320, 4294901760
    %2322 = vmatpush1.msra.mxu0 %v2321
    %2323 = vmatprep.subr.mxu0 0.0
    %v2324 = vand.u32 %v358, 4294901760
    %v2325 = vsub.f32 %v358, %v2324
    %v2326 = vand.u32 %v2325, 4294901760
    %2327 = vmatpush1.msra.mxu0 %v2326
    %2328 = vmatprep.subr.mxu0 0.0
    %v2329 = vand.u32 %v357, 4294901760
    %v2330 = vsub.f32 %v357, %v2329
    %v2331 = vand.u32 %v2330, 4294901760
    %2332 = vmatpush1.msra.mxu0 %v2331
    %2333 = vmatprep.subr.mxu0 0.0
    %v2334 = vand.u32 %v356, 4294901760
    %v2335 = vsub.f32 %v356, %v2334
    %v2336 = vand.u32 %v2335, 4294901760
    %2337 = vmatpush1.msra.mxu0 %v2336
    %2338 = vmatprep.subr.mxu0 0.0
    %v2339 = vand.u32 %v355, 4294901760
    %v2340 = vsub.f32 %v355, %v2339
    %v2341 = vand.u32 %v2340, 4294901760
    %2342 = vmatpush1.msra.mxu0 %v2341
    %2343 = vmatprep.subr.mxu0 0.0
    %2344 = vmatpush2.msra.mxu0 0.0
    %2345 = vmatprep.subr.mxu0 0.0
    %2346 = vmatpush2.msra.mxu0 0.0
    %2347 = vmatprep.subr.mxu0 0.0
    %2348 = vmatpush2.msra.mxu0 0.0
    %2349 = vmatprep.subr.mxu0 0.0
    %2350 = vmatpush2.msra.mxu0 0.0
    %2351 = vmatprep.subr.mxu0 0.0
    %2352 = vmatpush2.msra.mxu0 0.0
    %2353 = vmatprep.subr.mxu0 0.0
    %2354 = vmatpush2.msra.mxu0 0.0
    %2355 = vmatprep.subr.mxu0 0.0
    %2356 = vmatpush2.msra.mxu0 0.0
    %2357 = vmatprep.subr.mxu0 0.0
    %2358 = vmatpush2.msra.mxu0 0.0
    %2359 = vmatprep.subr.mxu0 0.0
    %2360 = vmatpush2.msra.mxu0 0.0
    %2361 = vmatprep.subr.mxu0 0.0
    %2362 = vmatpush2.msra.mxu0 0.0
    %2363 = vmatprep.subr.mxu0 0.0
    %2364 = vmatpush2.msra.mxu0 0.0
    %2365 = vmatprep.subr.mxu0 0.0
    %2366 = vmatpush2.msra.mxu0 0.0
    %2367 = vmatprep.subr.mxu0 0.0
    %2368 = vmatpush2.msra.mxu0 0.0
    %2369 = vmatprep.subr.mxu0 0.0
    %2370 = vmatpush2.msra.mxu0 0.0
    %2371 = vmatprep.subr.mxu0 0.0
    %2372 = vmatpush2.msra.mxu0 0.0
    %2373 = vmatprep.subr.mxu0 0.0
    %2374 = vmatpush2.msra.mxu0 0.0
    %2375 = vmatprep.mubr.f32.mxu0 0.0
    %v2376 = vand.u32 %v307, 4294901760
    %2377 = vmatmul.mubr.f32.gmra.mxu0 %v2376
    %v2378 = vpop.f32.mrf.mxu0
    %v2379 = vadd.f32 %v1884, %v2378
    %v2380 = vpop.f32.mrf.mxu0
    %2381 = vmatprep.mubr.f32.mxu0 0.0
    %v2382 = vand.u32 %v308, 4294901760
    %2383 = vmatmul.mubr.f32.gmra.mxu0 %v2382
    %v2384 = vpop.f32.mrf.mxu0
    %v2385 = vadd.f32 %v1892, %v2384
    %v2386 = vpop.f32.mrf.mxu0
    %2387 = vmatprep.mubr.f32.mxu0 0.0
    %v2388 = vand.u32 %v309, 4294901760
    %2389 = vmatmul.mubr.f32.gmra.mxu0 %v2388
    %v2390 = vpop.f32.mrf.mxu0
    %v2391 = vadd.f32 %v1900, %v2390
    %v2392 = vpop.f32.mrf.mxu0
    %2393 = vmatprep.mubr.f32.mxu0 0.0
    %v2394 = vand.u32 %v310, 4294901760
    %2395 = vmatmul.mubr.f32.gmra.mxu0 %v2394
    %v2396 = vpop.f32.mrf.mxu0
    %v2397 = vadd.f32 %v1908, %v2396
    %v2398 = vpop.f32.mrf.mxu0
    %2399 = vmatprep.mubr.f32.mxu0 0.0
    %v2400 = vand.u32 %v311, 4294901760
    %2401 = vmatmul.mubr.f32.gmra.mxu0 %v2400
    %v2402 = vpop.f32.mrf.mxu0
    %v2403 = vadd.f32 %v1916, %v2402
    %v2404 = vpop.f32.mrf.mxu0
    %2405 = vmatprep.mubr.f32.mxu0 0.0
    %v2406 = vand.u32 %v312, 4294901760
    %2407 = vmatmul.mubr.f32.gmra.mxu0 %v2406
    %v2408 = vpop.f32.mrf.mxu0
    %v2409 = vadd.f32 %v1924, %v2408
    %v2410 = vpop.f32.mrf.mxu0
    %2411 = vmatprep.mubr.f32.mxu0 0.0
    %v2412 = vand.u32 %v313, 4294901760
    %2413 = vmatmul.mubr.f32.gmra.mxu0 %v2412
    %v2414 = vpop.f32.mrf.mxu0
    %v2415 = vadd.f32 %v1932, %v2414
    %v2416 = vpop.f32.mrf.mxu0
    %2417 = vmatprep.mubr.f32.mxu0 0.0
    %v2418 = vand.u32 %v314, 4294901760
    %2419 = vmatmul.mubr.f32.gmra.mxu0 %v2418
    %v2420 = vpop.f32.mrf.mxu0
    %v2421 = vadd.f32 %v1940, %v2420
    %v2422 = vpop.f32.mrf.mxu0
    %2423 = vmatprep.mubr.f32.mxu0 0.0
    %v2424 = vand.u32 %v315, 4294901760
    %2425 = vmatmul.mubr.f32.gmra.mxu0 %v2424
    %v2426 = vpop.f32.mrf.mxu0
    %v2427 = vadd.f32 %v1948, %v2426
    %v2428 = vpop.f32.mrf.mxu0
    %2429 = vmatprep.mubr.f32.mxu0 0.0
    %v2430 = vand.u32 %v316, 4294901760
    %2431 = vmatmul.mubr.f32.gmra.mxu0 %v2430
    %v2432 = vpop.f32.mrf.mxu0
    %v2433 = vadd.f32 %v1956, %v2432
    %v2434 = vpop.f32.mrf.mxu0
    %2435 = vmatprep.mubr.f32.mxu0 0.0
    %v2436 = vand.u32 %v317, 4294901760
    %2437 = vmatmul.mubr.f32.gmra.mxu0 %v2436
    %v2438 = vpop.f32.mrf.mxu0
    %v2439 = vadd.f32 %v1964, %v2438
    %v2440 = vpop.f32.mrf.mxu0
    %2441 = vmatprep.mubr.f32.mxu0 0.0
    %v2442 = vand.u32 %v318, 4294901760
    %2443 = vmatmul.mubr.f32.gmra.mxu0 %v2442
    %v2444 = vpop.f32.mrf.mxu0
    %v2445 = vadd.f32 %v1972, %v2444
    %v2446 = vpop.f32.mrf.mxu0
    %2447 = vmatprep.mubr.f32.mxu0 0.0
    %v2448 = vand.u32 %v319, 4294901760
    %2449 = vmatmul.mubr.f32.gmra.mxu0 %v2448
    %v2450 = vpop.f32.mrf.mxu0
    %v2451 = vadd.f32 %v1980, %v2450
    %v2452 = vpop.f32.mrf.mxu0
    %2453 = vmatprep.mubr.f32.mxu0 0.0
    %v2454 = vand.u32 %v320, 4294901760
    %2455 = vmatmul.mubr.f32.gmra.mxu0 %v2454
    %v2456 = vpop.f32.mrf.mxu0
    %v2457 = vadd.f32 %v1988, %v2456
    %v2458 = vpop.f32.mrf.mxu0
    %2459 = vmatprep.mubr.f32.mxu0 0.0
    %v2460 = vand.u32 %v321, 4294901760
    %2461 = vmatmul.mubr.f32.gmra.mxu0 %v2460
    %v2462 = vpop.f32.mrf.mxu0
    %v2463 = vadd.f32 %v1996, %v2462
    %v2464 = vpop.f32.mrf.mxu0
    %2465 = vmatprep.mubr.f32.mxu0 0.0
    %v2466 = vand.u32 %v322, 4294901760
    %2467 = vmatmul.mubr.f32.gmra.mxu0 %v2466
    %v2468 = vpop.f32.mrf.mxu0
    %v2469 = vadd.f32 %v2004, %v2468
    %v2470 = vpop.f32.mrf.mxu0
    %2471 = vmatprep.mubr.f32.mxu0 0.0
    %v2472 = vand.u32 %v323, 4294901760
    %2473 = vmatmul.mubr.f32.gmra.mxu0 %v2472
    %v2474 = vpop.f32.mrf.mxu0
    %v2475 = vadd.f32 %v2012, %v2474
    %v2476 = vpop.f32.mrf.mxu0
    %2477 = vmatprep.mubr.f32.mxu0 0.0
    %v2478 = vand.u32 %v324, 4294901760
    %2479 = vmatmul.mubr.f32.gmra.mxu0 %v2478
    %v2480 = vpop.f32.mrf.mxu0
    %v2481 = vadd.f32 %v2020, %v2480
    %v2482 = vpop.f32.mrf.mxu0
    %2483 = vmatprep.mubr.f32.mxu0 0.0
    %v2484 = vand.u32 %v325, 4294901760
    %2485 = vmatmul.mubr.f32.gmra.mxu0 %v2484
    %v2486 = vpop.f32.mrf.mxu0
    %v2487 = vadd.f32 %v2028, %v2486
    %v2488 = vpop.f32.mrf.mxu0
    %2489 = vmatprep.mubr.f32.mxu0 0.0
    %v2490 = vand.u32 %v326, 4294901760
    %2491 = vmatmul.mubr.f32.gmra.mxu0 %v2490
    %v2492 = vpop.f32.mrf.mxu0
    %v2493 = vadd.f32 %v2036, %v2492
    %v2494 = vpop.f32.mrf.mxu0
    %2495 = vmatprep.mubr.f32.mxu0 0.0
    %v2496 = vand.u32 %v327, 4294901760
    %2497 = vmatmul.mubr.f32.gmra.mxu0 %v2496
    %v2498 = vpop.f32.mrf.mxu0
    %v2499 = vadd.f32 %v2044, %v2498
    %v2500 = vpop.f32.mrf.mxu0
    %2501 = vmatprep.mubr.f32.mxu0 0.0
    %v2502 = vand.u32 %v328, 4294901760
    %2503 = vmatmul.mubr.f32.gmra.mxu0 %v2502
    %v2504 = vpop.f32.mrf.mxu0
    %v2505 = vadd.f32 %v2052, %v2504
    %v2506 = vpop.f32.mrf.mxu0
    %2507 = vmatprep.mubr.f32.mxu0 0.0
    %v2508 = vand.u32 %v329, 4294901760
    %2509 = vmatmul.mubr.f32.gmra.mxu0 %v2508
    %v2510 = vpop.f32.mrf.mxu0
    %v2511 = vadd.f32 %v2060, %v2510
    %v2512 = vpop.f32.mrf.mxu0
    %2513 = vmatprep.mubr.f32.mxu0 0.0
    %v2514 = vand.u32 %v330, 4294901760
    %2515 = vmatmul.mubr.f32.gmra.mxu0 %v2514
    %v2516 = vpop.f32.mrf.mxu0
    %v2517 = vadd.f32 %v2068, %v2516
    %v2518 = vpop.f32.mrf.mxu0
    %2519 = vmatprep.mubr.f32.mxu0 0.0
    %v2520 = vand.u32 %v331, 4294901760
    %2521 = vmatmul.mubr.f32.gmra.mxu0 %v2520
    %v2522 = vpop.f32.mrf.mxu0
    %v2523 = vadd.f32 %v2076, %v2522
    %v2524 = vpop.f32.mrf.mxu0
    %2525 = vmatprep.mubr.f32.mxu0 0.0
    %v2526 = vand.u32 %v332, 4294901760
    %2527 = vmatmul.mubr.f32.gmra.mxu0 %v2526
    %v2528 = vpop.f32.mrf.mxu0
    %v2529 = vadd.f32 %v2084, %v2528
    %v2530 = vpop.f32.mrf.mxu0
    %2531 = vmatprep.mubr.f32.mxu0 0.0
    %v2532 = vand.u32 %v333, 4294901760
    %2533 = vmatmul.mubr.f32.gmra.mxu0 %v2532
    %v2534 = vpop.f32.mrf.mxu0
    %v2535 = vadd.f32 %v2092, %v2534
    %v2536 = vpop.f32.mrf.mxu0
    %2537 = vmatprep.mubr.f32.mxu0 0.0
    %v2538 = vand.u32 %v334, 4294901760
    %2539 = vmatmul.mubr.f32.gmra.mxu0 %v2538
    %v2540 = vpop.f32.mrf.mxu0
    %v2541 = vadd.f32 %v2100, %v2540
    %v2542 = vpop.f32.mrf.mxu0
    %2543 = vmatprep.mubr.f32.mxu0 0.0
    %v2544 = vand.u32 %v335, 4294901760
    %2545 = vmatmul.mubr.f32.gmra.mxu0 %v2544
    %v2546 = vpop.f32.mrf.mxu0
    %v2547 = vadd.f32 %v2108, %v2546
    %v2548 = vpop.f32.mrf.mxu0
    %2549 = vmatprep.mubr.f32.mxu0 0.0
    %v2550 = vand.u32 %v336, 4294901760
    %2551 = vmatmul.mubr.f32.gmra.mxu0 %v2550
    %v2552 = vpop.f32.mrf.mxu0
    %v2553 = vadd.f32 %v2116, %v2552
    %v2554 = vpop.f32.mrf.mxu0
    %2555 = vmatprep.mubr.f32.mxu0 0.0
    %v2556 = vand.u32 %v337, 4294901760
    %2557 = vmatmul.mubr.f32.gmra.mxu0 %v2556
    %v2558 = vpop.f32.mrf.mxu0
    %v2559 = vadd.f32 %v2124, %v2558
    %v2560 = vpop.f32.mrf.mxu0
    %2561 = vmatprep.mubr.f32.mxu0 0.0
    %v2562 = vand.u32 %v338, 4294901760
    %2563 = vmatmul.mubr.f32.gmra.mxu0 %v2562
    %v2564 = vpop.f32.mrf.mxu0
    %v2565 = vadd.f32 %v2132, %v2564
    %v2566 = vpop.f32.mrf.mxu0
    %2567 = vmatprep.mubr.f32.mxu0 0.0
    %v2568 = vand.u32 %v339, 4294901760
    %2569 = vmatmul.mubr.f32.gmra.mxu0 %v2568
    %v2570 = vpop.f32.mrf.mxu0
    %v2571 = vadd.f32 %v2140, %v2570
    %v2572 = vpop.f32.mrf.mxu0
    %2573 = vmatprep.mubr.f32.mxu0 0.0
    %v2574 = vand.u32 %v340, 4294901760
    %2575 = vmatmul.mubr.f32.gmra.mxu0 %v2574
    %v2576 = vpop.f32.mrf.mxu0
    %v2577 = vadd.f32 %v2148, %v2576
    %v2578 = vpop.f32.mrf.mxu0
    %2579 = vmatprep.mubr.f32.mxu0 0.0
    %v2580 = vand.u32 %v341, 4294901760
    %2581 = vmatmul.mubr.f32.gmra.mxu0 %v2580
    %v2582 = vpop.f32.mrf.mxu0
    %v2583 = vadd.f32 %v2156, %v2582
    %v2584 = vpop.f32.mrf.mxu0
    %2585 = vmatprep.mubr.f32.mxu0 0.0
    %v2586 = vand.u32 %v342, 4294901760
    %2587 = vmatmul.mubr.f32.gmra.mxu0 %v2586
    %v2588 = vpop.f32.mrf.mxu0
    %v2589 = vadd.f32 %v2164, %v2588
    %v2590 = vpop.f32.mrf.mxu0
    %2591 = vmatprep.mubr.f32.mxu0 0.0
    %v2592 = vand.u32 %v343, 4294901760
    %2593 = vmatmul.mubr.f32.gmra.mxu0 %v2592
    %v2594 = vpop.f32.mrf.mxu0
    %v2595 = vadd.f32 %v2172, %v2594
    %v2596 = vpop.f32.mrf.mxu0
    %2597 = vmatprep.mubr.f32.mxu0 0.0
    %v2598 = vand.u32 %v344, 4294901760
    %2599 = vmatmul.mubr.f32.gmra.mxu0 %v2598
    %v2600 = vpop.f32.mrf.mxu0
    %v2601 = vadd.f32 %v2180, %v2600
    %v2602 = vpop.f32.mrf.mxu0
    %2603 = vmatprep.mubr.f32.mxu0 0.0
    %v2604 = vand.u32 %v345, 4294901760
    %2605 = vmatmul.mubr.f32.gmra.mxu0 %v2604
    %v2606 = vpop.f32.mrf.mxu0
    %v2607 = vadd.f32 %v2188, %v2606
    %v2608 = vpop.f32.mrf.mxu0
    %2609 = vmatprep.mubr.f32.mxu0 0.0
    %v2610 = vand.u32 %v346, 4294901760
    %2611 = vmatmul.mubr.f32.gmra.mxu0 %v2610
    %v2612 = vpop.f32.mrf.mxu0
    %v2613 = vadd.f32 %v2196, %v2612
    %v2614 = vpop.f32.mrf.mxu0
    %2615 = vmatprep.mubr.f32.mxu0 0.0
    %v2616 = vand.u32 %v347, 4294901760
    %2617 = vmatmul.mubr.f32.gmra.mxu0 %v2616
    %v2618 = vpop.f32.mrf.mxu0
    %v2619 = vadd.f32 %v2204, %v2618
    %v2620 = vpop.f32.mrf.mxu0
    %2621 = vmatprep.mubr.f32.mxu0 0.0
    %v2622 = vand.u32 %v348, 4294901760
    %2623 = vmatmul.mubr.f32.gmra.mxu0 %v2622
    %v2624 = vpop.f32.mrf.mxu0
    %v2625 = vadd.f32 %v2212, %v2624
    %v2626 = vpop.f32.mrf.mxu0
    %2627 = vmatprep.mubr.f32.mxu0 0.0
    %v2628 = vand.u32 %v349, 4294901760
    %2629 = vmatmul.mubr.f32.gmra.mxu0 %v2628
    %v2630 = vpop.f32.mrf.mxu0
    %v2631 = vadd.f32 %v2220, %v2630
    %v2632 = vpop.f32.mrf.mxu0
    %2633 = vmatprep.mubr.f32.mxu0 0.0
    %v2634 = vand.u32 %v350, 4294901760
    %2635 = vmatmul.mubr.f32.gmra.mxu0 %v2634
    %v2636 = vpop.f32.mrf.mxu0
    %v2637 = vadd.f32 %v2228, %v2636
    %v2638 = vpop.f32.mrf.mxu0
    %2639 = vmatprep.mubr.f32.mxu0 0.0
    %v2640 = vand.u32 %v351, 4294901760
    %2641 = vmatmul.mubr.f32.gmra.mxu0 %v2640
    %v2642 = vpop.f32.mrf.mxu0
    %v2643 = vadd.f32 %v2236, %v2642
    %v2644 = vpop.f32.mrf.mxu0
    %2645 = vmatprep.mubr.f32.mxu0 0.0
    %v2646 = vand.u32 %v352, 4294901760
    %2647 = vmatmul.mubr.f32.gmra.mxu0 %v2646
    %v2648 = vpop.f32.mrf.mxu0
    %v2649 = vadd.f32 %v2244, %v2648
    %v2650 = vpop.f32.mrf.mxu0
    %2651 = vmatprep.mubr.f32.mxu0 0.0
    %v2652 = vand.u32 %v353, 4294901760
    %2653 = vmatmul.mubr.f32.gmra.mxu0 %v2652
    %v2654 = vpop.f32.mrf.mxu0
    %v2655 = vadd.f32 %v2252, %v2654
    %v2656 = vpop.f32.mrf.mxu0
    %2657 = vmatprep.mubr.f32.mxu0 0.0
    %v2658 = vand.u32 %v354, 4294901760
    %2659 = vmatmul.mubr.f32.gmra.mxu0 %v2658
    %v2660 = vpop.f32.mrf.mxu0
    %v2661 = vadd.f32 %v2260, %v2660
    %v2662 = vpop.f32.mrf.mxu0
    %2663 = vdwg.mxu0
    %2664 = vmatprep.subr.mxu0 0.0
    %v2665 = vand.u32 %v370, 4294901760
    %2666 = vmatpush1.msra.mxu0 %v2665
    %2667 = vmatprep.subr.mxu0 0.0
    %v2668 = vand.u32 %v369, 4294901760
    %2669 = vmatpush1.msra.mxu0 %v2668
    %2670 = vmatprep.subr.mxu0 0.0
    %v2671 = vand.u32 %v368, 4294901760
    %2672 = vmatpush1.msra.mxu0 %v2671
    %2673 = vmatprep.subr.mxu0 0.0
    %v2674 = vand.u32 %v367, 4294901760
    %2675 = vmatpush1.msra.mxu0 %v2674
    %2676 = vmatprep.subr.mxu0 0.0
    %v2677 = vand.u32 %v366, 4294901760
    %2678 = vmatpush1.msra.mxu0 %v2677
    %2679 = vmatprep.subr.mxu0 0.0
    %v2680 = vand.u32 %v365, 4294901760
    %2681 = vmatpush1.msra.mxu0 %v2680
    %2682 = vmatprep.subr.mxu0 0.0
    %v2683 = vand.u32 %v364, 4294901760
    %2684 = vmatpush1.msra.mxu0 %v2683
    %2685 = vmatprep.subr.mxu0 0.0
    %v2686 = vand.u32 %v363, 4294901760
    %2687 = vmatpush1.msra.mxu0 %v2686
    %2688 = vmatprep.subr.mxu0 0.0
    %v2689 = vand.u32 %v362, 4294901760
    %2690 = vmatpush1.msra.mxu0 %v2689
    %2691 = vmatprep.subr.mxu0 0.0
    %v2692 = vand.u32 %v361, 4294901760
    %2693 = vmatpush1.msra.mxu0 %v2692
    %2694 = vmatprep.subr.mxu0 0.0
    %v2695 = vand.u32 %v360, 4294901760
    %2696 = vmatpush1.msra.mxu0 %v2695
    %2697 = vmatprep.subr.mxu0 0.0
    %v2698 = vand.u32 %v359, 4294901760
    %2699 = vmatpush1.msra.mxu0 %v2698
    %2700 = vmatprep.subr.mxu0 0.0
    %v2701 = vand.u32 %v358, 4294901760
    %2702 = vmatpush1.msra.mxu0 %v2701
    %2703 = vmatprep.subr.mxu0 0.0
    %v2704 = vand.u32 %v357, 4294901760
    %2705 = vmatpush1.msra.mxu0 %v2704
    %2706 = vmatprep.subr.mxu0 0.0
    %v2707 = vand.u32 %v356, 4294901760
    %2708 = vmatpush1.msra.mxu0 %v2707
    %2709 = vmatprep.subr.mxu0 0.0
    %v2710 = vand.u32 %v355, 4294901760
    %2711 = vmatpush1.msra.mxu0 %v2710
    %2712 = vmatprep.subr.mxu0 0.0
    %2713 = vmatpush2.msra.mxu0 0.0
    %2714 = vmatprep.subr.mxu0 0.0
    %2715 = vmatpush2.msra.mxu0 0.0
    %2716 = vmatprep.subr.mxu0 0.0
    %2717 = vmatpush2.msra.mxu0 0.0
    %2718 = vmatprep.subr.mxu0 0.0
    %2719 = vmatpush2.msra.mxu0 0.0
    %2720 = vmatprep.subr.mxu0 0.0
    %2721 = vmatpush2.msra.mxu0 0.0
    %2722 = vmatprep.subr.mxu0 0.0
    %2723 = vmatpush2.msra.mxu0 0.0
    %2724 = vmatprep.subr.mxu0 0.0
    %2725 = vmatpush2.msra.mxu0 0.0
    %2726 = vmatprep.subr.mxu0 0.0
    %2727 = vmatpush2.msra.mxu0 0.0
    %2728 = vmatprep.subr.mxu0 0.0
    %2729 = vmatpush2.msra.mxu0 0.0
    %2730 = vmatprep.subr.mxu0 0.0
    %2731 = vmatpush2.msra.mxu0 0.0
    %2732 = vmatprep.subr.mxu0 0.0
    %2733 = vmatpush2.msra.mxu0 0.0
    %2734 = vmatprep.subr.mxu0 0.0
    %2735 = vmatpush2.msra.mxu0 0.0
    %2736 = vmatprep.subr.mxu0 0.0
    %2737 = vmatpush2.msra.mxu0 0.0
    %2738 = vmatprep.subr.mxu0 0.0
    %2739 = vmatpush2.msra.mxu0 0.0
    %2740 = vmatprep.subr.mxu0 0.0
    %2741 = vmatpush2.msra.mxu0 0.0
    %2742 = vmatprep.subr.mxu0 0.0
    %2743 = vmatpush2.msra.mxu0 0.0
    %2744 = vmatprep.mubr.f32.mxu0 0.0
    %v2745 = vand.u32 %v307, 4294901760
    %2746 = vmatmul.mubr.f32.gmra.mxu0 %v2745
    %v2747 = vpop.f32.mrf.mxu0
    %v2748 = vadd.f32 %v2379, %v2747
    %v2749 = vpop.f32.mrf.mxu0
    %2750 = vmatprep.mubr.f32.mxu0 0.0
    %v2751 = vand.u32 %v308, 4294901760
    %2752 = vmatmul.mubr.f32.gmra.mxu0 %v2751
    %v2753 = vpop.f32.mrf.mxu0
    %v2754 = vadd.f32 %v2385, %v2753
    %v2755 = vpop.f32.mrf.mxu0
    %2756 = vmatprep.mubr.f32.mxu0 0.0
    %v2757 = vand.u32 %v309, 4294901760
    %2758 = vmatmul.mubr.f32.gmra.mxu0 %v2757
    %v2759 = vpop.f32.mrf.mxu0
    %v2760 = vadd.f32 %v2391, %v2759
    %v2761 = vpop.f32.mrf.mxu0
    %2762 = vmatprep.mubr.f32.mxu0 0.0
    %v2763 = vand.u32 %v310, 4294901760
    %2764 = vmatmul.mubr.f32.gmra.mxu0 %v2763
    %v2765 = vpop.f32.mrf.mxu0
    %v2766 = vadd.f32 %v2397, %v2765
    %v2767 = vpop.f32.mrf.mxu0
    %2768 = vmatprep.mubr.f32.mxu0 0.0
    %v2769 = vand.u32 %v311, 4294901760
    %2770 = vmatmul.mubr.f32.gmra.mxu0 %v2769
    %v2771 = vpop.f32.mrf.mxu0
    %v2772 = vadd.f32 %v2403, %v2771
    %v2773 = vpop.f32.mrf.mxu0
    %2774 = vmatprep.mubr.f32.mxu0 0.0
    %v2775 = vand.u32 %v312, 4294901760
    %2776 = vmatmul.mubr.f32.gmra.mxu0 %v2775
    %v2777 = vpop.f32.mrf.mxu0
    %v2778 = vadd.f32 %v2409, %v2777
    %v2779 = vpop.f32.mrf.mxu0
    %2780 = vmatprep.mubr.f32.mxu0 0.0
    %v2781 = vand.u32 %v313, 4294901760
    %2782 = vmatmul.mubr.f32.gmra.mxu0 %v2781
    %v2783 = vpop.f32.mrf.mxu0
    %v2784 = vadd.f32 %v2415, %v2783
    %v2785 = vpop.f32.mrf.mxu0
    %2786 = vmatprep.mubr.f32.mxu0 0.0
    %v2787 = vand.u32 %v314, 4294901760
    %2788 = vmatmul.mubr.f32.gmra.mxu0 %v2787
    %v2789 = vpop.f32.mrf.mxu0
    %v2790 = vadd.f32 %v2421, %v2789
    %v2791 = vpop.f32.mrf.mxu0
    %2792 = vmatprep.mubr.f32.mxu0 0.0
    %v2793 = vand.u32 %v315, 4294901760
    %2794 = vmatmul.mubr.f32.gmra.mxu0 %v2793
    %v2795 = vpop.f32.mrf.mxu0
    %v2796 = vadd.f32 %v2427, %v2795
    %v2797 = vpop.f32.mrf.mxu0
    %2798 = vmatprep.mubr.f32.mxu0 0.0
    %v2799 = vand.u32 %v316, 4294901760
    %2800 = vmatmul.mubr.f32.gmra.mxu0 %v2799
    %v2801 = vpop.f32.mrf.mxu0
    %v2802 = vadd.f32 %v2433, %v2801
    %v2803 = vpop.f32.mrf.mxu0
    %2804 = vmatprep.mubr.f32.mxu0 0.0
    %v2805 = vand.u32 %v317, 4294901760
    %2806 = vmatmul.mubr.f32.gmra.mxu0 %v2805
    %v2807 = vpop.f32.mrf.mxu0
    %v2808 = vadd.f32 %v2439, %v2807
    %v2809 = vpop.f32.mrf.mxu0
    %2810 = vmatprep.mubr.f32.mxu0 0.0
    %v2811 = vand.u32 %v318, 4294901760
    %2812 = vmatmul.mubr.f32.gmra.mxu0 %v2811
    %v2813 = vpop.f32.mrf.mxu0
    %v2814 = vadd.f32 %v2445, %v2813
    %v2815 = vpop.f32.mrf.mxu0
    %2816 = vmatprep.mubr.f32.mxu0 0.0
    %v2817 = vand.u32 %v319, 4294901760
    %2818 = vmatmul.mubr.f32.gmra.mxu0 %v2817
    %v2819 = vpop.f32.mrf.mxu0
    %v2820 = vadd.f32 %v2451, %v2819
    %v2821 = vpop.f32.mrf.mxu0
    %2822 = vmatprep.mubr.f32.mxu0 0.0
    %v2823 = vand.u32 %v320, 4294901760
    %2824 = vmatmul.mubr.f32.gmra.mxu0 %v2823
    %v2825 = vpop.f32.mrf.mxu0
    %v2826 = vadd.f32 %v2457, %v2825
    %v2827 = vpop.f32.mrf.mxu0
    %2828 = vmatprep.mubr.f32.mxu0 0.0
    %v2829 = vand.u32 %v321, 4294901760
    %2830 = vmatmul.mubr.f32.gmra.mxu0 %v2829
    %v2831 = vpop.f32.mrf.mxu0
    %v2832 = vadd.f32 %v2463, %v2831
    %v2833 = vpop.f32.mrf.mxu0
    %2834 = vmatprep.mubr.f32.mxu0 0.0
    %v2835 = vand.u32 %v322, 4294901760
    %2836 = vmatmul.mubr.f32.gmra.mxu0 %v2835
    %v2837 = vpop.f32.mrf.mxu0
    %v2838 = vadd.f32 %v2469, %v2837
    %v2839 = vpop.f32.mrf.mxu0
    %2840 = vmatprep.mubr.f32.mxu0 0.0
    %v2841 = vand.u32 %v323, 4294901760
    %2842 = vmatmul.mubr.f32.gmra.mxu0 %v2841
    %v2843 = vpop.f32.mrf.mxu0
    %v2844 = vadd.f32 %v2475, %v2843
    %v2845 = vpop.f32.mrf.mxu0
    %2846 = vmatprep.mubr.f32.mxu0 0.0
    %v2847 = vand.u32 %v324, 4294901760
    %2848 = vmatmul.mubr.f32.gmra.mxu0 %v2847
    %v2849 = vpop.f32.mrf.mxu0
    %v2850 = vadd.f32 %v2481, %v2849
    %v2851 = vpop.f32.mrf.mxu0
    %2852 = vmatprep.mubr.f32.mxu0 0.0
    %v2853 = vand.u32 %v325, 4294901760
    %2854 = vmatmul.mubr.f32.gmra.mxu0 %v2853
    %v2855 = vpop.f32.mrf.mxu0
    %v2856 = vadd.f32 %v2487, %v2855
    %v2857 = vpop.f32.mrf.mxu0
    %2858 = vmatprep.mubr.f32.mxu0 0.0
    %v2859 = vand.u32 %v326, 4294901760
    %2860 = vmatmul.mubr.f32.gmra.mxu0 %v2859
    %v2861 = vpop.f32.mrf.mxu0
    %v2862 = vadd.f32 %v2493, %v2861
    %v2863 = vpop.f32.mrf.mxu0
    %2864 = vmatprep.mubr.f32.mxu0 0.0
    %v2865 = vand.u32 %v327, 4294901760
    %2866 = vmatmul.mubr.f32.gmra.mxu0 %v2865
    %v2867 = vpop.f32.mrf.mxu0
    %v2868 = vadd.f32 %v2499, %v2867
    %v2869 = vpop.f32.mrf.mxu0
    %2870 = vmatprep.mubr.f32.mxu0 0.0
    %v2871 = vand.u32 %v328, 4294901760
    %2872 = vmatmul.mubr.f32.gmra.mxu0 %v2871
    %v2873 = vpop.f32.mrf.mxu0
    %v2874 = vadd.f32 %v2505, %v2873
    %v2875 = vpop.f32.mrf.mxu0
    %2876 = vmatprep.mubr.f32.mxu0 0.0
    %v2877 = vand.u32 %v329, 4294901760
    %2878 = vmatmul.mubr.f32.gmra.mxu0 %v2877
    %v2879 = vpop.f32.mrf.mxu0
    %v2880 = vadd.f32 %v2511, %v2879
    %v2881 = vpop.f32.mrf.mxu0
    %2882 = vmatprep.mubr.f32.mxu0 0.0
    %v2883 = vand.u32 %v330, 4294901760
    %2884 = vmatmul.mubr.f32.gmra.mxu0 %v2883
    %v2885 = vpop.f32.mrf.mxu0
    %v2886 = vadd.f32 %v2517, %v2885
    %v2887 = vpop.f32.mrf.mxu0
    %2888 = vmatprep.mubr.f32.mxu0 0.0
    %v2889 = vand.u32 %v331, 4294901760
    %2890 = vmatmul.mubr.f32.gmra.mxu0 %v2889
    %v2891 = vpop.f32.mrf.mxu0
    %v2892 = vadd.f32 %v2523, %v2891
    %v2893 = vpop.f32.mrf.mxu0
    %2894 = vmatprep.mubr.f32.mxu0 0.0
    %v2895 = vand.u32 %v332, 4294901760
    %2896 = vmatmul.mubr.f32.gmra.mxu0 %v2895
    %v2897 = vpop.f32.mrf.mxu0
    %v2898 = vadd.f32 %v2529, %v2897
    %v2899 = vpop.f32.mrf.mxu0
    %2900 = vmatprep.mubr.f32.mxu0 0.0
    %v2901 = vand.u32 %v333, 4294901760
    %2902 = vmatmul.mubr.f32.gmra.mxu0 %v2901
    %v2903 = vpop.f32.mrf.mxu0
    %v2904 = vadd.f32 %v2535, %v2903
    %v2905 = vpop.f32.mrf.mxu0
    %2906 = vmatprep.mubr.f32.mxu0 0.0
    %v2907 = vand.u32 %v334, 4294901760
    %2908 = vmatmul.mubr.f32.gmra.mxu0 %v2907
    %v2909 = vpop.f32.mrf.mxu0
    %v2910 = vadd.f32 %v2541, %v2909
    %v2911 = vpop.f32.mrf.mxu0
    %2912 = vmatprep.mubr.f32.mxu0 0.0
    %v2913 = vand.u32 %v335, 4294901760
    %2914 = vmatmul.mubr.f32.gmra.mxu0 %v2913
    %v2915 = vpop.f32.mrf.mxu0
    %v2916 = vadd.f32 %v2547, %v2915
    %v2917 = vpop.f32.mrf.mxu0
    %2918 = vmatprep.mubr.f32.mxu0 0.0
    %v2919 = vand.u32 %v336, 4294901760
    %2920 = vmatmul.mubr.f32.gmra.mxu0 %v2919
    %v2921 = vpop.f32.mrf.mxu0
    %v2922 = vadd.f32 %v2553, %v2921
    %v2923 = vpop.f32.mrf.mxu0
    %2924 = vmatprep.mubr.f32.mxu0 0.0
    %v2925 = vand.u32 %v337, 4294901760
    %2926 = vmatmul.mubr.f32.gmra.mxu0 %v2925
    %v2927 = vpop.f32.mrf.mxu0
    %v2928 = vadd.f32 %v2559, %v2927
    %v2929 = vpop.f32.mrf.mxu0
    %2930 = vmatprep.mubr.f32.mxu0 0.0
    %v2931 = vand.u32 %v338, 4294901760
    %2932 = vmatmul.mubr.f32.gmra.mxu0 %v2931
    %v2933 = vpop.f32.mrf.mxu0
    %v2934 = vadd.f32 %v2565, %v2933
    %v2935 = vpop.f32.mrf.mxu0
    %2936 = vmatprep.mubr.f32.mxu0 0.0
    %v2937 = vand.u32 %v339, 4294901760
    %2938 = vmatmul.mubr.f32.gmra.mxu0 %v2937
    %v2939 = vpop.f32.mrf.mxu0
    %v2940 = vadd.f32 %v2571, %v2939
    %v2941 = vpop.f32.mrf.mxu0
    %2942 = vmatprep.mubr.f32.mxu0 0.0
    %v2943 = vand.u32 %v340, 4294901760
    %2944 = vmatmul.mubr.f32.gmra.mxu0 %v2943
    %v2945 = vpop.f32.mrf.mxu0
    %v2946 = vadd.f32 %v2577, %v2945
    %v2947 = vpop.f32.mrf.mxu0
    %2948 = vmatprep.mubr.f32.mxu0 0.0
    %v2949 = vand.u32 %v341, 4294901760
    %2950 = vmatmul.mubr.f32.gmra.mxu0 %v2949
    %v2951 = vpop.f32.mrf.mxu0
    %v2952 = vadd.f32 %v2583, %v2951
    %v2953 = vpop.f32.mrf.mxu0
    %2954 = vmatprep.mubr.f32.mxu0 0.0
    %v2955 = vand.u32 %v342, 4294901760
    %2956 = vmatmul.mubr.f32.gmra.mxu0 %v2955
    %v2957 = vpop.f32.mrf.mxu0
    %v2958 = vadd.f32 %v2589, %v2957
    %v2959 = vpop.f32.mrf.mxu0
    %2960 = vmatprep.mubr.f32.mxu0 0.0
    %v2961 = vand.u32 %v343, 4294901760
    %2962 = vmatmul.mubr.f32.gmra.mxu0 %v2961
    %v2963 = vpop.f32.mrf.mxu0
    %v2964 = vadd.f32 %v2595, %v2963
    %v2965 = vpop.f32.mrf.mxu0
    %2966 = vmatprep.mubr.f32.mxu0 0.0
    %v2967 = vand.u32 %v344, 4294901760
    %2968 = vmatmul.mubr.f32.gmra.mxu0 %v2967
    %v2969 = vpop.f32.mrf.mxu0
    %v2970 = vadd.f32 %v2601, %v2969
    %v2971 = vpop.f32.mrf.mxu0
    %2972 = vmatprep.mubr.f32.mxu0 0.0
    %v2973 = vand.u32 %v345, 4294901760
    %2974 = vmatmul.mubr.f32.gmra.mxu0 %v2973
    %v2975 = vpop.f32.mrf.mxu0
    %v2976 = vadd.f32 %v2607, %v2975
    %v2977 = vpop.f32.mrf.mxu0
    %2978 = vmatprep.mubr.f32.mxu0 0.0
    %v2979 = vand.u32 %v346, 4294901760
    %2980 = vmatmul.mubr.f32.gmra.mxu0 %v2979
    %v2981 = vpop.f32.mrf.mxu0
    %v2982 = vadd.f32 %v2613, %v2981
    %v2983 = vpop.f32.mrf.mxu0
    %2984 = vmatprep.mubr.f32.mxu0 0.0
    %v2985 = vand.u32 %v347, 4294901760
    %2986 = vmatmul.mubr.f32.gmra.mxu0 %v2985
    %v2987 = vpop.f32.mrf.mxu0
    %v2988 = vadd.f32 %v2619, %v2987
    %v2989 = vpop.f32.mrf.mxu0
    %2990 = vmatprep.mubr.f32.mxu0 0.0
    %v2991 = vand.u32 %v348, 4294901760
    %2992 = vmatmul.mubr.f32.gmra.mxu0 %v2991
    %v2993 = vpop.f32.mrf.mxu0
    %v2994 = vadd.f32 %v2625, %v2993
    %v2995 = vpop.f32.mrf.mxu0
    %2996 = vmatprep.mubr.f32.mxu0 0.0
    %v2997 = vand.u32 %v349, 4294901760
    %2998 = vmatmul.mubr.f32.gmra.mxu0 %v2997
    %v2999 = vpop.f32.mrf.mxu0
    %v3000 = vadd.f32 %v2631, %v2999
    %v3001 = vpop.f32.mrf.mxu0
    %3002 = vmatprep.mubr.f32.mxu0 0.0
    %v3003 = vand.u32 %v350, 4294901760
    %3004 = vmatmul.mubr.f32.gmra.mxu0 %v3003
    %v3005 = vpop.f32.mrf.mxu0
    %v3006 = vadd.f32 %v2637, %v3005
    %v3007 = vpop.f32.mrf.mxu0
    %3008 = vmatprep.mubr.f32.mxu0 0.0
    %v3009 = vand.u32 %v351, 4294901760
    %3010 = vmatmul.mubr.f32.gmra.mxu0 %v3009
    %v3011 = vpop.f32.mrf.mxu0
    %v3012 = vadd.f32 %v2643, %v3011
    %v3013 = vpop.f32.mrf.mxu0
    %3014 = vmatprep.mubr.f32.mxu0 0.0
    %v3015 = vand.u32 %v352, 4294901760
    %3016 = vmatmul.mubr.f32.gmra.mxu0 %v3015
    %v3017 = vpop.f32.mrf.mxu0
    %v3018 = vadd.f32 %v2649, %v3017
    %v3019 = vpop.f32.mrf.mxu0
    %3020 = vmatprep.mubr.f32.mxu0 0.0
    %v3021 = vand.u32 %v353, 4294901760
    %3022 = vmatmul.mubr.f32.gmra.mxu0 %v3021
    %v3023 = vpop.f32.mrf.mxu0
    %v3024 = vadd.f32 %v2655, %v3023
    %v3025 = vpop.f32.mrf.mxu0
    %3026 = vmatprep.mubr.f32.mxu0 0.0
    %v3027 = vand.u32 %v354, 4294901760
    %3028 = vmatmul.mubr.f32.gmra.mxu0 %v3027
    %v3029 = vpop.f32.mrf.mxu0
    %v3030 = vadd.f32 %v2661, %v3029
    %v3031 = vpop.f32.mrf.mxu0
    %3032 = vdwg.mxu0
    %3033 = vst [vmem:[%s3] sm:$0xff] %v2748
    %3034 = vst [vmem:[%s3 + $0x8] sm:$0xff] %v2754
    %3035 = vst [vmem:[%s3 + $0x10] sm:$0xff] %v2760
    %3036 = vst [vmem:[%s3 + $0x18] sm:$0xff] %v2766
    %3037 = vst [vmem:[%s3 + $0x20] sm:$0xff] %v2772
    %3038 = vst [vmem:[%s3 + $0x28] sm:$0xff] %v2778
    %3039 = vst [vmem:[%s3 + $0x30] sm:$0xff] %v2784
    %3040 = vst [vmem:[%s3 + $0x38] sm:$0xff] %v2790
    %3041 = vst [vmem:[%s3 + $0x40] sm:$0xff] %v2796
    %3042 = vst [vmem:[%s3 + $0x48] sm:$0xff] %v2802
    %3043 = vst [vmem:[%s3 + $0x50] sm:$0xff] %v2808
    %3044 = vst [vmem:[%s3 + $0x58] sm:$0xff] %v2814
    %3045 = vst [vmem:[%s3 + $0x60] sm:$0xff] %v2820
    %3046 = vst [vmem:[%s3 + $0x68] sm:$0xff] %v2826
    %3047 = vst [vmem:[%s3 + $0x70] sm:$0xff] %v2832
    %3048 = vst [vmem:[%s3 + $0x78] sm:$0xff] %v2838
    %3049 = vst [vmem:[%s3 + $0x80] sm:$0xff] %v2844
    %3050 = vst [vmem:[%s3 + $0x88] sm:$0xff] %v2850
    %3051 = vst [vmem:[%s3 + $0x90] sm:$0xff] %v2856
    %3052 = vst [vmem:[%s3 + $0x98] sm:$0xff] %v2862
    %3053 = vst [vmem:[%s3 + $0xa0] sm:$0xff] %v2868
    %3054 = vst [vmem:[%s3 + $0xa8] sm:$0xff] %v2874
    %3055 = vst [vmem:[%s3 + $0xb0] sm:$0xff] %v2880
    %3056 = vst [vmem:[%s3 + $0xb8] sm:$0xff] %v2886
    %3057 = vst [vmem:[%s3 + $0xc0] sm:$0xff] %v2892
    %3058 = vst [vmem:[%s3 + $0xc8] sm:$0xff] %v2898
    %3059 = vst [vmem:[%s3 + $0xd0] sm:$0xff] %v2904
    %3060 = vst [vmem:[%s3 + $0xd8] sm:$0xff] %v2910
    %3061 = vst [vmem:[%s3 + $0xe0] sm:$0xff] %v2916
    %3062 = vst [vmem:[%s3 + $0xe8] sm:$0xff] %v2922
    %3063 = vst [vmem:[%s3 + $0xf0] sm:$0xff] %v2928
    %3064 = vst [vmem:[%s3 + $0xf8] sm:$0xff] %v2934
    %3065 = vst [vmem:[%s3 + $0x100] sm:$0xff] %v2940
    %3066 = vst [vmem:[%s3 + $0x108] sm:$0xff] %v2946
    %3067 = vst [vmem:[%s3 + $0x110] sm:$0xff] %v2952
    %3068 = vst [vmem:[%s3 + $0x118] sm:$0xff] %v2958
    %3069 = vst [vmem:[%s3 + $0x120] sm:$0xff] %v2964
    %3070 = vst [vmem:[%s3 + $0x128] sm:$0xff] %v2970
    %3071 = vst [vmem:[%s3 + $0x130] sm:$0xff] %v2976
    %3072 = vst [vmem:[%s3 + $0x138] sm:$0xff] %v2982
    %3073 = vst [vmem:[%s3 + $0x140] sm:$0xff] %v2988
    %3074 = vst [vmem:[%s3 + $0x148] sm:$0xff] %v2994
    %3075 = vst [vmem:[%s3 + $0x150] sm:$0xff] %v3000
    %3076 = vst [vmem:[%s3 + $0x158] sm:$0xff] %v3006
    %3077 = vst [vmem:[%s3 + $0x160] sm:$0xff] %v3012
    %3078 = vst [vmem:[%s3 + $0x168] sm:$0xff] %v3018
    %3079 = vst [vmem:[%s3 + $0x170] sm:$0xff] %v3024
    %3080 = vst [vmem:[%s3 + $0x178] sm:$0xff] %v3030
    %v3081 = vld [vmem:[%s2] sm:$0xff]
    %v3082 = vld [vmem:[%s2 + $0x8] sm:$0xff]
    %v3083 = vld [vmem:[%s2 + $0x10] sm:$0xff]
    %v3084 = vld [vmem:[%s2 + $0x18] sm:$0xff]
    %3085 = vmatprep.subr.mxu0 0.0
    %v3086 = vand.u32 %v322, 4294901760
    %3087 = vmatpush1.xpose.msra.mxu0 %v3086
    %3088 = vmatprep.subr.mxu0 0.0
    %v3089 = vand.u32 %v321, 4294901760
    %3090 = vmatpush1.xpose.msra.mxu0 %v3089
    %3091 = vmatprep.subr.mxu0 0.0
    %v3092 = vand.u32 %v320, 4294901760
    %3093 = vmatpush1.xpose.msra.mxu0 %v3092
    %3094 = vmatprep.subr.mxu0 0.0
    %v3095 = vand.u32 %v319, 4294901760
    %3096 = vmatpush1.xpose.msra.mxu0 %v3095
    %3097 = vmatprep.subr.mxu0 0.0
    %v3098 = vand.u32 %v318, 4294901760
    %3099 = vmatpush1.xpose.msra.mxu0 %v3098
    %3100 = vmatprep.subr.mxu0 0.0
    %v3101 = vand.u32 %v317, 4294901760
    %3102 = vmatpush1.xpose.msra.mxu0 %v3101
    %3103 = vmatprep.subr.mxu0 0.0
    %v3104 = vand.u32 %v316, 4294901760
    %3105 = vmatpush1.xpose.msra.mxu0 %v3104
    %3106 = vmatprep.subr.mxu0 0.0
    %v3107 = vand.u32 %v315, 4294901760
    %3108 = vmatpush1.xpose.msra.mxu0 %v3107
    %3109 = vmatprep.subr.mxu0 0.0
    %v3110 = vand.u32 %v314, 4294901760
    %3111 = vmatpush1.xpose.msra.mxu0 %v3110
    %3112 = vmatprep.subr.mxu0 0.0
    %v3113 = vand.u32 %v313, 4294901760
    %3114 = vmatpush1.xpose.msra.mxu0 %v3113
    %3115 = vmatprep.subr.mxu0 0.0
    %v3116 = vand.u32 %v312, 4294901760
    %3117 = vmatpush1.xpose.msra.mxu0 %v3116
    %3118 = vmatprep.subr.mxu0 0.0
    %v3119 = vand.u32 %v311, 4294901760
    %3120 = vmatpush1.xpose.msra.mxu0 %v3119
    %3121 = vmatprep.subr.mxu0 0.0
    %v3122 = vand.u32 %v310, 4294901760
    %3123 = vmatpush1.xpose.msra.mxu0 %v3122
    %3124 = vmatprep.subr.mxu0 0.0
    %v3125 = vand.u32 %v309, 4294901760
    %3126 = vmatpush1.xpose.msra.mxu0 %v3125
    %3127 = vmatprep.subr.mxu0 0.0
    %v3128 = vand.u32 %v308, 4294901760
    %3129 = vmatpush1.xpose.msra.mxu0 %v3128
    %3130 = vmatprep.subr.mxu0 0.0
    %v3131 = vand.u32 %v307, 4294901760
    %3132 = vmatpush1.xpose.msra.mxu0 %v3131
    %3133 = vmatprep.subr.mxu0 0.0
    %3134 = vmatpush2.xpose.msra.mxu0 0.0
    %3135 = vmatprep.subr.mxu0 0.0
    %3136 = vmatpush2.xpose.msra.mxu0 0.0
    %3137 = vmatprep.subr.mxu0 0.0
    %3138 = vmatpush2.xpose.msra.mxu0 0.0
    %3139 = vmatprep.subr.mxu0 0.0
    %3140 = vmatpush2.xpose.msra.mxu0 0.0
    %3141 = vmatprep.subr.mxu0 0.0
    %3142 = vmatpush2.xpose.msra.mxu0 0.0
    %3143 = vmatprep.subr.mxu0 0.0
    %3144 = vmatpush2.xpose.msra.mxu0 0.0
    %3145 = vmatprep.subr.mxu0 0.0
    %3146 = vmatpush2.xpose.msra.mxu0 0.0
    %3147 = vmatprep.subr.mxu0 0.0
    %3148 = vmatpush2.xpose.msra.mxu0 0.0
    %3149 = vmatprep.subr.mxu0 0.0
    %3150 = vmatpush2.xpose.msra.mxu0 0.0
    %3151 = vmatprep.subr.mxu0 0.0
    %3152 = vmatpush2.xpose.msra.mxu0 0.0
    %3153 = vmatprep.subr.mxu0 0.0
    %3154 = vmatpush2.xpose.msra.mxu0 0.0
    %3155 = vmatprep.subr.mxu0 0.0
    %3156 = vmatpush2.xpose.msra.mxu0 0.0
    %3157 = vmatprep.subr.mxu0 0.0
    %3158 = vmatpush2.xpose.msra.mxu0 0.0
    %3159 = vmatprep.subr.mxu0 0.0
    %3160 = vmatpush2.xpose.msra.mxu0 0.0
    %3161 = vmatprep.subr.mxu0 0.0
    %3162 = vmatpush2.xpose.msra.mxu0 0.0
    %3163 = vmatprep.subr.mxu0 0.0
    %3164 = vmatpush2.xpose.msra.mxu0 0.0
    %3165 = vmatprep.mubr.f32.mxu0 0.0
    %v3166 = vand.u32 %v3081, 4294901760
    %v3167 = vsub.f32 %v3081, %v3166
    %v3168 = vand.u32 %v3167, 4294901760
    %v3169 = vsub.f32 %v3167, %v3168
    %v3170 = vand.u32 %v3169, 4294901760
    %3171 = vmatmul.mubr.f32.gmra.mxu0 %v3170
    %v3172 = vpop.f32.mrf.mxu0
    %v3173 = vadd.f32 0.0, %v3172
    %v3174 = vpop.f32.mrf.mxu0
    %3175 = vmatprep.mubr.f32.mxu0 0.0
    %v3176 = vand.u32 %v3082, 4294901760
    %v3177 = vsub.f32 %v3082, %v3176
    %v3178 = vand.u32 %v3177, 4294901760
    %v3179 = vsub.f32 %v3177, %v3178
    %v3180 = vand.u32 %v3179, 4294901760
    %3181 = vmatmul.mubr.f32.gmra.mxu0 %v3180
    %v3182 = vpop.f32.mrf.mxu0
    %v3183 = vadd.f32 0.0, %v3182
    %v3184 = vpop.f32.mrf.mxu0
    %3185 = vmatprep.mubr.f32.mxu0 0.0
    %v3186 = vand.u32 %v3083, 4294901760
    %v3187 = vsub.f32 %v3083, %v3186
    %v3188 = vand.u32 %v3187, 4294901760
    %v3189 = vsub.f32 %v3187, %v3188
    %v3190 = vand.u32 %v3189, 4294901760
    %3191 = vmatmul.mubr.f32.gmra.mxu0 %v3190
    %v3192 = vpop.f32.mrf.mxu0
    %v3193 = vadd.f32 0.0, %v3192
    %v3194 = vpop.f32.mrf.mxu0
    %3195 = vmatprep.mubr.f32.mxu0 0.0
    %v3196 = vand.u32 %v3084, 4294901760
    %v3197 = vsub.f32 %v3084, %v3196
    %v3198 = vand.u32 %v3197, 4294901760
    %v3199 = vsub.f32 %v3197, %v3198
    %v3200 = vand.u32 %v3199, 4294901760
    %3201 = vmatmul.mubr.f32.gmra.mxu0 %v3200
    %v3202 = vpop.f32.mrf.mxu0
    %v3203 = vadd.f32 0.0, %v3202
    %v3204 = vpop.f32.mrf.mxu0
    %3205 = vdwg.mxu0
    %3206 = vmatprep.subr.mxu0 0.0
    %v3207 = vand.u32 %v322, 4294901760
    %v3208 = vsub.f32 %v322, %v3207
    %v3209 = vand.u32 %v3208, 4294901760
    %v3210 = vsub.f32 %v3208, %v3209
    %v3211 = vand.u32 %v3210, 4294901760
    %3212 = vmatpush1.xpose.msra.mxu0 %v3211
    %3213 = vmatprep.subr.mxu0 0.0
    %v3214 = vand.u32 %v321, 4294901760
    %v3215 = vsub.f32 %v321, %v3214
    %v3216 = vand.u32 %v3215, 4294901760
    %v3217 = vsub.f32 %v3215, %v3216
    %v3218 = vand.u32 %v3217, 4294901760
    %3219 = vmatpush1.xpose.msra.mxu0 %v3218
    %3220 = vmatprep.subr.mxu0 0.0
    %v3221 = vand.u32 %v320, 4294901760
    %v3222 = vsub.f32 %v320, %v3221
    %v3223 = vand.u32 %v3222, 4294901760
    %v3224 = vsub.f32 %v3222, %v3223
    %v3225 = vand.u32 %v3224, 4294901760
    %3226 = vmatpush1.xpose.msra.mxu0 %v3225
    %3227 = vmatprep.subr.mxu0 0.0
    %v3228 = vand.u32 %v319, 4294901760
    %v3229 = vsub.f32 %v319, %v3228
    %v3230 = vand.u32 %v3229, 4294901760
    %v3231 = vsub.f32 %v3229, %v3230
    %v3232 = vand.u32 %v3231, 4294901760
    %3233 = vmatpush1.xpose.msra.mxu0 %v3232
    %3234 = vmatprep.subr.mxu0 0.0
    %v3235 = vand.u32 %v318, 4294901760
    %v3236 = vsub.f32 %v318, %v3235
    %v3237 = vand.u32 %v3236, 4294901760
    %v3238 = vsub.f32 %v3236, %v3237
    %v3239 = vand.u32 %v3238, 4294901760
    %3240 = vmatpush1.xpose.msra.mxu0 %v3239
    %3241 = vmatprep.subr.mxu0 0.0
    %v3242 = vand.u32 %v317, 4294901760
    %v3243 = vsub.f32 %v317, %v3242
    %v3244 = vand.u32 %v3243, 4294901760
    %v3245 = vsub.f32 %v3243, %v3244
    %v3246 = vand.u32 %v3245, 4294901760
    %3247 = vmatpush1.xpose.msra.mxu0 %v3246
    %3248 = vmatprep.subr.mxu0 0.0
    %v3249 = vand.u32 %v316, 4294901760
    %v3250 = vsub.f32 %v316, %v3249
    %v3251 = vand.u32 %v3250, 4294901760
    %v3252 = vsub.f32 %v3250, %v3251
    %v3253 = vand.u32 %v3252, 4294901760
    %3254 = vmatpush1.xpose.msra.mxu0 %v3253
    %3255 = vmatprep.subr.mxu0 0.0
    %v3256 = vand.u32 %v315, 4294901760
    %v3257 = vsub.f32 %v315, %v3256
    %v3258 = vand.u32 %v3257, 4294901760
    %v3259 = vsub.f32 %v3257, %v3258
    %v3260 = vand.u32 %v3259, 4294901760
    %3261 = vmatpush1.xpose.msra.mxu0 %v3260
    %3262 = vmatprep.subr.mxu0 0.0
    %v3263 = vand.u32 %v314, 4294901760
    %v3264 = vsub.f32 %v314, %v3263
    %v3265 = vand.u32 %v3264, 4294901760
    %v3266 = vsub.f32 %v3264, %v3265
    %v3267 = vand.u32 %v3266, 4294901760
    %3268 = vmatpush1.xpose.msra.mxu0 %v3267
    %3269 = vmatprep.subr.mxu0 0.0
    %v3270 = vand.u32 %v313, 4294901760
    %v3271 = vsub.f32 %v313, %v3270
    %v3272 = vand.u32 %v3271, 4294901760
    %v3273 = vsub.f32 %v3271, %v3272
    %v3274 = vand.u32 %v3273, 4294901760
    %3275 = vmatpush1.xpose.msra.mxu0 %v3274
    %3276 = vmatprep.subr.mxu0 0.0
    %v3277 = vand.u32 %v312, 4294901760
    %v3278 = vsub.f32 %v312, %v3277
    %v3279 = vand.u32 %v3278, 4294901760
    %v3280 = vsub.f32 %v3278, %v3279
    %v3281 = vand.u32 %v3280, 4294901760
    %3282 = vmatpush1.xpose.msra.mxu0 %v3281
    %3283 = vmatprep.subr.mxu0 0.0
    %v3284 = vand.u32 %v311, 4294901760
    %v3285 = vsub.f32 %v311, %v3284
    %v3286 = vand.u32 %v3285, 4294901760
    %v3287 = vsub.f32 %v3285, %v3286
    %v3288 = vand.u32 %v3287, 4294901760
    %3289 = vmatpush1.xpose.msra.mxu0 %v3288
    %3290 = vmatprep.subr.mxu0 0.0
    %v3291 = vand.u32 %v310, 4294901760
    %v3292 = vsub.f32 %v310, %v3291
    %v3293 = vand.u32 %v3292, 4294901760
    %v3294 = vsub.f32 %v3292, %v3293
    %v3295 = vand.u32 %v3294, 4294901760
    %3296 = vmatpush1.xpose.msra.mxu0 %v3295
    %3297 = vmatprep.subr.mxu0 0.0
    %v3298 = vand.u32 %v309, 4294901760
    %v3299 = vsub.f32 %v309, %v3298
    %v3300 = vand.u32 %v3299, 4294901760
    %v3301 = vsub.f32 %v3299, %v3300
    %v3302 = vand.u32 %v3301, 4294901760
    %3303 = vmatpush1.xpose.msra.mxu0 %v3302
    %3304 = vmatprep.subr.mxu0 0.0
    %v3305 = vand.u32 %v308, 4294901760
    %v3306 = vsub.f32 %v308, %v3305
    %v3307 = vand.u32 %v3306, 4294901760
    %v3308 = vsub.f32 %v3306, %v3307
    %v3309 = vand.u32 %v3308, 4294901760
    %3310 = vmatpush1.xpose.msra.mxu0 %v3309
    %3311 = vmatprep.subr.mxu0 0.0
    %v3312 = vand.u32 %v307, 4294901760
    %v3313 = vsub.f32 %v307, %v3312
    %v3314 = vand.u32 %v3313, 4294901760
    %v3315 = vsub.f32 %v3313, %v3314
    %v3316 = vand.u32 %v3315, 4294901760
    %3317 = vmatpush1.xpose.msra.mxu0 %v3316
    %3318 = vmatprep.subr.mxu0 0.0
    %3319 = vmatpush2.xpose.msra.mxu0 0.0
    %3320 = vmatprep.subr.mxu0 0.0
    %3321 = vmatpush2.xpose.msra.mxu0 0.0
    %3322 = vmatprep.subr.mxu0 0.0
    %3323 = vmatpush2.xpose.msra.mxu0 0.0
    %3324 = vmatprep.subr.mxu0 0.0
    %3325 = vmatpush2.xpose.msra.mxu0 0.0
    %3326 = vmatprep.subr.mxu0 0.0
    %3327 = vmatpush2.xpose.msra.mxu0 0.0
    %3328 = vmatprep.subr.mxu0 0.0
    %3329 = vmatpush2.xpose.msra.mxu0 0.0
    %3330 = vmatprep.subr.mxu0 0.0
    %3331 = vmatpush2.xpose.msra.mxu0 0.0
    %3332 = vmatprep.subr.mxu0 0.0
    %3333 = vmatpush2.xpose.msra.mxu0 0.0
    %3334 = vmatprep.subr.mxu0 0.0
    %3335 = vmatpush2.xpose.msra.mxu0 0.0
    %3336 = vmatprep.subr.mxu0 0.0
    %3337 = vmatpush2.xpose.msra.mxu0 0.0
    %3338 = vmatprep.subr.mxu0 0.0
    %3339 = vmatpush2.xpose.msra.mxu0 0.0
    %3340 = vmatprep.subr.mxu0 0.0
    %3341 = vmatpush2.xpose.msra.mxu0 0.0
    %3342 = vmatprep.subr.mxu0 0.0
    %3343 = vmatpush2.xpose.msra.mxu0 0.0
    %3344 = vmatprep.subr.mxu0 0.0
    %3345 = vmatpush2.xpose.msra.mxu0 0.0
    %3346 = vmatprep.subr.mxu0 0.0
    %3347 = vmatpush2.xpose.msra.mxu0 0.0
    %3348 = vmatprep.subr.mxu0 0.0
    %3349 = vmatpush2.xpose.msra.mxu0 0.0
    %3350 = vmatprep.mubr.f32.mxu0 0.0
    %v3351 = vand.u32 %v3081, 4294901760
    %3352 = vmatmul.mubr.f32.gmra.mxu0 %v3351
    %v3353 = vpop.f32.mrf.mxu0
    %v3354 = vadd.f32 %v3173, %v3353
    %v3355 = vpop.f32.mrf.mxu0
    %3356 = vmatprep.mubr.f32.mxu0 0.0
    %v3357 = vand.u32 %v3082, 4294901760
    %3358 = vmatmul.mubr.f32.gmra.mxu0 %v3357
    %v3359 = vpop.f32.mrf.mxu0
    %v3360 = vadd.f32 %v3183, %v3359
    %v3361 = vpop.f32.mrf.mxu0
    %3362 = vmatprep.mubr.f32.mxu0 0.0
    %v3363 = vand.u32 %v3083, 4294901760
    %3364 = vmatmul.mubr.f32.gmra.mxu0 %v3363
    %v3365 = vpop.f32.mrf.mxu0
    %v3366 = vadd.f32 %v3193, %v3365
    %v3367 = vpop.f32.mrf.mxu0
    %3368 = vmatprep.mubr.f32.mxu0 0.0
    %v3369 = vand.u32 %v3084, 4294901760
    %3370 = vmatmul.mubr.f32.gmra.mxu0 %v3369
    %v3371 = vpop.f32.mrf.mxu0
    %v3372 = vadd.f32 %v3203, %v3371
    %v3373 = vpop.f32.mrf.mxu0
    %3374 = vdwg.mxu0
    %3375 = vmatprep.subr.mxu0 0.0
    %v3376 = vand.u32 %v322, 4294901760
    %v3377 = vsub.f32 %v322, %v3376
    %3378 = vmatpush1.xpose.msra.mxu0 %v3377
    %3379 = vmatprep.subr.mxu0 0.0
    %v3380 = vand.u32 %v321, 4294901760
    %v3381 = vsub.f32 %v321, %v3380
    %3382 = vmatpush1.xpose.msra.mxu0 %v3381
    %3383 = vmatprep.subr.mxu0 0.0
    %v3384 = vand.u32 %v320, 4294901760
    %v3385 = vsub.f32 %v320, %v3384
    %3386 = vmatpush1.xpose.msra.mxu0 %v3385
    %3387 = vmatprep.subr.mxu0 0.0
    %v3388 = vand.u32 %v319, 4294901760
    %v3389 = vsub.f32 %v319, %v3388
    %3390 = vmatpush1.xpose.msra.mxu0 %v3389
    %3391 = vmatprep.subr.mxu0 0.0
    %v3392 = vand.u32 %v318, 4294901760
    %v3393 = vsub.f32 %v318, %v3392
    %3394 = vmatpush1.xpose.msra.mxu0 %v3393
    %3395 = vmatprep.subr.mxu0 0.0
    %v3396 = vand.u32 %v317, 4294901760
    %v3397 = vsub.f32 %v317, %v3396
    %3398 = vmatpush1.xpose.msra.mxu0 %v3397
    %3399 = vmatprep.subr.mxu0 0.0
    %v3400 = vand.u32 %v316, 4294901760
    %v3401 = vsub.f32 %v316, %v3400
    %3402 = vmatpush1.xpose.msra.mxu0 %v3401
    %3403 = vmatprep.subr.mxu0 0.0
    %v3404 = vand.u32 %v315, 4294901760
    %v3405 = vsub.f32 %v315, %v3404
    %3406 = vmatpush1.xpose.msra.mxu0 %v3405
    %3407 = vmatprep.subr.mxu0 0.0
    %v3408 = vand.u32 %v314, 4294901760
    %v3409 = vsub.f32 %v314, %v3408
    %3410 = vmatpush1.xpose.msra.mxu0 %v3409
    %3411 = vmatprep.subr.mxu0 0.0
    %v3412 = vand.u32 %v313, 4294901760
    %v3413 = vsub.f32 %v313, %v3412
    %3414 = vmatpush1.xpose.msra.mxu0 %v3413
    %3415 = vmatprep.subr.mxu0 0.0
    %v3416 = vand.u32 %v312, 4294901760
    %v3417 = vsub.f32 %v312, %v3416
    %3418 = vmatpush1.xpose.msra.mxu0 %v3417
    %3419 = vmatprep.subr.mxu0 0.0
    %v3420 = vand.u32 %v311, 4294901760
    %v3421 = vsub.f32 %v311, %v3420
    %3422 = vmatpush1.xpose.msra.mxu0 %v3421
    %3423 = vmatprep.subr.mxu0 0.0
    %v3424 = vand.u32 %v310, 4294901760
    %v3425 = vsub.f32 %v310, %v3424
    %3426 = vmatpush1.xpose.msra.mxu0 %v3425
    %3427 = vmatprep.subr.mxu0 0.0
    %v3428 = vand.u32 %v309, 4294901760
    %v3429 = vsub.f32 %v309, %v3428
    %3430 = vmatpush1.xpose.msra.mxu0 %v3429
    %3431 = vmatprep.subr.mxu0 0.0
    %v3432 = vand.u32 %v308, 4294901760
    %v3433 = vsub.f32 %v308, %v3432
    %3434 = vmatpush1.xpose.msra.mxu0 %v3433
    %3435 = vmatprep.subr.mxu0 0.0
    %v3436 = vand.u32 %v307, 4294901760
    %v3437 = vsub.f32 %v307, %v3436
    %3438 = vmatpush1.xpose.msra.mxu0 %v3437
    %3439 = vmatprep.subr.mxu0 0.0
    %3440 = vmatpush2.xpose.msra.mxu0 0.0
    %3441 = vmatprep.subr.mxu0 0.0
    %3442 = vmatpush2.xpose.msra.mxu0 0.0
    %3443 = vmatprep.subr.mxu0 0.0
    %3444 = vmatpush2.xpose.msra.mxu0 0.0
    %3445 = vmatprep.subr.mxu0 0.0
    %3446 = vmatpush2.xpose.msra.mxu0 0.0
    %3447 = vmatprep.subr.mxu0 0.0
    %3448 = vmatpush2.xpose.msra.mxu0 0.0
    %3449 = vmatprep.subr.mxu0 0.0
    %3450 = vmatpush2.xpose.msra.mxu0 0.0
    %3451 = vmatprep.subr.mxu0 0.0
    %3452 = vmatpush2.xpose.msra.mxu0 0.0
    %3453 = vmatprep.subr.mxu0 0.0
    %3454 = vmatpush2.xpose.msra.mxu0 0.0
    %3455 = vmatprep.subr.mxu0 0.0
    %3456 = vmatpush2.xpose.msra.mxu0 0.0
    %3457 = vmatprep.subr.mxu0 0.0
    %3458 = vmatpush2.xpose.msra.mxu0 0.0
    %3459 = vmatprep.subr.mxu0 0.0
    %3460 = vmatpush2.xpose.msra.mxu0 0.0
    %3461 = vmatprep.subr.mxu0 0.0
    %3462 = vmatpush2.xpose.msra.mxu0 0.0
    %3463 = vmatprep.subr.mxu0 0.0
    %3464 = vmatpush2.xpose.msra.mxu0 0.0
    %3465 = vmatprep.subr.mxu0 0.0
    %3466 = vmatpush2.xpose.msra.mxu0 0.0
    %3467 = vmatprep.subr.mxu0 0.0
    %3468 = vmatpush2.xpose.msra.mxu0 0.0
    %3469 = vmatprep.subr.mxu0 0.0
    %3470 = vmatpush2.xpose.msra.mxu0 0.0
    %3471 = vmatprep.mubr.f32.mxu0 0.0
    %v3472 = vand.u32 %v3081, 4294901760
    %v3473 = vsub.f32 %v3081, %v3472
    %3474 = vmatmul.mubr.f32.gmra.mxu0 %v3473
    %v3475 = vpop.f32.mrf.mxu0
    %v3476 = vadd.f32 %v3354, %v3475
    %v3477 = vpop.f32.mrf.mxu0
    %3478 = vmatprep.mubr.f32.mxu0 0.0
    %v3479 = vand.u32 %v3082, 4294901760
    %v3480 = vsub.f32 %v3082, %v3479
    %3481 = vmatmul.mubr.f32.gmra.mxu0 %v3480
    %v3482 = vpop.f32.mrf.mxu0
    %v3483 = vadd.f32 %v3360, %v3482
    %v3484 = vpop.f32.mrf.mxu0
    %3485 = vmatprep.mubr.f32.mxu0 0.0
    %v3486 = vand.u32 %v3083, 4294901760
    %v3487 = vsub.f32 %v3083, %v3486
    %3488 = vmatmul.mubr.f32.gmra.mxu0 %v3487
    %v3489 = vpop.f32.mrf.mxu0
    %v3490 = vadd.f32 %v3366, %v3489
    %v3491 = vpop.f32.mrf.mxu0
    %3492 = vmatprep.mubr.f32.mxu0 0.0
    %v3493 = vand.u32 %v3084, 4294901760
    %v3494 = vsub.f32 %v3084, %v3493
    %3495 = vmatmul.mubr.f32.gmra.mxu0 %v3494
    %v3496 = vpop.f32.mrf.mxu0
    %v3497 = vadd.f32 %v3372, %v3496
    %v3498 = vpop.f32.mrf.mxu0
    %3499 = vdwg.mxu0
    %3500 = vmatprep.subr.mxu0 0.0
    %v3501 = vand.u32 %v322, 4294901760
    %3502 = vmatpush1.xpose.msra.mxu0 %v3501
    %3503 = vmatprep.subr.mxu0 0.0
    %v3504 = vand.u32 %v321, 4294901760
    %3505 = vmatpush1.xpose.msra.mxu0 %v3504
    %3506 = vmatprep.subr.mxu0 0.0
    %v3507 = vand.u32 %v320, 4294901760
    %3508 = vmatpush1.xpose.msra.mxu0 %v3507
    %3509 = vmatprep.subr.mxu0 0.0
    %v3510 = vand.u32 %v319, 4294901760
    %3511 = vmatpush1.xpose.msra.mxu0 %v3510
    %3512 = vmatprep.subr.mxu0 0.0
    %v3513 = vand.u32 %v318, 4294901760
    %3514 = vmatpush1.xpose.msra.mxu0 %v3513
    %3515 = vmatprep.subr.mxu0 0.0
    %v3516 = vand.u32 %v317, 4294901760
    %3517 = vmatpush1.xpose.msra.mxu0 %v3516
    %3518 = vmatprep.subr.mxu0 0.0
    %v3519 = vand.u32 %v316, 4294901760
    %3520 = vmatpush1.xpose.msra.mxu0 %v3519
    %3521 = vmatprep.subr.mxu0 0.0
    %v3522 = vand.u32 %v315, 4294901760
    %3523 = vmatpush1.xpose.msra.mxu0 %v3522
    %3524 = vmatprep.subr.mxu0 0.0
    %v3525 = vand.u32 %v314, 4294901760
    %3526 = vmatpush1.xpose.msra.mxu0 %v3525
    %3527 = vmatprep.subr.mxu0 0.0
    %v3528 = vand.u32 %v313, 4294901760
    %3529 = vmatpush1.xpose.msra.mxu0 %v3528
    %3530 = vmatprep.subr.mxu0 0.0
    %v3531 = vand.u32 %v312, 4294901760
    %3532 = vmatpush1.xpose.msra.mxu0 %v3531
    %3533 = vmatprep.subr.mxu0 0.0
    %v3534 = vand.u32 %v311, 4294901760
    %3535 = vmatpush1.xpose.msra.mxu0 %v3534
    %3536 = vmatprep.subr.mxu0 0.0
    %v3537 = vand.u32 %v310, 4294901760
    %3538 = vmatpush1.xpose.msra.mxu0 %v3537
    %3539 = vmatprep.subr.mxu0 0.0
    %v3540 = vand.u32 %v309, 4294901760
    %3541 = vmatpush1.xpose.msra.mxu0 %v3540
    %3542 = vmatprep.subr.mxu0 0.0
    %v3543 = vand.u32 %v308, 4294901760
    %3544 = vmatpush1.xpose.msra.mxu0 %v3543
    %3545 = vmatprep.subr.mxu0 0.0
    %v3546 = vand.u32 %v307, 4294901760
    %3547 = vmatpush1.xpose.msra.mxu0 %v3546
    %3548 = vmatprep.subr.mxu0 0.0
    %3549 = vmatpush2.xpose.msra.mxu0 0.0
    %3550 = vmatprep.subr.mxu0 0.0
    %3551 = vmatpush2.xpose.msra.mxu0 0.0
    %3552 = vmatprep.subr.mxu0 0.0
    %3553 = vmatpush2.xpose.msra.mxu0 0.0
    %3554 = vmatprep.subr.mxu0 0.0
    %3555 = vmatpush2.xpose.msra.mxu0 0.0
    %3556 = vmatprep.subr.mxu0 0.0
    %3557 = vmatpush2.xpose.msra.mxu0 0.0
    %3558 = vmatprep.subr.mxu0 0.0
    %3559 = vmatpush2.xpose.msra.mxu0 0.0
    %3560 = vmatprep.subr.mxu0 0.0
    %3561 = vmatpush2.xpose.msra.mxu0 0.0
    %3562 = vmatprep.subr.mxu0 0.0
    %3563 = vmatpush2.xpose.msra.mxu0 0.0
    %3564 = vmatprep.subr.mxu0 0.0
    %3565 = vmatpush2.xpose.msra.mxu0 0.0
    %3566 = vmatprep.subr.mxu0 0.0
    %3567 = vmatpush2.xpose.msra.mxu0 0.0
    %3568 = vmatprep.subr.mxu0 0.0
    %3569 = vmatpush2.xpose.msra.mxu0 0.0
    %3570 = vmatprep.subr.mxu0 0.0
    %3571 = vmatpush2.xpose.msra.mxu0 0.0
    %3572 = vmatprep.subr.mxu0 0.0
    %3573 = vmatpush2.xpose.msra.mxu0 0.0
    %3574 = vmatprep.subr.mxu0 0.0
    %3575 = vmatpush2.xpose.msra.mxu0 0.0
    %3576 = vmatprep.subr.mxu0 0.0
    %3577 = vmatpush2.xpose.msra.mxu0 0.0
    %3578 = vmatprep.subr.mxu0 0.0
    %3579 = vmatpush2.xpose.msra.mxu0 0.0
    %3580 = vmatprep.mubr.f32.mxu0 0.0
    %v3581 = vand.u32 %v3081, 4294901760
    %v3582 = vsub.f32 %v3081, %v3581
    %v3583 = vand.u32 %v3582, 4294901760
    %3584 = vmatmul.mubr.f32.gmra.mxu0 %v3583
    %v3585 = vpop.f32.mrf.mxu0
    %v3586 = vadd.f32 %v3476, %v3585
    %v3587 = vpop.f32.mrf.mxu0
    %3588 = vmatprep.mubr.f32.mxu0 0.0
    %v3589 = vand.u32 %v3082, 4294901760
    %v3590 = vsub.f32 %v3082, %v3589
    %v3591 = vand.u32 %v3590, 4294901760
    %3592 = vmatmul.mubr.f32.gmra.mxu0 %v3591
    %v3593 = vpop.f32.mrf.mxu0
    %v3594 = vadd.f32 %v3483, %v3593
    %v3595 = vpop.f32.mrf.mxu0
    %3596 = vmatprep.mubr.f32.mxu0 0.0
    %v3597 = vand.u32 %v3083, 4294901760
    %v3598 = vsub.f32 %v3083, %v3597
    %v3599 = vand.u32 %v3598, 4294901760
    %3600 = vmatmul.mubr.f32.gmra.mxu0 %v3599
    %v3601 = vpop.f32.mrf.mxu0
    %v3602 = vadd.f32 %v3490, %v3601
    %v3603 = vpop.f32.mrf.mxu0
    %3604 = vmatprep.mubr.f32.mxu0 0.0
    %v3605 = vand.u32 %v3084, 4294901760
    %v3606 = vsub.f32 %v3084, %v3605
    %v3607 = vand.u32 %v3606, 4294901760
    %3608 = vmatmul.mubr.f32.gmra.mxu0 %v3607
    %v3609 = vpop.f32.mrf.mxu0
    %v3610 = vadd.f32 %v3497, %v3609
    %v3611 = vpop.f32.mrf.mxu0
    %3612 = vdwg.mxu0
    %3613 = vmatprep.subr.mxu0 0.0
    %v3614 = vand.u32 %v322, 4294901760
    %v3615 = vsub.f32 %v322, %v3614
    %v3616 = vand.u32 %v3615, 4294901760
    %3617 = vmatpush1.xpose.msra.mxu0 %v3616
    %3618 = vmatprep.subr.mxu0 0.0
    %v3619 = vand.u32 %v321, 4294901760
    %v3620 = vsub.f32 %v321, %v3619
    %v3621 = vand.u32 %v3620, 4294901760
    %3622 = vmatpush1.xpose.msra.mxu0 %v3621
    %3623 = vmatprep.subr.mxu0 0.0
    %v3624 = vand.u32 %v320, 4294901760
    %v3625 = vsub.f32 %v320, %v3624
    %v3626 = vand.u32 %v3625, 4294901760
    %3627 = vmatpush1.xpose.msra.mxu0 %v3626
    %3628 = vmatprep.subr.mxu0 0.0
    %v3629 = vand.u32 %v319, 4294901760
    %v3630 = vsub.f32 %v319, %v3629
    %v3631 = vand.u32 %v3630, 4294901760
    %3632 = vmatpush1.xpose.msra.mxu0 %v3631
    %3633 = vmatprep.subr.mxu0 0.0
    %v3634 = vand.u32 %v318, 4294901760
    %v3635 = vsub.f32 %v318, %v3634
    %v3636 = vand.u32 %v3635, 4294901760
    %3637 = vmatpush1.xpose.msra.mxu0 %v3636
    %3638 = vmatprep.subr.mxu0 0.0
    %v3639 = vand.u32 %v317, 4294901760
    %v3640 = vsub.f32 %v317, %v3639
    %v3641 = vand.u32 %v3640, 4294901760
    %3642 = vmatpush1.xpose.msra.mxu0 %v3641
    %3643 = vmatprep.subr.mxu0 0.0
    %v3644 = vand.u32 %v316, 4294901760
    %v3645 = vsub.f32 %v316, %v3644
    %v3646 = vand.u32 %v3645, 4294901760
    %3647 = vmatpush1.xpose.msra.mxu0 %v3646
    %3648 = vmatprep.subr.mxu0 0.0
    %v3649 = vand.u32 %v315, 4294901760
    %v3650 = vsub.f32 %v315, %v3649
    %v3651 = vand.u32 %v3650, 4294901760
    %3652 = vmatpush1.xpose.msra.mxu0 %v3651
    %3653 = vmatprep.subr.mxu0 0.0
    %v3654 = vand.u32 %v314, 4294901760
    %v3655 = vsub.f32 %v314, %v3654
    %v3656 = vand.u32 %v3655, 4294901760
    %3657 = vmatpush1.xpose.msra.mxu0 %v3656
    %3658 = vmatprep.subr.mxu0 0.0
    %v3659 = vand.u32 %v313, 4294901760
    %v3660 = vsub.f32 %v313, %v3659
    %v3661 = vand.u32 %v3660, 4294901760
    %3662 = vmatpush1.xpose.msra.mxu0 %v3661
    %3663 = vmatprep.subr.mxu0 0.0
    %v3664 = vand.u32 %v312, 4294901760
    %v3665 = vsub.f32 %v312, %v3664
    %v3666 = vand.u32 %v3665, 4294901760
    %3667 = vmatpush1.xpose.msra.mxu0 %v3666
    %3668 = vmatprep.subr.mxu0 0.0
    %v3669 = vand.u32 %v311, 4294901760
    %v3670 = vsub.f32 %v311, %v3669
    %v3671 = vand.u32 %v3670, 4294901760
    %3672 = vmatpush1.xpose.msra.mxu0 %v3671
    %3673 = vmatprep.subr.mxu0 0.0
    %v3674 = vand.u32 %v310, 4294901760
    %v3675 = vsub.f32 %v310, %v3674
    %v3676 = vand.u32 %v3675, 4294901760
    %3677 = vmatpush1.xpose.msra.mxu0 %v3676
    %3678 = vmatprep.subr.mxu0 0.0
    %v3679 = vand.u32 %v309, 4294901760
    %v3680 = vsub.f32 %v309, %v3679
    %v3681 = vand.u32 %v3680, 4294901760
    %3682 = vmatpush1.xpose.msra.mxu0 %v3681
    %3683 = vmatprep.subr.mxu0 0.0
    %v3684 = vand.u32 %v308, 4294901760
    %v3685 = vsub.f32 %v308, %v3684
    %v3686 = vand.u32 %v3685, 4294901760
    %3687 = vmatpush1.xpose.msra.mxu0 %v3686
    %3688 = vmatprep.subr.mxu0 0.0
    %v3689 = vand.u32 %v307, 4294901760
    %v3690 = vsub.f32 %v307, %v3689
    %v3691 = vand.u32 %v3690, 4294901760
    %3692 = vmatpush1.xpose.msra.mxu0 %v3691
    %3693 = vmatprep.subr.mxu0 0.0
    %3694 = vmatpush2.xpose.msra.mxu0 0.0
    %3695 = vmatprep.subr.mxu0 0.0
    %3696 = vmatpush2.xpose.msra.mxu0 0.0
    %3697 = vmatprep.subr.mxu0 0.0
    %3698 = vmatpush2.xpose.msra.mxu0 0.0
    %3699 = vmatprep.subr.mxu0 0.0
    %3700 = vmatpush2.xpose.msra.mxu0 0.0
    %3701 = vmatprep.subr.mxu0 0.0
    %3702 = vmatpush2.xpose.msra.mxu0 0.0
    %3703 = vmatprep.subr.mxu0 0.0
    %3704 = vmatpush2.xpose.msra.mxu0 0.0
    %3705 = vmatprep.subr.mxu0 0.0
    %3706 = vmatpush2.xpose.msra.mxu0 0.0
    %3707 = vmatprep.subr.mxu0 0.0
    %3708 = vmatpush2.xpose.msra.mxu0 0.0
    %3709 = vmatprep.subr.mxu0 0.0
    %3710 = vmatpush2.xpose.msra.mxu0 0.0
    %3711 = vmatprep.subr.mxu0 0.0
    %3712 = vmatpush2.xpose.msra.mxu0 0.0
    %3713 = vmatprep.subr.mxu0 0.0
    %3714 = vmatpush2.xpose.msra.mxu0 0.0
    %3715 = vmatprep.subr.mxu0 0.0
    %3716 = vmatpush2.xpose.msra.mxu0 0.0
    %3717 = vmatprep.subr.mxu0 0.0
    %3718 = vmatpush2.xpose.msra.mxu0 0.0
    %3719 = vmatprep.subr.mxu0 0.0
    %3720 = vmatpush2.xpose.msra.mxu0 0.0
    %3721 = vmatprep.subr.mxu0 0.0
    %3722 = vmatpush2.xpose.msra.mxu0 0.0
    %3723 = vmatprep.subr.mxu0 0.0
    %3724 = vmatpush2.xpose.msra.mxu0 0.0
    %3725 = vmatprep.mubr.f32.mxu0 0.0
    %v3726 = vand.u32 %v3081, 4294901760
    %3727 = vmatmul.mubr.f32.gmra.mxu0 %v3726
    %v3728 = vpop.f32.mrf.mxu0
    %v3729 = vadd.f32 %v3586, %v3728
    %v3730 = vpop.f32.mrf.mxu0
    %3731 = vmatprep.mubr.f32.mxu0 0.0
    %v3732 = vand.u32 %v3082, 4294901760
    %3733 = vmatmul.mubr.f32.gmra.mxu0 %v3732
    %v3734 = vpop.f32.mrf.mxu0
    %v3735 = vadd.f32 %v3594, %v3734
    %v3736 = vpop.f32.mrf.mxu0
    %3737 = vmatprep.mubr.f32.mxu0 0.0
    %v3738 = vand.u32 %v3083, 4294901760
    %3739 = vmatmul.mubr.f32.gmra.mxu0 %v3738
    %v3740 = vpop.f32.mrf.mxu0
    %v3741 = vadd.f32 %v3602, %v3740
    %v3742 = vpop.f32.mrf.mxu0
    %3743 = vmatprep.mubr.f32.mxu0 0.0
    %v3744 = vand.u32 %v3084, 4294901760
    %3745 = vmatmul.mubr.f32.gmra.mxu0 %v3744
    %v3746 = vpop.f32.mrf.mxu0
    %v3747 = vadd.f32 %v3610, %v3746
    %v3748 = vpop.f32.mrf.mxu0
    %3749 = vdwg.mxu0
    %3750 = vmatprep.subr.mxu0 0.0
    %v3751 = vand.u32 %v322, 4294901760
    %3752 = vmatpush1.xpose.msra.mxu0 %v3751
    %3753 = vmatprep.subr.mxu0 0.0
    %v3754 = vand.u32 %v321, 4294901760
    %3755 = vmatpush1.xpose.msra.mxu0 %v3754
    %3756 = vmatprep.subr.mxu0 0.0
    %v3757 = vand.u32 %v320, 4294901760
    %3758 = vmatpush1.xpose.msra.mxu0 %v3757
    %3759 = vmatprep.subr.mxu0 0.0
    %v3760 = vand.u32 %v319, 4294901760
    %3761 = vmatpush1.xpose.msra.mxu0 %v3760
    %3762 = vmatprep.subr.mxu0 0.0
    %v3763 = vand.u32 %v318, 4294901760
    %3764 = vmatpush1.xpose.msra.mxu0 %v3763
    %3765 = vmatprep.subr.mxu0 0.0
    %v3766 = vand.u32 %v317, 4294901760
    %3767 = vmatpush1.xpose.msra.mxu0 %v3766
    %3768 = vmatprep.subr.mxu0 0.0
    %v3769 = vand.u32 %v316, 4294901760
    %3770 = vmatpush1.xpose.msra.mxu0 %v3769
    %3771 = vmatprep.subr.mxu0 0.0
    %v3772 = vand.u32 %v315, 4294901760
    %3773 = vmatpush1.xpose.msra.mxu0 %v3772
    %3774 = vmatprep.subr.mxu0 0.0
    %v3775 = vand.u32 %v314, 4294901760
    %3776 = vmatpush1.xpose.msra.mxu0 %v3775
    %3777 = vmatprep.subr.mxu0 0.0
    %v3778 = vand.u32 %v313, 4294901760
    %3779 = vmatpush1.xpose.msra.mxu0 %v3778
    %3780 = vmatprep.subr.mxu0 0.0
    %v3781 = vand.u32 %v312, 4294901760
    %3782 = vmatpush1.xpose.msra.mxu0 %v3781
    %3783 = vmatprep.subr.mxu0 0.0
    %v3784 = vand.u32 %v311, 4294901760
    %3785 = vmatpush1.xpose.msra.mxu0 %v3784
    %3786 = vmatprep.subr.mxu0 0.0
    %v3787 = vand.u32 %v310, 4294901760
    %3788 = vmatpush1.xpose.msra.mxu0 %v3787
    %3789 = vmatprep.subr.mxu0 0.0
    %v3790 = vand.u32 %v309, 4294901760
    %3791 = vmatpush1.xpose.msra.mxu0 %v3790
    %3792 = vmatprep.subr.mxu0 0.0
    %v3793 = vand.u32 %v308, 4294901760
    %3794 = vmatpush1.xpose.msra.mxu0 %v3793
    %3795 = vmatprep.subr.mxu0 0.0
    %v3796 = vand.u32 %v307, 4294901760
    %3797 = vmatpush1.xpose.msra.mxu0 %v3796
    %3798 = vmatprep.subr.mxu0 0.0
    %3799 = vmatpush2.xpose.msra.mxu0 0.0
    %3800 = vmatprep.subr.mxu0 0.0
    %3801 = vmatpush2.xpose.msra.mxu0 0.0
    %3802 = vmatprep.subr.mxu0 0.0
    %3803 = vmatpush2.xpose.msra.mxu0 0.0
    %3804 = vmatprep.subr.mxu0 0.0
    %3805 = vmatpush2.xpose.msra.mxu0 0.0
    %3806 = vmatprep.subr.mxu0 0.0
    %3807 = vmatpush2.xpose.msra.mxu0 0.0
    %3808 = vmatprep.subr.mxu0 0.0
    %3809 = vmatpush2.xpose.msra.mxu0 0.0
    %3810 = vmatprep.subr.mxu0 0.0
    %3811 = vmatpush2.xpose.msra.mxu0 0.0
    %3812 = vmatprep.subr.mxu0 0.0
    %3813 = vmatpush2.xpose.msra.mxu0 0.0
    %3814 = vmatprep.subr.mxu0 0.0
    %3815 = vmatpush2.xpose.msra.mxu0 0.0
    %3816 = vmatprep.subr.mxu0 0.0
    %3817 = vmatpush2.xpose.msra.mxu0 0.0
    %3818 = vmatprep.subr.mxu0 0.0
    %3819 = vmatpush2.xpose.msra.mxu0 0.0
    %3820 = vmatprep.subr.mxu0 0.0
    %3821 = vmatpush2.xpose.msra.mxu0 0.0
    %3822 = vmatprep.subr.mxu0 0.0
    %3823 = vmatpush2.xpose.msra.mxu0 0.0
    %3824 = vmatprep.subr.mxu0 0.0
    %3825 = vmatpush2.xpose.msra.mxu0 0.0
    %3826 = vmatprep.subr.mxu0 0.0
    %3827 = vmatpush2.xpose.msra.mxu0 0.0
    %3828 = vmatprep.subr.mxu0 0.0
    %3829 = vmatpush2.xpose.msra.mxu0 0.0
    %3830 = vmatprep.mubr.f32.mxu0 0.0
    %v3831 = vand.u32 %v3081, 4294901760
    %3832 = vmatmul.mubr.f32.gmra.mxu0 %v3831
    %v3833 = vpop.f32.mrf.mxu0
    %v3834 = vadd.f32 %v3729, %v3833
    %v3835 = vpop.f32.mrf.mxu0
    %3836 = vmatprep.mubr.f32.mxu0 0.0
    %v3837 = vand.u32 %v3082, 4294901760
    %3838 = vmatmul.mubr.f32.gmra.mxu0 %v3837
    %v3839 = vpop.f32.mrf.mxu0
    %v3840 = vadd.f32 %v3735, %v3839
    %v3841 = vpop.f32.mrf.mxu0
    %3842 = vmatprep.mubr.f32.mxu0 0.0
    %v3843 = vand.u32 %v3083, 4294901760
    %3844 = vmatmul.mubr.f32.gmra.mxu0 %v3843
    %v3845 = vpop.f32.mrf.mxu0
    %v3846 = vadd.f32 %v3741, %v3845
    %v3847 = vpop.f32.mrf.mxu0
    %3848 = vmatprep.mubr.f32.mxu0 0.0
    %v3849 = vand.u32 %v3084, 4294901760
    %3850 = vmatmul.mubr.f32.gmra.mxu0 %v3849
    %v3851 = vpop.f32.mrf.mxu0
    %v3852 = vadd.f32 %v3747, %v3851
    %v3853 = vpop.f32.mrf.mxu0
    %3854 = vdwg.mxu0
    %3855 = vst [vmem:[#allocation2] sm:$0xff] %v3834
    %3856 = vst [vmem:[#allocation2 + $0x8] sm:$0xff] %v3840
    %3857 = vst [vmem:[#allocation2 + $0x10] sm:$0xff] %v3846
    %3858 = vst [vmem:[#allocation2 + $0x18] sm:$0xff] %v3852
    %3859 = vmatprep.subr.mxu0 0.0
    %v3860 = vand.u32 %v338, 4294901760
    %3861 = vmatpush1.xpose.msra.mxu0 %v3860
    %3862 = vmatprep.subr.mxu0 0.0
    %v3863 = vand.u32 %v337, 4294901760
    %3864 = vmatpush1.xpose.msra.mxu0 %v3863
    %3865 = vmatprep.subr.mxu0 0.0
    %v3866 = vand.u32 %v336, 4294901760
    %3867 = vmatpush1.xpose.msra.mxu0 %v3866
    %3868 = vmatprep.subr.mxu0 0.0
    %v3869 = vand.u32 %v335, 4294901760
    %3870 = vmatpush1.xpose.msra.mxu0 %v3869
    %3871 = vmatprep.subr.mxu0 0.0
    %v3872 = vand.u32 %v334, 4294901760
    %3873 = vmatpush1.xpose.msra.mxu0 %v3872
    %3874 = vmatprep.subr.mxu0 0.0
    %v3875 = vand.u32 %v333, 4294901760
    %3876 = vmatpush1.xpose.msra.mxu0 %v3875
    %3877 = vmatprep.subr.mxu0 0.0
    %v3878 = vand.u32 %v332, 4294901760
    %3879 = vmatpush1.xpose.msra.mxu0 %v3878
    %3880 = vmatprep.subr.mxu0 0.0
    %v3881 = vand.u32 %v331, 4294901760
    %3882 = vmatpush1.xpose.msra.mxu0 %v3881
    %3883 = vmatprep.subr.mxu0 0.0
    %v3884 = vand.u32 %v330, 4294901760
    %3885 = vmatpush1.xpose.msra.mxu0 %v3884
    %3886 = vmatprep.subr.mxu0 0.0
    %v3887 = vand.u32 %v329, 4294901760
    %3888 = vmatpush1.xpose.msra.mxu0 %v3887
    %3889 = vmatprep.subr.mxu0 0.0
    %v3890 = vand.u32 %v328, 4294901760
    %3891 = vmatpush1.xpose.msra.mxu0 %v3890
    %3892 = vmatprep.subr.mxu0 0.0
    %v3893 = vand.u32 %v327, 4294901760
    %3894 = vmatpush1.xpose.msra.mxu0 %v3893
    %3895 = vmatprep.subr.mxu0 0.0
    %v3896 = vand.u32 %v326, 4294901760
    %3897 = vmatpush1.xpose.msra.mxu0 %v3896
    %3898 = vmatprep.subr.mxu0 0.0
    %v3899 = vand.u32 %v325, 4294901760
    %3900 = vmatpush1.xpose.msra.mxu0 %v3899
    %3901 = vmatprep.subr.mxu0 0.0
    %v3902 = vand.u32 %v324, 4294901760
    %3903 = vmatpush1.xpose.msra.mxu0 %v3902
    %3904 = vmatprep.subr.mxu0 0.0
    %v3905 = vand.u32 %v323, 4294901760
    %3906 = vmatpush1.xpose.msra.mxu0 %v3905
    %3907 = vmatprep.subr.mxu0 0.0
    %3908 = vmatpush2.xpose.msra.mxu0 0.0
    %3909 = vmatprep.subr.mxu0 0.0
    %3910 = vmatpush2.xpose.msra.mxu0 0.0
    %3911 = vmatprep.subr.mxu0 0.0
    %3912 = vmatpush2.xpose.msra.mxu0 0.0
    %3913 = vmatprep.subr.mxu0 0.0
    %3914 = vmatpush2.xpose.msra.mxu0 0.0
    %3915 = vmatprep.subr.mxu0 0.0
    %3916 = vmatpush2.xpose.msra.mxu0 0.0
    %3917 = vmatprep.subr.mxu0 0.0
    %3918 = vmatpush2.xpose.msra.mxu0 0.0
    %3919 = vmatprep.subr.mxu0 0.0
    %3920 = vmatpush2.xpose.msra.mxu0 0.0
    %3921 = vmatprep.subr.mxu0 0.0
    %3922 = vmatpush2.xpose.msra.mxu0 0.0
    %3923 = vmatprep.subr.mxu0 0.0
    %3924 = vmatpush2.xpose.msra.mxu0 0.0
    %3925 = vmatprep.subr.mxu0 0.0
    %3926 = vmatpush2.xpose.msra.mxu0 0.0
    %3927 = vmatprep.subr.mxu0 0.0
    %3928 = vmatpush2.xpose.msra.mxu0 0.0
    %3929 = vmatprep.subr.mxu0 0.0
    %3930 = vmatpush2.xpose.msra.mxu0 0.0
    %3931 = vmatprep.subr.mxu0 0.0
    %3932 = vmatpush2.xpose.msra.mxu0 0.0
    %3933 = vmatprep.subr.mxu0 0.0
    %3934 = vmatpush2.xpose.msra.mxu0 0.0
    %3935 = vmatprep.subr.mxu0 0.0
    %3936 = vmatpush2.xpose.msra.mxu0 0.0
    %3937 = vmatprep.subr.mxu0 0.0
    %3938 = vmatpush2.xpose.msra.mxu0 0.0
    %3939 = vmatprep.mubr.f32.mxu0 0.0
    %v3940 = vand.u32 %v3081, 4294901760
    %v3941 = vsub.f32 %v3081, %v3940
    %v3942 = vand.u32 %v3941, 4294901760
    %v3943 = vsub.f32 %v3941, %v3942
    %v3944 = vand.u32 %v3943, 4294901760
    %3945 = vmatmul.mubr.f32.gmra.mxu0 %v3944
    %v3946 = vpop.f32.mrf.mxu0
    %v3947 = vadd.f32 0.0, %v3946
    %v3948 = vpop.f32.mrf.mxu0
    %3949 = vmatprep.mubr.f32.mxu0 0.0
    %v3950 = vand.u32 %v3082, 4294901760
    %v3951 = vsub.f32 %v3082, %v3950
    %v3952 = vand.u32 %v3951, 4294901760
    %v3953 = vsub.f32 %v3951, %v3952
    %v3954 = vand.u32 %v3953, 4294901760
    %3955 = vmatmul.mubr.f32.gmra.mxu0 %v3954
    %v3956 = vpop.f32.mrf.mxu0
    %v3957 = vadd.f32 0.0, %v3956
    %v3958 = vpop.f32.mrf.mxu0
    %3959 = vmatprep.mubr.f32.mxu0 0.0
    %v3960 = vand.u32 %v3083, 4294901760
    %v3961 = vsub.f32 %v3083, %v3960
    %v3962 = vand.u32 %v3961, 4294901760
    %v3963 = vsub.f32 %v3961, %v3962
    %v3964 = vand.u32 %v3963, 4294901760
    %3965 = vmatmul.mubr.f32.gmra.mxu0 %v3964
    %v3966 = vpop.f32.mrf.mxu0
    %v3967 = vadd.f32 0.0, %v3966
    %v3968 = vpop.f32.mrf.mxu0
    %3969 = vmatprep.mubr.f32.mxu0 0.0
    %v3970 = vand.u32 %v3084, 4294901760
    %v3971 = vsub.f32 %v3084, %v3970
    %v3972 = vand.u32 %v3971, 4294901760
    %v3973 = vsub.f32 %v3971, %v3972
    %v3974 = vand.u32 %v3973, 4294901760
    %3975 = vmatmul.mubr.f32.gmra.mxu0 %v3974
    %v3976 = vpop.f32.mrf.mxu0
    %v3977 = vadd.f32 0.0, %v3976
    %v3978 = vpop.f32.mrf.mxu0
    %3979 = vdwg.mxu0
    %3980 = vmatprep.subr.mxu0 0.0
    %v3981 = vand.u32 %v338, 4294901760
    %v3982 = vsub.f32 %v338, %v3981
    %v3983 = vand.u32 %v3982, 4294901760
    %v3984 = vsub.f32 %v3982, %v3983
    %v3985 = vand.u32 %v3984, 4294901760
    %3986 = vmatpush1.xpose.msra.mxu0 %v3985
    %3987 = vmatprep.subr.mxu0 0.0
    %v3988 = vand.u32 %v337, 4294901760
    %v3989 = vsub.f32 %v337, %v3988
    %v3990 = vand.u32 %v3989, 4294901760
    %v3991 = vsub.f32 %v3989, %v3990
    %v3992 = vand.u32 %v3991, 4294901760
    %3993 = vmatpush1.xpose.msra.mxu0 %v3992
    %3994 = vmatprep.subr.mxu0 0.0
    %v3995 = vand.u32 %v336, 4294901760
    %v3996 = vsub.f32 %v336, %v3995
    %v3997 = vand.u32 %v3996, 4294901760
    %v3998 = vsub.f32 %v3996, %v3997
    %v3999 = vand.u32 %v3998, 4294901760
    %4000 = vmatpush1.xpose.msra.mxu0 %v3999
    %4001 = vmatprep.subr.mxu0 0.0
    %v4002 = vand.u32 %v335, 4294901760
    %v4003 = vsub.f32 %v335, %v4002
    %v4004 = vand.u32 %v4003, 4294901760
    %v4005 = vsub.f32 %v4003, %v4004
    %v4006 = vand.u32 %v4005, 4294901760
    %4007 = vmatpush1.xpose.msra.mxu0 %v4006
    %4008 = vmatprep.subr.mxu0 0.0
    %v4009 = vand.u32 %v334, 4294901760
    %v4010 = vsub.f32 %v334, %v4009
    %v4011 = vand.u32 %v4010, 4294901760
    %v4012 = vsub.f32 %v4010, %v4011
    %v4013 = vand.u32 %v4012, 4294901760
    %4014 = vmatpush1.xpose.msra.mxu0 %v4013
    %4015 = vmatprep.subr.mxu0 0.0
    %v4016 = vand.u32 %v333, 4294901760
    %v4017 = vsub.f32 %v333, %v4016
    %v4018 = vand.u32 %v4017, 4294901760
    %v4019 = vsub.f32 %v4017, %v4018
    %v4020 = vand.u32 %v4019, 4294901760
    %4021 = vmatpush1.xpose.msra.mxu0 %v4020
    %4022 = vmatprep.subr.mxu0 0.0
    %v4023 = vand.u32 %v332, 4294901760
    %v4024 = vsub.f32 %v332, %v4023
    %v4025 = vand.u32 %v4024, 4294901760
    %v4026 = vsub.f32 %v4024, %v4025
    %v4027 = vand.u32 %v4026, 4294901760
    %4028 = vmatpush1.xpose.msra.mxu0 %v4027
    %4029 = vmatprep.subr.mxu0 0.0
    %v4030 = vand.u32 %v331, 4294901760
    %v4031 = vsub.f32 %v331, %v4030
    %v4032 = vand.u32 %v4031, 4294901760
    %v4033 = vsub.f32 %v4031, %v4032
    %v4034 = vand.u32 %v4033, 4294901760
    %4035 = vmatpush1.xpose.msra.mxu0 %v4034
    %4036 = vmatprep.subr.mxu0 0.0
    %v4037 = vand.u32 %v330, 4294901760
    %v4038 = vsub.f32 %v330, %v4037
    %v4039 = vand.u32 %v4038, 4294901760
    %v4040 = vsub.f32 %v4038, %v4039
    %v4041 = vand.u32 %v4040, 4294901760
    %4042 = vmatpush1.xpose.msra.mxu0 %v4041
    %4043 = vmatprep.subr.mxu0 0.0
    %v4044 = vand.u32 %v329, 4294901760
    %v4045 = vsub.f32 %v329, %v4044
    %v4046 = vand.u32 %v4045, 4294901760
    %v4047 = vsub.f32 %v4045, %v4046
    %v4048 = vand.u32 %v4047, 4294901760
    %4049 = vmatpush1.xpose.msra.mxu0 %v4048
    %4050 = vmatprep.subr.mxu0 0.0
    %v4051 = vand.u32 %v328, 4294901760
    %v4052 = vsub.f32 %v328, %v4051
    %v4053 = vand.u32 %v4052, 4294901760
    %v4054 = vsub.f32 %v4052, %v4053
    %v4055 = vand.u32 %v4054, 4294901760
    %4056 = vmatpush1.xpose.msra.mxu0 %v4055
    %4057 = vmatprep.subr.mxu0 0.0
    %v4058 = vand.u32 %v327, 4294901760
    %v4059 = vsub.f32 %v327, %v4058
    %v4060 = vand.u32 %v4059, 4294901760
    %v4061 = vsub.f32 %v4059, %v4060
    %v4062 = vand.u32 %v4061, 4294901760
    %4063 = vmatpush1.xpose.msra.mxu0 %v4062
    %4064 = vmatprep.subr.mxu0 0.0
    %v4065 = vand.u32 %v326, 4294901760
    %v4066 = vsub.f32 %v326, %v4065
    %v4067 = vand.u32 %v4066, 4294901760
    %v4068 = vsub.f32 %v4066, %v4067
    %v4069 = vand.u32 %v4068, 4294901760
    %4070 = vmatpush1.xpose.msra.mxu0 %v4069
    %4071 = vmatprep.subr.mxu0 0.0
    %v4072 = vand.u32 %v325, 4294901760
    %v4073 = vsub.f32 %v325, %v4072
    %v4074 = vand.u32 %v4073, 4294901760
    %v4075 = vsub.f32 %v4073, %v4074
    %v4076 = vand.u32 %v4075, 4294901760
    %4077 = vmatpush1.xpose.msra.mxu0 %v4076
    %4078 = vmatprep.subr.mxu0 0.0
    %v4079 = vand.u32 %v324, 4294901760
    %v4080 = vsub.f32 %v324, %v4079
    %v4081 = vand.u32 %v4080, 4294901760
    %v4082 = vsub.f32 %v4080, %v4081
    %v4083 = vand.u32 %v4082, 4294901760
    %4084 = vmatpush1.xpose.msra.mxu0 %v4083
    %4085 = vmatprep.subr.mxu0 0.0
    %v4086 = vand.u32 %v323, 4294901760
    %v4087 = vsub.f32 %v323, %v4086
    %v4088 = vand.u32 %v4087, 4294901760
    %v4089 = vsub.f32 %v4087, %v4088
    %v4090 = vand.u32 %v4089, 4294901760
    %4091 = vmatpush1.xpose.msra.mxu0 %v4090
    %4092 = vmatprep.subr.mxu0 0.0
    %4093 = vmatpush2.xpose.msra.mxu0 0.0
    %4094 = vmatprep.subr.mxu0 0.0
    %4095 = vmatpush2.xpose.msra.mxu0 0.0
    %4096 = vmatprep.subr.mxu0 0.0
    %4097 = vmatpush2.xpose.msra.mxu0 0.0
    %4098 = vmatprep.subr.mxu0 0.0
    %4099 = vmatpush2.xpose.msra.mxu0 0.0
    %4100 = vmatprep.subr.mxu0 0.0
    %4101 = vmatpush2.xpose.msra.mxu0 0.0
    %4102 = vmatprep.subr.mxu0 0.0
    %4103 = vmatpush2.xpose.msra.mxu0 0.0
    %4104 = vmatprep.subr.mxu0 0.0
    %4105 = vmatpush2.xpose.msra.mxu0 0.0
    %4106 = vmatprep.subr.mxu0 0.0
    %4107 = vmatpush2.xpose.msra.mxu0 0.0
    %4108 = vmatprep.subr.mxu0 0.0
    %4109 = vmatpush2.xpose.msra.mxu0 0.0
    %4110 = vmatprep.subr.mxu0 0.0
    %4111 = vmatpush2.xpose.msra.mxu0 0.0
    %4112 = vmatprep.subr.mxu0 0.0
    %4113 = vmatpush2.xpose.msra.mxu0 0.0
    %4114 = vmatprep.subr.mxu0 0.0
    %4115 = vmatpush2.xpose.msra.mxu0 0.0
    %4116 = vmatprep.subr.mxu0 0.0
    %4117 = vmatpush2.xpose.msra.mxu0 0.0
    %4118 = vmatprep.subr.mxu0 0.0
    %4119 = vmatpush2.xpose.msra.mxu0 0.0
    %4120 = vmatprep.subr.mxu0 0.0
    %4121 = vmatpush2.xpose.msra.mxu0 0.0
    %4122 = vmatprep.subr.mxu0 0.0
    %4123 = vmatpush2.xpose.msra.mxu0 0.0
    %4124 = vmatprep.mubr.f32.mxu0 0.0
    %v4125 = vand.u32 %v3081, 4294901760
    %4126 = vmatmul.mubr.f32.gmra.mxu0 %v4125
    %v4127 = vpop.f32.mrf.mxu0
    %v4128 = vadd.f32 %v3947, %v4127
    %v4129 = vpop.f32.mrf.mxu0
    %4130 = vmatprep.mubr.f32.mxu0 0.0
    %v4131 = vand.u32 %v3082, 4294901760
    %4132 = vmatmul.mubr.f32.gmra.mxu0 %v4131
    %v4133 = vpop.f32.mrf.mxu0
    %v4134 = vadd.f32 %v3957, %v4133
    %v4135 = vpop.f32.mrf.mxu0
    %4136 = vmatprep.mubr.f32.mxu0 0.0
    %v4137 = vand.u32 %v3083, 4294901760
    %4138 = vmatmul.mubr.f32.gmra.mxu0 %v4137
    %v4139 = vpop.f32.mrf.mxu0
    %v4140 = vadd.f32 %v3967, %v4139
    %v4141 = vpop.f32.mrf.mxu0
    %4142 = vmatprep.mubr.f32.mxu0 0.0
    %v4143 = vand.u32 %v3084, 4294901760
    %4144 = vmatmul.mubr.f32.gmra.mxu0 %v4143
    %v4145 = vpop.f32.mrf.mxu0
    %v4146 = vadd.f32 %v3977, %v4145
    %v4147 = vpop.f32.mrf.mxu0
    %4148 = vdwg.mxu0
    %4149 = vmatprep.subr.mxu0 0.0
    %v4150 = vand.u32 %v338, 4294901760
    %v4151 = vsub.f32 %v338, %v4150
    %4152 = vmatpush1.xpose.msra.mxu0 %v4151
    %4153 = vmatprep.subr.mxu0 0.0
    %v4154 = vand.u32 %v337, 4294901760
    %v4155 = vsub.f32 %v337, %v4154
    %4156 = vmatpush1.xpose.msra.mxu0 %v4155
    %4157 = vmatprep.subr.mxu0 0.0
    %v4158 = vand.u32 %v336, 4294901760
    %v4159 = vsub.f32 %v336, %v4158
    %4160 = vmatpush1.xpose.msra.mxu0 %v4159
    %4161 = vmatprep.subr.mxu0 0.0
    %v4162 = vand.u32 %v335, 4294901760
    %v4163 = vsub.f32 %v335, %v4162
    %4164 = vmatpush1.xpose.msra.mxu0 %v4163
    %4165 = vmatprep.subr.mxu0 0.0
    %v4166 = vand.u32 %v334, 4294901760
    %v4167 = vsub.f32 %v334, %v4166
    %4168 = vmatpush1.xpose.msra.mxu0 %v4167
    %4169 = vmatprep.subr.mxu0 0.0
    %v4170 = vand.u32 %v333, 4294901760
    %v4171 = vsub.f32 %v333, %v4170
    %4172 = vmatpush1.xpose.msra.mxu0 %v4171
    %4173 = vmatprep.subr.mxu0 0.0
    %v4174 = vand.u32 %v332, 4294901760
    %v4175 = vsub.f32 %v332, %v4174
    %4176 = vmatpush1.xpose.msra.mxu0 %v4175
    %4177 = vmatprep.subr.mxu0 0.0
    %v4178 = vand.u32 %v331, 4294901760
    %v4179 = vsub.f32 %v331, %v4178
    %4180 = vmatpush1.xpose.msra.mxu0 %v4179
    %4181 = vmatprep.subr.mxu0 0.0
    %v4182 = vand.u32 %v330, 4294901760
    %v4183 = vsub.f32 %v330, %v4182
    %4184 = vmatpush1.xpose.msra.mxu0 %v4183
    %4185 = vmatprep.subr.mxu0 0.0
    %v4186 = vand.u32 %v329, 4294901760
    %v4187 = vsub.f32 %v329, %v4186
    %4188 = vmatpush1.xpose.msra.mxu0 %v4187
    %4189 = vmatprep.subr.mxu0 0.0
    %v4190 = vand.u32 %v328, 4294901760
    %v4191 = vsub.f32 %v328, %v4190
    %4192 = vmatpush1.xpose.msra.mxu0 %v4191
    %4193 = vmatprep.subr.mxu0 0.0
    %v4194 = vand.u32 %v327, 4294901760
    %v4195 = vsub.f32 %v327, %v4194
    %4196 = vmatpush1.xpose.msra.mxu0 %v4195
    %4197 = vmatprep.subr.mxu0 0.0
    %v4198 = vand.u32 %v326, 4294901760
    %v4199 = vsub.f32 %v326, %v4198
    %4200 = vmatpush1.xpose.msra.mxu0 %v4199
    %4201 = vmatprep.subr.mxu0 0.0
    %v4202 = vand.u32 %v325, 4294901760
    %v4203 = vsub.f32 %v325, %v4202
    %4204 = vmatpush1.xpose.msra.mxu0 %v4203
    %4205 = vmatprep.subr.mxu0 0.0
    %v4206 = vand.u32 %v324, 4294901760
    %v4207 = vsub.f32 %v324, %v4206
    %4208 = vmatpush1.xpose.msra.mxu0 %v4207
    %4209 = vmatprep.subr.mxu0 0.0
    %v4210 = vand.u32 %v323, 4294901760
    %v4211 = vsub.f32 %v323, %v4210
    %4212 = vmatpush1.xpose.msra.mxu0 %v4211
    %4213 = vmatprep.subr.mxu0 0.0
    %4214 = vmatpush2.xpose.msra.mxu0 0.0
    %4215 = vmatprep.subr.mxu0 0.0
    %4216 = vmatpush2.xpose.msra.mxu0 0.0
    %4217 = vmatprep.subr.mxu0 0.0
    %4218 = vmatpush2.xpose.msra.mxu0 0.0
    %4219 = vmatprep.subr.mxu0 0.0
    %4220 = vmatpush2.xpose.msra.mxu0 0.0
    %4221 = vmatprep.subr.mxu0 0.0
    %4222 = vmatpush2.xpose.msra.mxu0 0.0
    %4223 = vmatprep.subr.mxu0 0.0
    %4224 = vmatpush2.xpose.msra.mxu0 0.0
    %4225 = vmatprep.subr.mxu0 0.0
    %4226 = vmatpush2.xpose.msra.mxu0 0.0
    %4227 = vmatprep.subr.mxu0 0.0
    %4228 = vmatpush2.xpose.msra.mxu0 0.0
    %4229 = vmatprep.subr.mxu0 0.0
    %4230 = vmatpush2.xpose.msra.mxu0 0.0
    %4231 = vmatprep.subr.mxu0 0.0
    %4232 = vmatpush2.xpose.msra.mxu0 0.0
    %4233 = vmatprep.subr.mxu0 0.0
    %4234 = vmatpush2.xpose.msra.mxu0 0.0
    %4235 = vmatprep.subr.mxu0 0.0
    %4236 = vmatpush2.xpose.msra.mxu0 0.0
    %4237 = vmatprep.subr.mxu0 0.0
    %4238 = vmatpush2.xpose.msra.mxu0 0.0
    %4239 = vmatprep.subr.mxu0 0.0
    %4240 = vmatpush2.xpose.msra.mxu0 0.0
    %4241 = vmatprep.subr.mxu0 0.0
    %4242 = vmatpush2.xpose.msra.mxu0 0.0
    %4243 = vmatprep.subr.mxu0 0.0
    %4244 = vmatpush2.xpose.msra.mxu0 0.0
    %4245 = vmatprep.mubr.f32.mxu0 0.0
    %v4246 = vand.u32 %v3081, 4294901760
    %v4247 = vsub.f32 %v3081, %v4246
    %4248 = vmatmul.mubr.f32.gmra.mxu0 %v4247
    %v4249 = vpop.f32.mrf.mxu0
    %v4250 = vadd.f32 %v4128, %v4249
    %v4251 = vpop.f32.mrf.mxu0
    %4252 = vmatprep.mubr.f32.mxu0 0.0
    %v4253 = vand.u32 %v3082, 4294901760
    %v4254 = vsub.f32 %v3082, %v4253
    %4255 = vmatmul.mubr.f32.gmra.mxu0 %v4254
    %v4256 = vpop.f32.mrf.mxu0
    %v4257 = vadd.f32 %v4134, %v4256
    %v4258 = vpop.f32.mrf.mxu0
    %4259 = vmatprep.mubr.f32.mxu0 0.0
    %v4260 = vand.u32 %v3083, 4294901760
    %v4261 = vsub.f32 %v3083, %v4260
    %4262 = vmatmul.mubr.f32.gmra.mxu0 %v4261
    %v4263 = vpop.f32.mrf.mxu0
    %v4264 = vadd.f32 %v4140, %v4263
    %v4265 = vpop.f32.mrf.mxu0
    %4266 = vmatprep.mubr.f32.mxu0 0.0
    %v4267 = vand.u32 %v3084, 4294901760
    %v4268 = vsub.f32 %v3084, %v4267
    %4269 = vmatmul.mubr.f32.gmra.mxu0 %v4268
    %v4270 = vpop.f32.mrf.mxu0
    %v4271 = vadd.f32 %v4146, %v4270
    %v4272 = vpop.f32.mrf.mxu0
    %4273 = vdwg.mxu0
    %4274 = vmatprep.subr.mxu0 0.0
    %v4275 = vand.u32 %v338, 4294901760
    %4276 = vmatpush1.xpose.msra.mxu0 %v4275
    %4277 = vmatprep.subr.mxu0 0.0
    %v4278 = vand.u32 %v337, 4294901760
    %4279 = vmatpush1.xpose.msra.mxu0 %v4278
    %4280 = vmatprep.subr.mxu0 0.0
    %v4281 = vand.u32 %v336, 4294901760
    %4282 = vmatpush1.xpose.msra.mxu0 %v4281
    %4283 = vmatprep.subr.mxu0 0.0
    %v4284 = vand.u32 %v335, 4294901760
    %4285 = vmatpush1.xpose.msra.mxu0 %v4284
    %4286 = vmatprep.subr.mxu0 0.0
    %v4287 = vand.u32 %v334, 4294901760
    %4288 = vmatpush1.xpose.msra.mxu0 %v4287
    %4289 = vmatprep.subr.mxu0 0.0
    %v4290 = vand.u32 %v333, 4294901760
    %4291 = vmatpush1.xpose.msra.mxu0 %v4290
    %4292 = vmatprep.subr.mxu0 0.0
    %v4293 = vand.u32 %v332, 4294901760
    %4294 = vmatpush1.xpose.msra.mxu0 %v4293
    %4295 = vmatprep.subr.mxu0 0.0
    %v4296 = vand.u32 %v331, 4294901760
    %4297 = vmatpush1.xpose.msra.mxu0 %v4296
    %4298 = vmatprep.subr.mxu0 0.0
    %v4299 = vand.u32 %v330, 4294901760
    %4300 = vmatpush1.xpose.msra.mxu0 %v4299
    %4301 = vmatprep.subr.mxu0 0.0
    %v4302 = vand.u32 %v329, 4294901760
    %4303 = vmatpush1.xpose.msra.mxu0 %v4302
    %4304 = vmatprep.subr.mxu0 0.0
    %v4305 = vand.u32 %v328, 4294901760
    %4306 = vmatpush1.xpose.msra.mxu0 %v4305
    %4307 = vmatprep.subr.mxu0 0.0
    %v4308 = vand.u32 %v327, 4294901760
    %4309 = vmatpush1.xpose.msra.mxu0 %v4308
    %4310 = vmatprep.subr.mxu0 0.0
    %v4311 = vand.u32 %v326, 4294901760
    %4312 = vmatpush1.xpose.msra.mxu0 %v4311
    %4313 = vmatprep.subr.mxu0 0.0
    %v4314 = vand.u32 %v325, 4294901760
    %4315 = vmatpush1.xpose.msra.mxu0 %v4314
    %4316 = vmatprep.subr.mxu0 0.0
    %v4317 = vand.u32 %v324, 4294901760
    %4318 = vmatpush1.xpose.msra.mxu0 %v4317
    %4319 = vmatprep.subr.mxu0 0.0
    %v4320 = vand.u32 %v323, 4294901760
    %4321 = vmatpush1.xpose.msra.mxu0 %v4320
    %4322 = vmatprep.subr.mxu0 0.0
    %4323 = vmatpush2.xpose.msra.mxu0 0.0
    %4324 = vmatprep.subr.mxu0 0.0
    %4325 = vmatpush2.xpose.msra.mxu0 0.0
    %4326 = vmatprep.subr.mxu0 0.0
    %4327 = vmatpush2.xpose.msra.mxu0 0.0
    %4328 = vmatprep.subr.mxu0 0.0
    %4329 = vmatpush2.xpose.msra.mxu0 0.0
    %4330 = vmatprep.subr.mxu0 0.0
    %4331 = vmatpush2.xpose.msra.mxu0 0.0
    %4332 = vmatprep.subr.mxu0 0.0
    %4333 = vmatpush2.xpose.msra.mxu0 0.0
    %4334 = vmatprep.subr.mxu0 0.0
    %4335 = vmatpush2.xpose.msra.mxu0 0.0
    %4336 = vmatprep.subr.mxu0 0.0
    %4337 = vmatpush2.xpose.msra.mxu0 0.0
    %4338 = vmatprep.subr.mxu0 0.0
    %4339 = vmatpush2.xpose.msra.mxu0 0.0
    %4340 = vmatprep.subr.mxu0 0.0
    %4341 = vmatpush2.xpose.msra.mxu0 0.0
    %4342 = vmatprep.subr.mxu0 0.0
    %4343 = vmatpush2.xpose.msra.mxu0 0.0
    %4344 = vmatprep.subr.mxu0 0.0
    %4345 = vmatpush2.xpose.msra.mxu0 0.0
    %4346 = vmatprep.subr.mxu0 0.0
    %4347 = vmatpush2.xpose.msra.mxu0 0.0
    %4348 = vmatprep.subr.mxu0 0.0
    %4349 = vmatpush2.xpose.msra.mxu0 0.0
    %4350 = vmatprep.subr.mxu0 0.0
    %4351 = vmatpush2.xpose.msra.mxu0 0.0
    %4352 = vmatprep.subr.mxu0 0.0
    %4353 = vmatpush2.xpose.msra.mxu0 0.0
    %4354 = vmatprep.mubr.f32.mxu0 0.0
    %v4355 = vand.u32 %v3081, 4294901760
    %v4356 = vsub.f32 %v3081, %v4355
    %v4357 = vand.u32 %v4356, 4294901760
    %4358 = vmatmul.mubr.f32.gmra.mxu0 %v4357
    %v4359 = vpop.f32.mrf.mxu0
    %v4360 = vadd.f32 %v4250, %v4359
    %v4361 = vpop.f32.mrf.mxu0
    %4362 = vmatprep.mubr.f32.mxu0 0.0
    %v4363 = vand.u32 %v3082, 4294901760
    %v4364 = vsub.f32 %v3082, %v4363
    %v4365 = vand.u32 %v4364, 4294901760
    %4366 = vmatmul.mubr.f32.gmra.mxu0 %v4365
    %v4367 = vpop.f32.mrf.mxu0
    %v4368 = vadd.f32 %v4257, %v4367
    %v4369 = vpop.f32.mrf.mxu0
    %4370 = vmatprep.mubr.f32.mxu0 0.0
    %v4371 = vand.u32 %v3083, 4294901760
    %v4372 = vsub.f32 %v3083, %v4371
    %v4373 = vand.u32 %v4372, 4294901760
    %4374 = vmatmul.mubr.f32.gmra.mxu0 %v4373
    %v4375 = vpop.f32.mrf.mxu0
    %v4376 = vadd.f32 %v4264, %v4375
    %v4377 = vpop.f32.mrf.mxu0
    %4378 = vmatprep.mubr.f32.mxu0 0.0
    %v4379 = vand.u32 %v3084, 4294901760
    %v4380 = vsub.f32 %v3084, %v4379
    %v4381 = vand.u32 %v4380, 4294901760
    %4382 = vmatmul.mubr.f32.gmra.mxu0 %v4381
    %v4383 = vpop.f32.mrf.mxu0
    %v4384 = vadd.f32 %v4271, %v4383
    %v4385 = vpop.f32.mrf.mxu0
    %4386 = vdwg.mxu0
    %4387 = vmatprep.subr.mxu0 0.0
    %v4388 = vand.u32 %v338, 4294901760
    %v4389 = vsub.f32 %v338, %v4388
    %v4390 = vand.u32 %v4389, 4294901760
    %4391 = vmatpush1.xpose.msra.mxu0 %v4390
    %4392 = vmatprep.subr.mxu0 0.0
    %v4393 = vand.u32 %v337, 4294901760
    %v4394 = vsub.f32 %v337, %v4393
    %v4395 = vand.u32 %v4394, 4294901760
    %4396 = vmatpush1.xpose.msra.mxu0 %v4395
    %4397 = vmatprep.subr.mxu0 0.0
    %v4398 = vand.u32 %v336, 4294901760
    %v4399 = vsub.f32 %v336, %v4398
    %v4400 = vand.u32 %v4399, 4294901760
    %4401 = vmatpush1.xpose.msra.mxu0 %v4400
    %4402 = vmatprep.subr.mxu0 0.0
    %v4403 = vand.u32 %v335, 4294901760
    %v4404 = vsub.f32 %v335, %v4403
    %v4405 = vand.u32 %v4404, 4294901760
    %4406 = vmatpush1.xpose.msra.mxu0 %v4405
    %4407 = vmatprep.subr.mxu0 0.0
    %v4408 = vand.u32 %v334, 4294901760
    %v4409 = vsub.f32 %v334, %v4408
    %v4410 = vand.u32 %v4409, 4294901760
    %4411 = vmatpush1.xpose.msra.mxu0 %v4410
    %4412 = vmatprep.subr.mxu0 0.0
    %v4413 = vand.u32 %v333, 4294901760
    %v4414 = vsub.f32 %v333, %v4413
    %v4415 = vand.u32 %v4414, 4294901760
    %4416 = vmatpush1.xpose.msra.mxu0 %v4415
    %4417 = vmatprep.subr.mxu0 0.0
    %v4418 = vand.u32 %v332, 4294901760
    %v4419 = vsub.f32 %v332, %v4418
    %v4420 = vand.u32 %v4419, 4294901760
    %4421 = vmatpush1.xpose.msra.mxu0 %v4420
    %4422 = vmatprep.subr.mxu0 0.0
    %v4423 = vand.u32 %v331, 4294901760
    %v4424 = vsub.f32 %v331, %v4423
    %v4425 = vand.u32 %v4424, 4294901760
    %4426 = vmatpush1.xpose.msra.mxu0 %v4425
    %4427 = vmatprep.subr.mxu0 0.0
    %v4428 = vand.u32 %v330, 4294901760
    %v4429 = vsub.f32 %v330, %v4428
    %v4430 = vand.u32 %v4429, 4294901760
    %4431 = vmatpush1.xpose.msra.mxu0 %v4430
    %4432 = vmatprep.subr.mxu0 0.0
    %v4433 = vand.u32 %v329, 4294901760
    %v4434 = vsub.f32 %v329, %v4433
    %v4435 = vand.u32 %v4434, 4294901760
    %4436 = vmatpush1.xpose.msra.mxu0 %v4435
    %4437 = vmatprep.subr.mxu0 0.0
    %v4438 = vand.u32 %v328, 4294901760
    %v4439 = vsub.f32 %v328, %v4438
    %v4440 = vand.u32 %v4439, 4294901760
    %4441 = vmatpush1.xpose.msra.mxu0 %v4440
    %4442 = vmatprep.subr.mxu0 0.0
    %v4443 = vand.u32 %v327, 4294901760
    %v4444 = vsub.f32 %v327, %v4443
    %v4445 = vand.u32 %v4444, 4294901760
    %4446 = vmatpush1.xpose.msra.mxu0 %v4445
    %4447 = vmatprep.subr.mxu0 0.0
    %v4448 = vand.u32 %v326, 4294901760
    %v4449 = vsub.f32 %v326, %v4448
    %v4450 = vand.u32 %v4449, 4294901760
    %4451 = vmatpush1.xpose.msra.mxu0 %v4450
    %4452 = vmatprep.subr.mxu0 0.0
    %v4453 = vand.u32 %v325, 4294901760
    %v4454 = vsub.f32 %v325, %v4453
    %v4455 = vand.u32 %v4454, 4294901760
    %4456 = vmatpush1.xpose.msra.mxu0 %v4455
    %4457 = vmatprep.subr.mxu0 0.0
    %v4458 = vand.u32 %v324, 4294901760
    %v4459 = vsub.f32 %v324, %v4458
    %v4460 = vand.u32 %v4459, 4294901760
    %4461 = vmatpush1.xpose.msra.mxu0 %v4460
    %4462 = vmatprep.subr.mxu0 0.0
    %v4463 = vand.u32 %v323, 4294901760
    %v4464 = vsub.f32 %v323, %v4463
    %v4465 = vand.u32 %v4464, 4294901760
    %4466 = vmatpush1.xpose.msra.mxu0 %v4465
    %4467 = vmatprep.subr.mxu0 0.0
    %4468 = vmatpush2.xpose.msra.mxu0 0.0
    %4469 = vmatprep.subr.mxu0 0.0
    %4470 = vmatpush2.xpose.msra.mxu0 0.0
    %4471 = vmatprep.subr.mxu0 0.0
    %4472 = vmatpush2.xpose.msra.mxu0 0.0
    %4473 = vmatprep.subr.mxu0 0.0
    %4474 = vmatpush2.xpose.msra.mxu0 0.0
    %4475 = vmatprep.subr.mxu0 0.0
    %4476 = vmatpush2.xpose.msra.mxu0 0.0
    %4477 = vmatprep.subr.mxu0 0.0
    %4478 = vmatpush2.xpose.msra.mxu0 0.0
    %4479 = vmatprep.subr.mxu0 0.0
    %4480 = vmatpush2.xpose.msra.mxu0 0.0
    %4481 = vmatprep.subr.mxu0 0.0
    %4482 = vmatpush2.xpose.msra.mxu0 0.0
    %4483 = vmatprep.subr.mxu0 0.0
    %4484 = vmatpush2.xpose.msra.mxu0 0.0
    %4485 = vmatprep.subr.mxu0 0.0
    %4486 = vmatpush2.xpose.msra.mxu0 0.0
    %4487 = vmatprep.subr.mxu0 0.0
    %4488 = vmatpush2.xpose.msra.mxu0 0.0
    %4489 = vmatprep.subr.mxu0 0.0
    %4490 = vmatpush2.xpose.msra.mxu0 0.0
    %4491 = vmatprep.subr.mxu0 0.0
    %4492 = vmatpush2.xpose.msra.mxu0 0.0
    %4493 = vmatprep.subr.mxu0 0.0
    %4494 = vmatpush2.xpose.msra.mxu0 0.0
    %4495 = vmatprep.subr.mxu0 0.0
    %4496 = vmatpush2.xpose.msra.mxu0 0.0
    %4497 = vmatprep.subr.mxu0 0.0
    %4498 = vmatpush2.xpose.msra.mxu0 0.0
    %4499 = vmatprep.mubr.f32.mxu0 0.0
    %v4500 = vand.u32 %v3081, 4294901760
    %4501 = vmatmul.mubr.f32.gmra.mxu0 %v4500
    %v4502 = vpop.f32.mrf.mxu0
    %v4503 = vadd.f32 %v4360, %v4502
    %v4504 = vpop.f32.mrf.mxu0
    %4505 = vmatprep.mubr.f32.mxu0 0.0
    %v4506 = vand.u32 %v3082, 4294901760
    %4507 = vmatmul.mubr.f32.gmra.mxu0 %v4506
    %v4508 = vpop.f32.mrf.mxu0
    %v4509 = vadd.f32 %v4368, %v4508
    %v4510 = vpop.f32.mrf.mxu0
    %4511 = vmatprep.mubr.f32.mxu0 0.0
    %v4512 = vand.u32 %v3083, 4294901760
    %4513 = vmatmul.mubr.f32.gmra.mxu0 %v4512
    %v4514 = vpop.f32.mrf.mxu0
    %v4515 = vadd.f32 %v4376, %v4514
    %v4516 = vpop.f32.mrf.mxu0
    %4517 = vmatprep.mubr.f32.mxu0 0.0
    %v4518 = vand.u32 %v3084, 4294901760
    %4519 = vmatmul.mubr.f32.gmra.mxu0 %v4518
    %v4520 = vpop.f32.mrf.mxu0
    %v4521 = vadd.f32 %v4384, %v4520
    %v4522 = vpop.f32.mrf.mxu0
    %4523 = vdwg.mxu0
    %4524 = vmatprep.subr.mxu0 0.0
    %v4525 = vand.u32 %v338, 4294901760
    %4526 = vmatpush1.xpose.msra.mxu0 %v4525
    %4527 = vmatprep.subr.mxu0 0.0
    %v4528 = vand.u32 %v337, 4294901760
    %4529 = vmatpush1.xpose.msra.mxu0 %v4528
    %4530 = vmatprep.subr.mxu0 0.0
    %v4531 = vand.u32 %v336, 4294901760
    %4532 = vmatpush1.xpose.msra.mxu0 %v4531
    %4533 = vmatprep.subr.mxu0 0.0
    %v4534 = vand.u32 %v335, 4294901760
    %4535 = vmatpush1.xpose.msra.mxu0 %v4534
    %4536 = vmatprep.subr.mxu0 0.0
    %v4537 = vand.u32 %v334, 4294901760
    %4538 = vmatpush1.xpose.msra.mxu0 %v4537
    %4539 = vmatprep.subr.mxu0 0.0
    %v4540 = vand.u32 %v333, 4294901760
    %4541 = vmatpush1.xpose.msra.mxu0 %v4540
    %4542 = vmatprep.subr.mxu0 0.0
    %v4543 = vand.u32 %v332, 4294901760
    %4544 = vmatpush1.xpose.msra.mxu0 %v4543
    %4545 = vmatprep.subr.mxu0 0.0
    %v4546 = vand.u32 %v331, 4294901760
    %4547 = vmatpush1.xpose.msra.mxu0 %v4546
    %4548 = vmatprep.subr.mxu0 0.0
    %v4549 = vand.u32 %v330, 4294901760
    %4550 = vmatpush1.xpose.msra.mxu0 %v4549
    %4551 = vmatprep.subr.mxu0 0.0
    %v4552 = vand.u32 %v329, 4294901760
    %4553 = vmatpush1.xpose.msra.mxu0 %v4552
    %4554 = vmatprep.subr.mxu0 0.0
    %v4555 = vand.u32 %v328, 4294901760
    %4556 = vmatpush1.xpose.msra.mxu0 %v4555
    %4557 = vmatprep.subr.mxu0 0.0
    %v4558 = vand.u32 %v327, 4294901760
    %4559 = vmatpush1.xpose.msra.mxu0 %v4558
    %4560 = vmatprep.subr.mxu0 0.0
    %v4561 = vand.u32 %v326, 4294901760
    %4562 = vmatpush1.xpose.msra.mxu0 %v4561
    %4563 = vmatprep.subr.mxu0 0.0
    %v4564 = vand.u32 %v325, 4294901760
    %4565 = vmatpush1.xpose.msra.mxu0 %v4564
    %4566 = vmatprep.subr.mxu0 0.0
    %v4567 = vand.u32 %v324, 4294901760
    %4568 = vmatpush1.xpose.msra.mxu0 %v4567
    %4569 = vmatprep.subr.mxu0 0.0
    %v4570 = vand.u32 %v323, 4294901760
    %4571 = vmatpush1.xpose.msra.mxu0 %v4570
    %4572 = vmatprep.subr.mxu0 0.0
    %4573 = vmatpush2.xpose.msra.mxu0 0.0
    %4574 = vmatprep.subr.mxu0 0.0
    %4575 = vmatpush2.xpose.msra.mxu0 0.0
    %4576 = vmatprep.subr.mxu0 0.0
    %4577 = vmatpush2.xpose.msra.mxu0 0.0
    %4578 = vmatprep.subr.mxu0 0.0
    %4579 = vmatpush2.xpose.msra.mxu0 0.0
    %4580 = vmatprep.subr.mxu0 0.0
    %4581 = vmatpush2.xpose.msra.mxu0 0.0
    %4582 = vmatprep.subr.mxu0 0.0
    %4583 = vmatpush2.xpose.msra.mxu0 0.0
    %4584 = vmatprep.subr.mxu0 0.0
    %4585 = vmatpush2.xpose.msra.mxu0 0.0
    %4586 = vmatprep.subr.mxu0 0.0
    %4587 = vmatpush2.xpose.msra.mxu0 0.0
    %4588 = vmatprep.subr.mxu0 0.0
    %4589 = vmatpush2.xpose.msra.mxu0 0.0
    %4590 = vmatprep.subr.mxu0 0.0
    %4591 = vmatpush2.xpose.msra.mxu0 0.0
    %4592 = vmatprep.subr.mxu0 0.0
    %4593 = vmatpush2.xpose.msra.mxu0 0.0
    %4594 = vmatprep.subr.mxu0 0.0
    %4595 = vmatpush2.xpose.msra.mxu0 0.0
    %4596 = vmatprep.subr.mxu0 0.0
    %4597 = vmatpush2.xpose.msra.mxu0 0.0
    %4598 = vmatprep.subr.mxu0 0.0
    %4599 = vmatpush2.xpose.msra.mxu0 0.0
    %4600 = vmatprep.subr.mxu0 0.0
    %4601 = vmatpush2.xpose.msra.mxu0 0.0
    %4602 = vmatprep.subr.mxu0 0.0
    %4603 = vmatpush2.xpose.msra.mxu0 0.0
    %4604 = vmatprep.mubr.f32.mxu0 0.0
    %v4605 = vand.u32 %v3081, 4294901760
    %4606 = vmatmul.mubr.f32.gmra.mxu0 %v4605
    %v4607 = vpop.f32.mrf.mxu0
    %v4608 = vadd.f32 %v4503, %v4607
    %v4609 = vpop.f32.mrf.mxu0
    %4610 = vmatprep.mubr.f32.mxu0 0.0
    %v4611 = vand.u32 %v3082, 4294901760
    %4612 = vmatmul.mubr.f32.gmra.mxu0 %v4611
    %v4613 = vpop.f32.mrf.mxu0
    %v4614 = vadd.f32 %v4509, %v4613
    %v4615 = vpop.f32.mrf.mxu0
    %4616 = vmatprep.mubr.f32.mxu0 0.0
    %v4617 = vand.u32 %v3083, 4294901760
    %4618 = vmatmul.mubr.f32.gmra.mxu0 %v4617
    %v4619 = vpop.f32.mrf.mxu0
    %v4620 = vadd.f32 %v4515, %v4619
    %v4621 = vpop.f32.mrf.mxu0
    %4622 = vmatprep.mubr.f32.mxu0 0.0
    %v4623 = vand.u32 %v3084, 4294901760
    %4624 = vmatmul.mubr.f32.gmra.mxu0 %v4623
    %v4625 = vpop.f32.mrf.mxu0
    %v4626 = vadd.f32 %v4521, %v4625
    %v4627 = vpop.f32.mrf.mxu0
    %4628 = vdwg.mxu0
    %s4629 = scalar_lea.vmem [#allocation2], 32
    %4630 = vst [vmem:[%s4629] sm:$0xff] %v4608
    %4631 = vst [vmem:[%s4629 + $0x8] sm:$0xff] %v4614
    %4632 = vst [vmem:[%s4629 + $0x10] sm:$0xff] %v4620
    %4633 = vst [vmem:[%s4629 + $0x18] sm:$0xff] %v4626
    %4634 = vmatprep.subr.mxu0 0.0
    %v4635 = vand.u32 %v354, 4294901760
    %4636 = vmatpush1.xpose.msra.mxu0 %v4635
    %4637 = vmatprep.subr.mxu0 0.0
    %v4638 = vand.u32 %v353, 4294901760
    %4639 = vmatpush1.xpose.msra.mxu0 %v4638
    %4640 = vmatprep.subr.mxu0 0.0
    %v4641 = vand.u32 %v352, 4294901760
    %4642 = vmatpush1.xpose.msra.mxu0 %v4641
    %4643 = vmatprep.subr.mxu0 0.0
    %v4644 = vand.u32 %v351, 4294901760
    %4645 = vmatpush1.xpose.msra.mxu0 %v4644
    %4646 = vmatprep.subr.mxu0 0.0
    %v4647 = vand.u32 %v350, 4294901760
    %4648 = vmatpush1.xpose.msra.mxu0 %v4647
    %4649 = vmatprep.subr.mxu0 0.0
    %v4650 = vand.u32 %v349, 4294901760
    %4651 = vmatpush1.xpose.msra.mxu0 %v4650
    %4652 = vmatprep.subr.mxu0 0.0
    %v4653 = vand.u32 %v348, 4294901760
    %4654 = vmatpush1.xpose.msra.mxu0 %v4653
    %4655 = vmatprep.subr.mxu0 0.0
    %v4656 = vand.u32 %v347, 4294901760
    %4657 = vmatpush1.xpose.msra.mxu0 %v4656
    %4658 = vmatprep.subr.mxu0 0.0
    %v4659 = vand.u32 %v346, 4294901760
    %4660 = vmatpush1.xpose.msra.mxu0 %v4659
    %4661 = vmatprep.subr.mxu0 0.0
    %v4662 = vand.u32 %v345, 4294901760
    %4663 = vmatpush1.xpose.msra.mxu0 %v4662
    %4664 = vmatprep.subr.mxu0 0.0
    %v4665 = vand.u32 %v344, 4294901760
    %4666 = vmatpush1.xpose.msra.mxu0 %v4665
    %4667 = vmatprep.subr.mxu0 0.0
    %v4668 = vand.u32 %v343, 4294901760
    %4669 = vmatpush1.xpose.msra.mxu0 %v4668
    %4670 = vmatprep.subr.mxu0 0.0
    %v4671 = vand.u32 %v342, 4294901760
    %4672 = vmatpush1.xpose.msra.mxu0 %v4671
    %4673 = vmatprep.subr.mxu0 0.0
    %v4674 = vand.u32 %v341, 4294901760
    %4675 = vmatpush1.xpose.msra.mxu0 %v4674
    %4676 = vmatprep.subr.mxu0 0.0
    %v4677 = vand.u32 %v340, 4294901760
    %4678 = vmatpush1.xpose.msra.mxu0 %v4677
    %4679 = vmatprep.subr.mxu0 0.0
    %v4680 = vand.u32 %v339, 4294901760
    %4681 = vmatpush1.xpose.msra.mxu0 %v4680
    %4682 = vmatprep.subr.mxu0 0.0
    %4683 = vmatpush2.xpose.msra.mxu0 0.0
    %4684 = vmatprep.subr.mxu0 0.0
    %4685 = vmatpush2.xpose.msra.mxu0 0.0
    %4686 = vmatprep.subr.mxu0 0.0
    %4687 = vmatpush2.xpose.msra.mxu0 0.0
    %4688 = vmatprep.subr.mxu0 0.0
    %4689 = vmatpush2.xpose.msra.mxu0 0.0
    %4690 = vmatprep.subr.mxu0 0.0
    %4691 = vmatpush2.xpose.msra.mxu0 0.0
    %4692 = vmatprep.subr.mxu0 0.0
    %4693 = vmatpush2.xpose.msra.mxu0 0.0
    %4694 = vmatprep.subr.mxu0 0.0
    %4695 = vmatpush2.xpose.msra.mxu0 0.0
    %4696 = vmatprep.subr.mxu0 0.0
    %4697 = vmatpush2.xpose.msra.mxu0 0.0
    %4698 = vmatprep.subr.mxu0 0.0
    %4699 = vmatpush2.xpose.msra.mxu0 0.0
    %4700 = vmatprep.subr.mxu0 0.0
    %4701 = vmatpush2.xpose.msra.mxu0 0.0
    %4702 = vmatprep.subr.mxu0 0.0
    %4703 = vmatpush2.xpose.msra.mxu0 0.0
    %4704 = vmatprep.subr.mxu0 0.0
    %4705 = vmatpush2.xpose.msra.mxu0 0.0
    %4706 = vmatprep.subr.mxu0 0.0
    %4707 = vmatpush2.xpose.msra.mxu0 0.0
    %4708 = vmatprep.subr.mxu0 0.0
    %4709 = vmatpush2.xpose.msra.mxu0 0.0
    %4710 = vmatprep.subr.mxu0 0.0
    %4711 = vmatpush2.xpose.msra.mxu0 0.0
    %4712 = vmatprep.subr.mxu0 0.0
    %4713 = vmatpush2.xpose.msra.mxu0 0.0
    %4714 = vmatprep.mubr.f32.mxu0 0.0
    %v4715 = vand.u32 %v3081, 4294901760
    %v4716 = vsub.f32 %v3081, %v4715
    %v4717 = vand.u32 %v4716, 4294901760
    %v4718 = vsub.f32 %v4716, %v4717
    %v4719 = vand.u32 %v4718, 4294901760
    %4720 = vmatmul.mubr.f32.gmra.mxu0 %v4719
    %v4721 = vpop.f32.mrf.mxu0
    %v4722 = vadd.f32 0.0, %v4721
    %v4723 = vpop.f32.mrf.mxu0
    %4724 = vmatprep.mubr.f32.mxu0 0.0
    %v4725 = vand.u32 %v3082, 4294901760
    %v4726 = vsub.f32 %v3082, %v4725
    %v4727 = vand.u32 %v4726, 4294901760
    %v4728 = vsub.f32 %v4726, %v4727
    %v4729 = vand.u32 %v4728, 4294901760
    %4730 = vmatmul.mubr.f32.gmra.mxu0 %v4729
    %v4731 = vpop.f32.mrf.mxu0
    %v4732 = vadd.f32 0.0, %v4731
    %v4733 = vpop.f32.mrf.mxu0
    %4734 = vmatprep.mubr.f32.mxu0 0.0
    %v4735 = vand.u32 %v3083, 4294901760
    %v4736 = vsub.f32 %v3083, %v4735
    %v4737 = vand.u32 %v4736, 4294901760
    %v4738 = vsub.f32 %v4736, %v4737
    %v4739 = vand.u32 %v4738, 4294901760
    %4740 = vmatmul.mubr.f32.gmra.mxu0 %v4739
    %v4741 = vpop.f32.mrf.mxu0
    %v4742 = vadd.f32 0.0, %v4741
    %v4743 = vpop.f32.mrf.mxu0
    %4744 = vmatprep.mubr.f32.mxu0 0.0
    %v4745 = vand.u32 %v3084, 4294901760
    %v4746 = vsub.f32 %v3084, %v4745
    %v4747 = vand.u32 %v4746, 4294901760
    %v4748 = vsub.f32 %v4746, %v4747
    %v4749 = vand.u32 %v4748, 4294901760
    %4750 = vmatmul.mubr.f32.gmra.mxu0 %v4749
    %v4751 = vpop.f32.mrf.mxu0
    %v4752 = vadd.f32 0.0, %v4751
    %v4753 = vpop.f32.mrf.mxu0
    %4754 = vdwg.mxu0
    %4755 = vmatprep.subr.mxu0 0.0
    %v4756 = vand.u32 %v354, 4294901760
    %v4757 = vsub.f32 %v354, %v4756
    %v4758 = vand.u32 %v4757, 4294901760
    %v4759 = vsub.f32 %v4757, %v4758
    %v4760 = vand.u32 %v4759, 4294901760
    %4761 = vmatpush1.xpose.msra.mxu0 %v4760
    %4762 = vmatprep.subr.mxu0 0.0
    %v4763 = vand.u32 %v353, 4294901760
    %v4764 = vsub.f32 %v353, %v4763
    %v4765 = vand.u32 %v4764, 4294901760
    %v4766 = vsub.f32 %v4764, %v4765
    %v4767 = vand.u32 %v4766, 4294901760
    %4768 = vmatpush1.xpose.msra.mxu0 %v4767
    %4769 = vmatprep.subr.mxu0 0.0
    %v4770 = vand.u32 %v352, 4294901760
    %v4771 = vsub.f32 %v352, %v4770
    %v4772 = vand.u32 %v4771, 4294901760
    %v4773 = vsub.f32 %v4771, %v4772
    %v4774 = vand.u32 %v4773, 4294901760
    %4775 = vmatpush1.xpose.msra.mxu0 %v4774
    %4776 = vmatprep.subr.mxu0 0.0
    %v4777 = vand.u32 %v351, 4294901760
    %v4778 = vsub.f32 %v351, %v4777
    %v4779 = vand.u32 %v4778, 4294901760
    %v4780 = vsub.f32 %v4778, %v4779
    %v4781 = vand.u32 %v4780, 4294901760
    %4782 = vmatpush1.xpose.msra.mxu0 %v4781
    %4783 = vmatprep.subr.mxu0 0.0
    %v4784 = vand.u32 %v350, 4294901760
    %v4785 = vsub.f32 %v350, %v4784
    %v4786 = vand.u32 %v4785, 4294901760
    %v4787 = vsub.f32 %v4785, %v4786
    %v4788 = vand.u32 %v4787, 4294901760
    %4789 = vmatpush1.xpose.msra.mxu0 %v4788
    %4790 = vmatprep.subr.mxu0 0.0
    %v4791 = vand.u32 %v349, 4294901760
    %v4792 = vsub.f32 %v349, %v4791
    %v4793 = vand.u32 %v4792, 4294901760
    %v4794 = vsub.f32 %v4792, %v4793
    %v4795 = vand.u32 %v4794, 4294901760
    %4796 = vmatpush1.xpose.msra.mxu0 %v4795
    %4797 = vmatprep.subr.mxu0 0.0
    %v4798 = vand.u32 %v348, 4294901760
    %v4799 = vsub.f32 %v348, %v4798
    %v4800 = vand.u32 %v4799, 4294901760
    %v4801 = vsub.f32 %v4799, %v4800
    %v4802 = vand.u32 %v4801, 4294901760
    %4803 = vmatpush1.xpose.msra.mxu0 %v4802
    %4804 = vmatprep.subr.mxu0 0.0
    %v4805 = vand.u32 %v347, 4294901760
    %v4806 = vsub.f32 %v347, %v4805
    %v4807 = vand.u32 %v4806, 4294901760
    %v4808 = vsub.f32 %v4806, %v4807
    %v4809 = vand.u32 %v4808, 4294901760
    %4810 = vmatpush1.xpose.msra.mxu0 %v4809
    %4811 = vmatprep.subr.mxu0 0.0
    %v4812 = vand.u32 %v346, 4294901760
    %v4813 = vsub.f32 %v346, %v4812
    %v4814 = vand.u32 %v4813, 4294901760
    %v4815 = vsub.f32 %v4813, %v4814
    %v4816 = vand.u32 %v4815, 4294901760
    %4817 = vmatpush1.xpose.msra.mxu0 %v4816
    %4818 = vmatprep.subr.mxu0 0.0
    %v4819 = vand.u32 %v345, 4294901760
    %v4820 = vsub.f32 %v345, %v4819
    %v4821 = vand.u32 %v4820, 4294901760
    %v4822 = vsub.f32 %v4820, %v4821
    %v4823 = vand.u32 %v4822, 4294901760
    %4824 = vmatpush1.xpose.msra.mxu0 %v4823
    %4825 = vmatprep.subr.mxu0 0.0
    %v4826 = vand.u32 %v344, 4294901760
    %v4827 = vsub.f32 %v344, %v4826
    %v4828 = vand.u32 %v4827, 4294901760
    %v4829 = vsub.f32 %v4827, %v4828
    %v4830 = vand.u32 %v4829, 4294901760
    %4831 = vmatpush1.xpose.msra.mxu0 %v4830
    %4832 = vmatprep.subr.mxu0 0.0
    %v4833 = vand.u32 %v343, 4294901760
    %v4834 = vsub.f32 %v343, %v4833
    %v4835 = vand.u32 %v4834, 4294901760
    %v4836 = vsub.f32 %v4834, %v4835
    %v4837 = vand.u32 %v4836, 4294901760
    %4838 = vmatpush1.xpose.msra.mxu0 %v4837
    %4839 = vmatprep.subr.mxu0 0.0
    %v4840 = vand.u32 %v342, 4294901760
    %v4841 = vsub.f32 %v342, %v4840
    %v4842 = vand.u32 %v4841, 4294901760
    %v4843 = vsub.f32 %v4841, %v4842
    %v4844 = vand.u32 %v4843, 4294901760
    %4845 = vmatpush1.xpose.msra.mxu0 %v4844
    %4846 = vmatprep.subr.mxu0 0.0
    %v4847 = vand.u32 %v341, 4294901760
    %v4848 = vsub.f32 %v341, %v4847
    %v4849 = vand.u32 %v4848, 4294901760
    %v4850 = vsub.f32 %v4848, %v4849
    %v4851 = vand.u32 %v4850, 4294901760
    %4852 = vmatpush1.xpose.msra.mxu0 %v4851
    %4853 = vmatprep.subr.mxu0 0.0
    %v4854 = vand.u32 %v340, 4294901760
    %v4855 = vsub.f32 %v340, %v4854
    %v4856 = vand.u32 %v4855, 4294901760
    %v4857 = vsub.f32 %v4855, %v4856
    %v4858 = vand.u32 %v4857, 4294901760
    %4859 = vmatpush1.xpose.msra.mxu0 %v4858
    %4860 = vmatprep.subr.mxu0 0.0
    %v4861 = vand.u32 %v339, 4294901760
    %v4862 = vsub.f32 %v339, %v4861
    %v4863 = vand.u32 %v4862, 4294901760
    %v4864 = vsub.f32 %v4862, %v4863
    %v4865 = vand.u32 %v4864, 4294901760
    %4866 = vmatpush1.xpose.msra.mxu0 %v4865
    %4867 = vmatprep.subr.mxu0 0.0
    %4868 = vmatpush2.xpose.msra.mxu0 0.0
    %4869 = vmatprep.subr.mxu0 0.0
    %4870 = vmatpush2.xpose.msra.mxu0 0.0
    %4871 = vmatprep.subr.mxu0 0.0
    %4872 = vmatpush2.xpose.msra.mxu0 0.0
    %4873 = vmatprep.subr.mxu0 0.0
    %4874 = vmatpush2.xpose.msra.mxu0 0.0
    %4875 = vmatprep.subr.mxu0 0.0
    %4876 = vmatpush2.xpose.msra.mxu0 0.0
    %4877 = vmatprep.subr.mxu0 0.0
    %4878 = vmatpush2.xpose.msra.mxu0 0.0
    %4879 = vmatprep.subr.mxu0 0.0
    %4880 = vmatpush2.xpose.msra.mxu0 0.0
    %4881 = vmatprep.subr.mxu0 0.0
    %4882 = vmatpush2.xpose.msra.mxu0 0.0
    %4883 = vmatprep.subr.mxu0 0.0
    %4884 = vmatpush2.xpose.msra.mxu0 0.0
    %4885 = vmatprep.subr.mxu0 0.0
    %4886 = vmatpush2.xpose.msra.mxu0 0.0
    %4887 = vmatprep.subr.mxu0 0.0
    %4888 = vmatpush2.xpose.msra.mxu0 0.0
    %4889 = vmatprep.subr.mxu0 0.0
    %4890 = vmatpush2.xpose.msra.mxu0 0.0
    %4891 = vmatprep.subr.mxu0 0.0
    %4892 = vmatpush2.xpose.msra.mxu0 0.0
    %4893 = vmatprep.subr.mxu0 0.0
    %4894 = vmatpush2.xpose.msra.mxu0 0.0
    %4895 = vmatprep.subr.mxu0 0.0
    %4896 = vmatpush2.xpose.msra.mxu0 0.0
    %4897 = vmatprep.subr.mxu0 0.0
    %4898 = vmatpush2.xpose.msra.mxu0 0.0
    %4899 = vmatprep.mubr.f32.mxu0 0.0
    %v4900 = vand.u32 %v3081, 4294901760
    %4901 = vmatmul.mubr.f32.gmra.mxu0 %v4900
    %v4902 = vpop.f32.mrf.mxu0
    %v4903 = vadd.f32 %v4722, %v4902
    %v4904 = vpop.f32.mrf.mxu0
    %4905 = vmatprep.mubr.f32.mxu0 0.0
    %v4906 = vand.u32 %v3082, 4294901760
    %4907 = vmatmul.mubr.f32.gmra.mxu0 %v4906
    %v4908 = vpop.f32.mrf.mxu0
    %v4909 = vadd.f32 %v4732, %v4908
    %v4910 = vpop.f32.mrf.mxu0
    %4911 = vmatprep.mubr.f32.mxu0 0.0
    %v4912 = vand.u32 %v3083, 4294901760
    %4913 = vmatmul.mubr.f32.gmra.mxu0 %v4912
    %v4914 = vpop.f32.mrf.mxu0
    %v4915 = vadd.f32 %v4742, %v4914
    %v4916 = vpop.f32.mrf.mxu0
    %4917 = vmatprep.mubr.f32.mxu0 0.0
    %v4918 = vand.u32 %v3084, 4294901760
    %4919 = vmatmul.mubr.f32.gmra.mxu0 %v4918
    %v4920 = vpop.f32.mrf.mxu0
    %v4921 = vadd.f32 %v4752, %v4920
    %v4922 = vpop.f32.mrf.mxu0
    %4923 = vdwg.mxu0
    %4924 = vmatprep.subr.mxu0 0.0
    %v4925 = vand.u32 %v354, 4294901760
    %v4926 = vsub.f32 %v354, %v4925
    %4927 = vmatpush1.xpose.msra.mxu0 %v4926
    %4928 = vmatprep.subr.mxu0 0.0
    %v4929 = vand.u32 %v353, 4294901760
    %v4930 = vsub.f32 %v353, %v4929
    %4931 = vmatpush1.xpose.msra.mxu0 %v4930
    %4932 = vmatprep.subr.mxu0 0.0
    %v4933 = vand.u32 %v352, 4294901760
    %v4934 = vsub.f32 %v352, %v4933
    %4935 = vmatpush1.xpose.msra.mxu0 %v4934
    %4936 = vmatprep.subr.mxu0 0.0
    %v4937 = vand.u32 %v351, 4294901760
    %v4938 = vsub.f32 %v351, %v4937
    %4939 = vmatpush1.xpose.msra.mxu0 %v4938
    %4940 = vmatprep.subr.mxu0 0.0
    %v4941 = vand.u32 %v350, 4294901760
    %v4942 = vsub.f32 %v350, %v4941
    %4943 = vmatpush1.xpose.msra.mxu0 %v4942
    %4944 = vmatprep.subr.mxu0 0.0
    %v4945 = vand.u32 %v349, 4294901760
    %v4946 = vsub.f32 %v349, %v4945
    %4947 = vmatpush1.xpose.msra.mxu0 %v4946
    %4948 = vmatprep.subr.mxu0 0.0
    %v4949 = vand.u32 %v348, 4294901760
    %v4950 = vsub.f32 %v348, %v4949
    %4951 = vmatpush1.xpose.msra.mxu0 %v4950
    %4952 = vmatprep.subr.mxu0 0.0
    %v4953 = vand.u32 %v347, 4294901760
    %v4954 = vsub.f32 %v347, %v4953
    %4955 = vmatpush1.xpose.msra.mxu0 %v4954
    %4956 = vmatprep.subr.mxu0 0.0
    %v4957 = vand.u32 %v346, 4294901760
    %v4958 = vsub.f32 %v346, %v4957
    %4959 = vmatpush1.xpose.msra.mxu0 %v4958
    %4960 = vmatprep.subr.mxu0 0.0
    %v4961 = vand.u32 %v345, 4294901760
    %v4962 = vsub.f32 %v345, %v4961
    %4963 = vmatpush1.xpose.msra.mxu0 %v4962
    %4964 = vmatprep.subr.mxu0 0.0
    %v4965 = vand.u32 %v344, 4294901760
    %v4966 = vsub.f32 %v344, %v4965
    %4967 = vmatpush1.xpose.msra.mxu0 %v4966
    %4968 = vmatprep.subr.mxu0 0.0
    %v4969 = vand.u32 %v343, 4294901760
    %v4970 = vsub.f32 %v343, %v4969
    %4971 = vmatpush1.xpose.msra.mxu0 %v4970
    %4972 = vmatprep.subr.mxu0 0.0
    %v4973 = vand.u32 %v342, 4294901760
    %v4974 = vsub.f32 %v342, %v4973
    %4975 = vmatpush1.xpose.msra.mxu0 %v4974
    %4976 = vmatprep.subr.mxu0 0.0
    %v4977 = vand.u32 %v341, 4294901760
    %v4978 = vsub.f32 %v341, %v4977
    %4979 = vmatpush1.xpose.msra.mxu0 %v4978
    %4980 = vmatprep.subr.mxu0 0.0
    %v4981 = vand.u32 %v340, 4294901760
    %v4982 = vsub.f32 %v340, %v4981
    %4983 = vmatpush1.xpose.msra.mxu0 %v4982
    %4984 = vmatprep.subr.mxu0 0.0
    %v4985 = vand.u32 %v339, 4294901760
    %v4986 = vsub.f32 %v339, %v4985
    %4987 = vmatpush1.xpose.msra.mxu0 %v4986
    %4988 = vmatprep.subr.mxu0 0.0
    %4989 = vmatpush2.xpose.msra.mxu0 0.0
    %4990 = vmatprep.subr.mxu0 0.0
    %4991 = vmatpush2.xpose.msra.mxu0 0.0
    %4992 = vmatprep.subr.mxu0 0.0
    %4993 = vmatpush2.xpose.msra.mxu0 0.0
    %4994 = vmatprep.subr.mxu0 0.0
    %4995 = vmatpush2.xpose.msra.mxu0 0.0
    %4996 = vmatprep.subr.mxu0 0.0
    %4997 = vmatpush2.xpose.msra.mxu0 0.0
    %4998 = vmatprep.subr.mxu0 0.0
    %4999 = vmatpush2.xpose.msra.mxu0 0.0
    %5000 = vmatprep.subr.mxu0 0.0
    %5001 = vmatpush2.xpose.msra.mxu0 0.0
    %5002 = vmatprep.subr.mxu0 0.0
    %5003 = vmatpush2.xpose.msra.mxu0 0.0
    %5004 = vmatprep.subr.mxu0 0.0
    %5005 = vmatpush2.xpose.msra.mxu0 0.0
    %5006 = vmatprep.subr.mxu0 0.0
    %5007 = vmatpush2.xpose.msra.mxu0 0.0
    %5008 = vmatprep.subr.mxu0 0.0
    %5009 = vmatpush2.xpose.msra.mxu0 0.0
    %5010 = vmatprep.subr.mxu0 0.0
    %5011 = vmatpush2.xpose.msra.mxu0 0.0
    %5012 = vmatprep.subr.mxu0 0.0
    %5013 = vmatpush2.xpose.msra.mxu0 0.0
    %5014 = vmatprep.subr.mxu0 0.0
    %5015 = vmatpush2.xpose.msra.mxu0 0.0
    %5016 = vmatprep.subr.mxu0 0.0
    %5017 = vmatpush2.xpose.msra.mxu0 0.0
    %5018 = vmatprep.subr.mxu0 0.0
    %5019 = vmatpush2.xpose.msra.mxu0 0.0
    %5020 = vmatprep.mubr.f32.mxu0 0.0
    %v5021 = vand.u32 %v3081, 4294901760
    %v5022 = vsub.f32 %v3081, %v5021
    %5023 = vmatmul.mubr.f32.gmra.mxu0 %v5022
    %v5024 = vpop.f32.mrf.mxu0
    %v5025 = vadd.f32 %v4903, %v5024
    %v5026 = vpop.f32.mrf.mxu0
    %5027 = vmatprep.mubr.f32.mxu0 0.0
    %v5028 = vand.u32 %v3082, 4294901760
    %v5029 = vsub.f32 %v3082, %v5028
    %5030 = vmatmul.mubr.f32.gmra.mxu0 %v5029
    %v5031 = vpop.f32.mrf.mxu0
    %v5032 = vadd.f32 %v4909, %v5031
    %v5033 = vpop.f32.mrf.mxu0
    %5034 = vmatprep.mubr.f32.mxu0 0.0
    %v5035 = vand.u32 %v3083, 4294901760
    %v5036 = vsub.f32 %v3083, %v5035
    %5037 = vmatmul.mubr.f32.gmra.mxu0 %v5036
    %v5038 = vpop.f32.mrf.mxu0
    %v5039 = vadd.f32 %v4915, %v5038
    %v5040 = vpop.f32.mrf.mxu0
    %5041 = vmatprep.mubr.f32.mxu0 0.0
    %v5042 = vand.u32 %v3084, 4294901760
    %v5043 = vsub.f32 %v3084, %v5042
    %5044 = vmatmul.mubr.f32.gmra.mxu0 %v5043
    %v5045 = vpop.f32.mrf.mxu0
    %v5046 = vadd.f32 %v4921, %v5045
    %v5047 = vpop.f32.mrf.mxu0
    %5048 = vdwg.mxu0
    %5049 = vmatprep.subr.mxu0 0.0
    %v5050 = vand.u32 %v354, 4294901760
    %5051 = vmatpush1.xpose.msra.mxu0 %v5050
    %5052 = vmatprep.subr.mxu0 0.0
    %v5053 = vand.u32 %v353, 4294901760
    %5054 = vmatpush1.xpose.msra.mxu0 %v5053
    %5055 = vmatprep.subr.mxu0 0.0
    %v5056 = vand.u32 %v352, 4294901760
    %5057 = vmatpush1.xpose.msra.mxu0 %v5056
    %5058 = vmatprep.subr.mxu0 0.0
    %v5059 = vand.u32 %v351, 4294901760
    %5060 = vmatpush1.xpose.msra.mxu0 %v5059
    %5061 = vmatprep.subr.mxu0 0.0
    %v5062 = vand.u32 %v350, 4294901760
    %5063 = vmatpush1.xpose.msra.mxu0 %v5062
    %5064 = vmatprep.subr.mxu0 0.0
    %v5065 = vand.u32 %v349, 4294901760
    %5066 = vmatpush1.xpose.msra.mxu0 %v5065
    %5067 = vmatprep.subr.mxu0 0.0
    %v5068 = vand.u32 %v348, 4294901760
    %5069 = vmatpush1.xpose.msra.mxu0 %v5068
    %5070 = vmatprep.subr.mxu0 0.0
    %v5071 = vand.u32 %v347, 4294901760
    %5072 = vmatpush1.xpose.msra.mxu0 %v5071
    %5073 = vmatprep.subr.mxu0 0.0
    %v5074 = vand.u32 %v346, 4294901760
    %5075 = vmatpush1.xpose.msra.mxu0 %v5074
    %5076 = vmatprep.subr.mxu0 0.0
    %v5077 = vand.u32 %v345, 4294901760
    %5078 = vmatpush1.xpose.msra.mxu0 %v5077
    %5079 = vmatprep.subr.mxu0 0.0
    %v5080 = vand.u32 %v344, 4294901760
    %5081 = vmatpush1.xpose.msra.mxu0 %v5080
    %5082 = vmatprep.subr.mxu0 0.0
    %v5083 = vand.u32 %v343, 4294901760
    %5084 = vmatpush1.xpose.msra.mxu0 %v5083
    %5085 = vmatprep.subr.mxu0 0.0
    %v5086 = vand.u32 %v342, 4294901760
    %5087 = vmatpush1.xpose.msra.mxu0 %v5086
    %5088 = vmatprep.subr.mxu0 0.0
    %v5089 = vand.u32 %v341, 4294901760
    %5090 = vmatpush1.xpose.msra.mxu0 %v5089
    %5091 = vmatprep.subr.mxu0 0.0
    %v5092 = vand.u32 %v340, 4294901760
    %5093 = vmatpush1.xpose.msra.mxu0 %v5092
    %5094 = vmatprep.subr.mxu0 0.0
    %v5095 = vand.u32 %v339, 4294901760
    %5096 = vmatpush1.xpose.msra.mxu0 %v5095
    %5097 = vmatprep.subr.mxu0 0.0
    %5098 = vmatpush2.xpose.msra.mxu0 0.0
    %5099 = vmatprep.subr.mxu0 0.0
    %5100 = vmatpush2.xpose.msra.mxu0 0.0
    %5101 = vmatprep.subr.mxu0 0.0
    %5102 = vmatpush2.xpose.msra.mxu0 0.0
    %5103 = vmatprep.subr.mxu0 0.0
    %5104 = vmatpush2.xpose.msra.mxu0 0.0
    %5105 = vmatprep.subr.mxu0 0.0
    %5106 = vmatpush2.xpose.msra.mxu0 0.0
    %5107 = vmatprep.subr.mxu0 0.0
    %5108 = vmatpush2.xpose.msra.mxu0 0.0
    %5109 = vmatprep.subr.mxu0 0.0
    %5110 = vmatpush2.xpose.msra.mxu0 0.0
    %5111 = vmatprep.subr.mxu0 0.0
    %5112 = vmatpush2.xpose.msra.mxu0 0.0
    %5113 = vmatprep.subr.mxu0 0.0
    %5114 = vmatpush2.xpose.msra.mxu0 0.0
    %5115 = vmatprep.subr.mxu0 0.0
    %5116 = vmatpush2.xpose.msra.mxu0 0.0
    %5117 = vmatprep.subr.mxu0 0.0
    %5118 = vmatpush2.xpose.msra.mxu0 0.0
    %5119 = vmatprep.subr.mxu0 0.0
    %5120 = vmatpush2.xpose.msra.mxu0 0.0
    %5121 = vmatprep.subr.mxu0 0.0
    %5122 = vmatpush2.xpose.msra.mxu0 0.0
    %5123 = vmatprep.subr.mxu0 0.0
    %5124 = vmatpush2.xpose.msra.mxu0 0.0
    %5125 = vmatprep.subr.mxu0 0.0
    %5126 = vmatpush2.xpose.msra.mxu0 0.0
    %5127 = vmatprep.subr.mxu0 0.0
    %5128 = vmatpush2.xpose.msra.mxu0 0.0
    %5129 = vmatprep.mubr.f32.mxu0 0.0
    %v5130 = vand.u32 %v3081, 4294901760
    %v5131 = vsub.f32 %v3081, %v5130
    %v5132 = vand.u32 %v5131, 4294901760
    %5133 = vmatmul.mubr.f32.gmra.mxu0 %v5132
    %v5134 = vpop.f32.mrf.mxu0
    %v5135 = vadd.f32 %v5025, %v5134
    %v5136 = vpop.f32.mrf.mxu0
    %5137 = vmatprep.mubr.f32.mxu0 0.0
    %v5138 = vand.u32 %v3082, 4294901760
    %v5139 = vsub.f32 %v3082, %v5138
    %v5140 = vand.u32 %v5139, 4294901760
    %5141 = vmatmul.mubr.f32.gmra.mxu0 %v5140
    %v5142 = vpop.f32.mrf.mxu0
    %v5143 = vadd.f32 %v5032, %v5142
    %v5144 = vpop.f32.mrf.mxu0
    %5145 = vmatprep.mubr.f32.mxu0 0.0
    %v5146 = vand.u32 %v3083, 4294901760
    %v5147 = vsub.f32 %v3083, %v5146
    %v5148 = vand.u32 %v5147, 4294901760
    %5149 = vmatmul.mubr.f32.gmra.mxu0 %v5148
    %v5150 = vpop.f32.mrf.mxu0
    %v5151 = vadd.f32 %v5039, %v5150
    %v5152 = vpop.f32.mrf.mxu0
    %5153 = vmatprep.mubr.f32.mxu0 0.0
    %v5154 = vand.u32 %v3084, 4294901760
    %v5155 = vsub.f32 %v3084, %v5154
    %v5156 = vand.u32 %v5155, 4294901760
    %5157 = vmatmul.mubr.f32.gmra.mxu0 %v5156
    %v5158 = vpop.f32.mrf.mxu0
    %v5159 = vadd.f32 %v5046, %v5158
    %v5160 = vpop.f32.mrf.mxu0
    %5161 = vdwg.mxu0
    %5162 = vmatprep.subr.mxu0 0.0
    %v5163 = vand.u32 %v354, 4294901760
    %v5164 = vsub.f32 %v354, %v5163
    %v5165 = vand.u32 %v5164, 4294901760
    %5166 = vmatpush1.xpose.msra.mxu0 %v5165
    %5167 = vmatprep.subr.mxu0 0.0
    %v5168 = vand.u32 %v353, 4294901760
    %v5169 = vsub.f32 %v353, %v5168
    %v5170 = vand.u32 %v5169, 4294901760
    %5171 = vmatpush1.xpose.msra.mxu0 %v5170
    %5172 = vmatprep.subr.mxu0 0.0
    %v5173 = vand.u32 %v352, 4294901760
    %v5174 = vsub.f32 %v352, %v5173
    %v5175 = vand.u32 %v5174, 4294901760
    %5176 = vmatpush1.xpose.msra.mxu0 %v5175
    %5177 = vmatprep.subr.mxu0 0.0
    %v5178 = vand.u32 %v351, 4294901760
    %v5179 = vsub.f32 %v351, %v5178
    %v5180 = vand.u32 %v5179, 4294901760
    %5181 = vmatpush1.xpose.msra.mxu0 %v5180
    %5182 = vmatprep.subr.mxu0 0.0
    %v5183 = vand.u32 %v350, 4294901760
    %v5184 = vsub.f32 %v350, %v5183
    %v5185 = vand.u32 %v5184, 4294901760
    %5186 = vmatpush1.xpose.msra.mxu0 %v5185
    %5187 = vmatprep.subr.mxu0 0.0
    %v5188 = vand.u32 %v349, 4294901760
    %v5189 = vsub.f32 %v349, %v5188
    %v5190 = vand.u32 %v5189, 4294901760
    %5191 = vmatpush1.xpose.msra.mxu0 %v5190
    %5192 = vmatprep.subr.mxu0 0.0
    %v5193 = vand.u32 %v348, 4294901760
    %v5194 = vsub.f32 %v348, %v5193
    %v5195 = vand.u32 %v5194, 4294901760
    %5196 = vmatpush1.xpose.msra.mxu0 %v5195
    %5197 = vmatprep.subr.mxu0 0.0
    %v5198 = vand.u32 %v347, 4294901760
    %v5199 = vsub.f32 %v347, %v5198
    %v5200 = vand.u32 %v5199, 4294901760
    %5201 = vmatpush1.xpose.msra.mxu0 %v5200
    %5202 = vmatprep.subr.mxu0 0.0
    %v5203 = vand.u32 %v346, 4294901760
    %v5204 = vsub.f32 %v346, %v5203
    %v5205 = vand.u32 %v5204, 4294901760
    %5206 = vmatpush1.xpose.msra.mxu0 %v5205
    %5207 = vmatprep.subr.mxu0 0.0
    %v5208 = vand.u32 %v345, 4294901760
    %v5209 = vsub.f32 %v345, %v5208
    %v5210 = vand.u32 %v5209, 4294901760
    %5211 = vmatpush1.xpose.msra.mxu0 %v5210
    %5212 = vmatprep.subr.mxu0 0.0
    %v5213 = vand.u32 %v344, 4294901760
    %v5214 = vsub.f32 %v344, %v5213
    %v5215 = vand.u32 %v5214, 4294901760
    %5216 = vmatpush1.xpose.msra.mxu0 %v5215
    %5217 = vmatprep.subr.mxu0 0.0
    %v5218 = vand.u32 %v343, 4294901760
    %v5219 = vsub.f32 %v343, %v5218
    %v5220 = vand.u32 %v5219, 4294901760
    %5221 = vmatpush1.xpose.msra.mxu0 %v5220
    %5222 = vmatprep.subr.mxu0 0.0
    %v5223 = vand.u32 %v342, 4294901760
    %v5224 = vsub.f32 %v342, %v5223
    %v5225 = vand.u32 %v5224, 4294901760
    %5226 = vmatpush1.xpose.msra.mxu0 %v5225
    %5227 = vmatprep.subr.mxu0 0.0
    %v5228 = vand.u32 %v341, 4294901760
    %v5229 = vsub.f32 %v341, %v5228
    %v5230 = vand.u32 %v5229, 4294901760
    %5231 = vmatpush1.xpose.msra.mxu0 %v5230
    %5232 = vmatprep.subr.mxu0 0.0
    %v5233 = vand.u32 %v340, 4294901760
    %v5234 = vsub.f32 %v340, %v5233
    %v5235 = vand.u32 %v5234, 4294901760
    %5236 = vmatpush1.xpose.msra.mxu0 %v5235
    %5237 = vmatprep.subr.mxu0 0.0
    %v5238 = vand.u32 %v339, 4294901760
    %v5239 = vsub.f32 %v339, %v5238
    %v5240 = vand.u32 %v5239, 4294901760
    %5241 = vmatpush1.xpose.msra.mxu0 %v5240
    %5242 = vmatprep.subr.mxu0 0.0
    %5243 = vmatpush2.xpose.msra.mxu0 0.0
    %5244 = vmatprep.subr.mxu0 0.0
    %5245 = vmatpush2.xpose.msra.mxu0 0.0
    %5246 = vmatprep.subr.mxu0 0.0
    %5247 = vmatpush2.xpose.msra.mxu0 0.0
    %5248 = vmatprep.subr.mxu0 0.0
    %5249 = vmatpush2.xpose.msra.mxu0 0.0
    %5250 = vmatprep.subr.mxu0 0.0
    %5251 = vmatpush2.xpose.msra.mxu0 0.0
    %5252 = vmatprep.subr.mxu0 0.0
    %5253 = vmatpush2.xpose.msra.mxu0 0.0
    %5254 = vmatprep.subr.mxu0 0.0
    %5255 = vmatpush2.xpose.msra.mxu0 0.0
    %5256 = vmatprep.subr.mxu0 0.0
    %5257 = vmatpush2.xpose.msra.mxu0 0.0
    %5258 = vmatprep.subr.mxu0 0.0
    %5259 = vmatpush2.xpose.msra.mxu0 0.0
    %5260 = vmatprep.subr.mxu0 0.0
    %5261 = vmatpush2.xpose.msra.mxu0 0.0
    %5262 = vmatprep.subr.mxu0 0.0
    %5263 = vmatpush2.xpose.msra.mxu0 0.0
    %5264 = vmatprep.subr.mxu0 0.0
    %5265 = vmatpush2.xpose.msra.mxu0 0.0
    %5266 = vmatprep.subr.mxu0 0.0
    %5267 = vmatpush2.xpose.msra.mxu0 0.0
    %5268 = vmatprep.subr.mxu0 0.0
    %5269 = vmatpush2.xpose.msra.mxu0 0.0
    %5270 = vmatprep.subr.mxu0 0.0
    %5271 = vmatpush2.xpose.msra.mxu0 0.0
    %5272 = vmatprep.subr.mxu0 0.0
    %5273 = vmatpush2.xpose.msra.mxu0 0.0
    %5274 = vmatprep.mubr.f32.mxu0 0.0
    %v5275 = vand.u32 %v3081, 4294901760
    %5276 = vmatmul.mubr.f32.gmra.mxu0 %v5275
    %v5277 = vpop.f32.mrf.mxu0
    %v5278 = vadd.f32 %v5135, %v5277
    %v5279 = vpop.f32.mrf.mxu0
    %5280 = vmatprep.mubr.f32.mxu0 0.0
    %v5281 = vand.u32 %v3082, 4294901760
    %5282 = vmatmul.mubr.f32.gmra.mxu0 %v5281
    %v5283 = vpop.f32.mrf.mxu0
    %v5284 = vadd.f32 %v5143, %v5283
    %v5285 = vpop.f32.mrf.mxu0
    %5286 = vmatprep.mubr.f32.mxu0 0.0
    %v5287 = vand.u32 %v3083, 4294901760
    %5288 = vmatmul.mubr.f32.gmra.mxu0 %v5287
    %v5289 = vpop.f32.mrf.mxu0
    %v5290 = vadd.f32 %v5151, %v5289
    %v5291 = vpop.f32.mrf.mxu0
    %5292 = vmatprep.mubr.f32.mxu0 0.0
    %v5293 = vand.u32 %v3084, 4294901760
    %5294 = vmatmul.mubr.f32.gmra.mxu0 %v5293
    %v5295 = vpop.f32.mrf.mxu0
    %v5296 = vadd.f32 %v5159, %v5295
    %v5297 = vpop.f32.mrf.mxu0
    %5298 = vdwg.mxu0
    %5299 = vmatprep.subr.mxu0 0.0
    %v5300 = vand.u32 %v354, 4294901760
    %5301 = vmatpush1.xpose.msra.mxu0 %v5300
    %5302 = vmatprep.subr.mxu0 0.0
    %v5303 = vand.u32 %v353, 4294901760
    %5304 = vmatpush1.xpose.msra.mxu0 %v5303
    %5305 = vmatprep.subr.mxu0 0.0
    %v5306 = vand.u32 %v352, 4294901760
    %5307 = vmatpush1.xpose.msra.mxu0 %v5306
    %5308 = vmatprep.subr.mxu0 0.0
    %v5309 = vand.u32 %v351, 4294901760
    %5310 = vmatpush1.xpose.msra.mxu0 %v5309
    %5311 = vmatprep.subr.mxu0 0.0
    %v5312 = vand.u32 %v350, 4294901760
    %5313 = vmatpush1.xpose.msra.mxu0 %v5312
    %5314 = vmatprep.subr.mxu0 0.0
    %v5315 = vand.u32 %v349, 4294901760
    %5316 = vmatpush1.xpose.msra.mxu0 %v5315
    %5317 = vmatprep.subr.mxu0 0.0
    %v5318 = vand.u32 %v348, 4294901760
    %5319 = vmatpush1.xpose.msra.mxu0 %v5318
    %5320 = vmatprep.subr.mxu0 0.0
    %v5321 = vand.u32 %v347, 4294901760
    %5322 = vmatpush1.xpose.msra.mxu0 %v5321
    %5323 = vmatprep.subr.mxu0 0.0
    %v5324 = vand.u32 %v346, 4294901760
    %5325 = vmatpush1.xpose.msra.mxu0 %v5324
    %5326 = vmatprep.subr.mxu0 0.0
    %v5327 = vand.u32 %v345, 4294901760
    %5328 = vmatpush1.xpose.msra.mxu0 %v5327
    %5329 = vmatprep.subr.mxu0 0.0
    %v5330 = vand.u32 %v344, 4294901760
    %5331 = vmatpush1.xpose.msra.mxu0 %v5330
    %5332 = vmatprep.subr.mxu0 0.0
    %v5333 = vand.u32 %v343, 4294901760
    %5334 = vmatpush1.xpose.msra.mxu0 %v5333
    %5335 = vmatprep.subr.mxu0 0.0
    %v5336 = vand.u32 %v342, 4294901760
    %5337 = vmatpush1.xpose.msra.mxu0 %v5336
    %5338 = vmatprep.subr.mxu0 0.0
    %v5339 = vand.u32 %v341, 4294901760
    %5340 = vmatpush1.xpose.msra.mxu0 %v5339
    %5341 = vmatprep.subr.mxu0 0.0
    %v5342 = vand.u32 %v340, 4294901760
    %5343 = vmatpush1.xpose.msra.mxu0 %v5342
    %5344 = vmatprep.subr.mxu0 0.0
    %v5345 = vand.u32 %v339, 4294901760
    %5346 = vmatpush1.xpose.msra.mxu0 %v5345
    %5347 = vmatprep.subr.mxu0 0.0
    %5348 = vmatpush2.xpose.msra.mxu0 0.0
    %5349 = vmatprep.subr.mxu0 0.0
    %5350 = vmatpush2.xpose.msra.mxu0 0.0
    %5351 = vmatprep.subr.mxu0 0.0
    %5352 = vmatpush2.xpose.msra.mxu0 0.0
    %5353 = vmatprep.subr.mxu0 0.0
    %5354 = vmatpush2.xpose.msra.mxu0 0.0
    %5355 = vmatprep.subr.mxu0 0.0
    %5356 = vmatpush2.xpose.msra.mxu0 0.0
    %5357 = vmatprep.subr.mxu0 0.0
    %5358 = vmatpush2.xpose.msra.mxu0 0.0
    %5359 = vmatprep.subr.mxu0 0.0
    %5360 = vmatpush2.xpose.msra.mxu0 0.0
    %5361 = vmatprep.subr.mxu0 0.0
    %5362 = vmatpush2.xpose.msra.mxu0 0.0
    %5363 = vmatprep.subr.mxu0 0.0
    %5364 = vmatpush2.xpose.msra.mxu0 0.0
    %5365 = vmatprep.subr.mxu0 0.0
    %5366 = vmatpush2.xpose.msra.mxu0 0.0
    %5367 = vmatprep.subr.mxu0 0.0
    %5368 = vmatpush2.xpose.msra.mxu0 0.0
    %5369 = vmatprep.subr.mxu0 0.0
    %5370 = vmatpush2.xpose.msra.mxu0 0.0
    %5371 = vmatprep.subr.mxu0 0.0
    %5372 = vmatpush2.xpose.msra.mxu0 0.0
    %5373 = vmatprep.subr.mxu0 0.0
    %5374 = vmatpush2.xpose.msra.mxu0 0.0
    %5375 = vmatprep.subr.mxu0 0.0
    %5376 = vmatpush2.xpose.msra.mxu0 0.0
    %5377 = vmatprep.subr.mxu0 0.0
    %5378 = vmatpush2.xpose.msra.mxu0 0.0
    %5379 = vmatprep.mubr.f32.mxu0 0.0
    %v5380 = vand.u32 %v3081, 4294901760
    %5381 = vmatmul.mubr.f32.gmra.mxu0 %v5380
    %v5382 = vpop.f32.mrf.mxu0
    %v5383 = vadd.f32 %v5278, %v5382
    %v5384 = vpop.f32.mrf.mxu0
    %5385 = vmatprep.mubr.f32.mxu0 0.0
    %v5386 = vand.u32 %v3082, 4294901760
    %5387 = vmatmul.mubr.f32.gmra.mxu0 %v5386
    %v5388 = vpop.f32.mrf.mxu0
    %v5389 = vadd.f32 %v5284, %v5388
    %v5390 = vpop.f32.mrf.mxu0
    %5391 = vmatprep.mubr.f32.mxu0 0.0
    %v5392 = vand.u32 %v3083, 4294901760
    %5393 = vmatmul.mubr.f32.gmra.mxu0 %v5392
    %v5394 = vpop.f32.mrf.mxu0
    %v5395 = vadd.f32 %v5290, %v5394
    %v5396 = vpop.f32.mrf.mxu0
    %5397 = vmatprep.mubr.f32.mxu0 0.0
    %v5398 = vand.u32 %v3084, 4294901760
    %5399 = vmatmul.mubr.f32.gmra.mxu0 %v5398
    %v5400 = vpop.f32.mrf.mxu0
    %v5401 = vadd.f32 %v5296, %v5400
    %v5402 = vpop.f32.mrf.mxu0
    %5403 = vdwg.mxu0
    %s5404 = scalar_lea.vmem [#allocation2], 64
    %5405 = vst [vmem:[%s5404] sm:$0xff] %v5383
    %5406 = vst [vmem:[%s5404 + $0x8] sm:$0xff] %v5389
    %5407 = vst [vmem:[%s5404 + $0x10] sm:$0xff] %v5395
    %5408 = vst [vmem:[%s5404 + $0x18] sm:$0xff] %v5401
    // Predicated region
    $region14: #{_permute_all.3} parent=1 // pred_check
      _
    $region15: #{_permute_all.3} parent=1 // pred_check_branch
      %5410 = sbr.rel (0) target = $region17
    $region16: #{_permute_all.3} parent=1 // pred_region
      _
    $region17: #{_permute_all.3} parent=1 // pred_fallthru
      _
    // Predicated region
    $region18: #{_permute_all.3} parent=1 // pred_check
      _
    $region19: #{_permute_all.3} parent=1 // pred_check_branch
      %5412 = sbr.rel (0) target = $region21
    $region20: #{_permute_all.3} parent=1 // pred_region
      %s5414 = ssub.s32 1536, 1536
      %5415 = vsyncadd [#allocation3], %s5414
      %s5416 = sshll.u32 [#allocation2], 4
      %s5417 = int_to_ptr.vmem [resolvable:$true] %s5416
      %5422 = dma.vmem_to_hbm [thread:$0]  %s5417, 1536, %s4, [#allocation3], 128, 128, 8
    $region21: #{_permute_all.3} parent=1 // pred_fallthru
      _
    // Predicated region
    $region22: #{_permute_all.3} parent=1 // pred_check
      _
    $region23: #{_permute_all.3} parent=1 // pred_check_branch
      %5424 = sbr.rel (0) target = $region25
    $region24: #{_permute_all.3} parent=1 // pred_region
      _
    $region25: #{_permute_all.3} parent=1 // pred_fallthru
      _
    // Predicated region
    $region26: #{_permute_all.3} parent=1 // pred_check
      _
    $region27: #{_permute_all.3} parent=1 // pred_check_branch
      %5426 = sbr.rel (0) target = $region29
    $region28: #{_permute_all.3} parent=1 // pred_region
      %5427 = dma.done [#allocation3], 1536
    $region29: #{_permute_all.3} parent=1 // pred_fallthru
      _
    %5428 = vsyncpa [#allocation3], 1

</llo_original>
